<compile_context>
chip_gen: v5e
topology: v5e:2x2
jax: 0.10.0
libtpu: 0.0.40
codegen_flags: <defaults>
</compile_context>

<pallas_src>
import jax
import jax.numpy as jnp
from jax import lax
from jax.experimental import pallas as pl
from jax.experimental.pallas import tpu as pltpu


# ----------------------------------------------------------------------------
# helpers
# ----------------------------------------------------------------------------
def _relu6(v):
    return jnp.minimum(jnp.maximum(v, 0.0), 6.0)


# ----------------------------------------------------------------------------
# Pallas kernels
# ----------------------------------------------------------------------------
def _make_fire_t_kernel(H, W, ch):
    """Fused fire_module_T (transpose branch): conv_1 + conv_2_T + conv_3_T."""
    HW = H * W

    def kernel(x_ref, w1_ref, b1_ref, wup_ref, bup_ref, c3_ref, o_ref):
        x = x_ref[0]                                      # (Cin, HW) lane-dense
        # conv_1: 1x1 conv + folded BN + ReLU6
        t = _relu6(jnp.dot(w1_ref[...], x,
                           preferred_element_type=jnp.float32) + b1_ref[...])
        # conv_2_T (k=2, s=2) -> 4 taps, and conv_3_T (k=1, s=2) even pixels:
        # all five (ch, Cp) weight blocks stacked into one matmul.
        up = _relu6(jnp.dot(wup_ref[...], t,
                            preferred_element_type=jnp.float32) + bup_ref[...])
        # conv_3_T odd positions only see the folded bias (then ReLU6); after
        # F.pad(0,1,0,1) the last output row / column is exactly zero.
        idx = lax.broadcasted_iota(jnp.int32, (1, HW), 1)
        last_col = (idx % W) == (W - 1)
        last_row = idx >= (H - 1) * W
        c3 = c3_ref[...]                                  # (ch, 1) relu6(bias3)

        # block layout: o_ref[0, ky, kx, c, y*W+x] = value at (2y+ky, 2x+kx)
        o_ref[0, 0, 0] = jnp.concatenate(
            [up[0 * ch:1 * ch], up[4 * ch:5 * ch]], axis=0)
        o_ref[0, 0, 1] = jnp.concatenate(
            [up[1 * ch:2 * ch], jnp.where(last_col, 0.0, c3)], axis=0)
        o_ref[0, 1, 0] = jnp.concatenate(
            [up[2 * ch:3 * ch], jnp.where(last_row, 0.0, c3)], axis=0)
        o_ref[0, 1, 1] = jnp.concatenate(
            [up[3 * ch:4 * ch],
             jnp.where(jnp.logical_or(last_row, last_col), 0.0, c3)], axis=0)

    return kernel


def _make_fire_chain_kernel(H2, W2, cpp, ch, D):
    """Fused fire_module_1 + fire_module_2 (stride-1 branch), per batch."""
    HW2 = H2 * W2
    base = D - W2 - 1          # lane offset of tap (dy=0, dx=0)
    L = 2 * D + HW2            # flat halo buffer length (D-aligned halos)

    def conv33_block(t1, wbig, bbig, tp_ref):
        # In-VMEM im2col: place t1 into the row-padded flat buffer, take the
        # nine statically lane-shifted slices (XLU work only, no HBM), mask the
        # column wrap-around, then ONE matmul computes the 3x3 branch, the 1x1
        # branch and the channel concat (packed weights).
        tp_ref[:, D:D + HW2] = t1                         # aligned store
        idx = lax.broadcasted_iota(jnp.int32, (1, HW2), 1)
        xcol = idx % W2
        not_first = xcol != 0
        not_last = xcol != (W2 - 1)
        taps = []
        for ti in range(9):
            dy, dx = divmod(ti, 3)
            off = base + dy * W2 + dx
            sl = tp_ref[:, off:off + HW2]
            if dx == 0:
                sl = jnp.where(not_first, sl, 0.0)
            elif dx == 2:
                sl = jnp.where(not_last, sl, 0.0)
            taps.append(sl)
        col = jnp.concatenate(taps, axis=0)               # (9*cpp, HW2)
        acc = jnp.dot(wbig, col, preferred_element_type=jnp.float32)
        return _relu6(acc + bbig)                         # (2*ch, HW2)

    def kernel(up_ref, y_ref,
               w1a_ref, w1b_ref, b11_ref, wb1_ref, bb1_ref,
               w12_ref, b12_ref, wb2_ref, bb2_ref,
               o_ref, tp_ref):
        # zero the halo strips once per grid step (data region is fully
        # overwritten by every conv33_block call)
        tp_ref[:, 0:D] = jnp.zeros((cpp, D), jnp.float32)
        tp_ref[:, D + HW2:L] = jnp.zeros((cpp, D), jnp.float32)

        up = up_ref[0]                                    # (c_out, HW2)
        yv = y_ref[0]                                     # (c_out, HW2)

        # fire_module_1 conv_1 over (upsample ++ skip): torch.cat is folded
        # into two matmuls, no materialized concat.
        t1 = _relu6(jnp.dot(w1a_ref[...], up, preferred_element_type=jnp.float32)
                    + jnp.dot(w1b_ref[...], yv, preferred_element_type=jnp.float32)
                    + b11_ref[...])                       # (cpp, HW2)
        f1 = conv33_block(t1, wb1_ref[...], bb1_ref[...], tp_ref)

        # fire_module_2 (consumes f1 straight from VMEM)
        t2 = _relu6(jnp.dot(w12_ref[...], f1, preferred_element_type=jnp.float32)
                    + b12_ref[...])                       # (cpp, HW2)
        f2 = conv33_block(t2, wb2_ref[...], bb2_ref[...], tp_ref)

        o_ref[0] = f2                                     # lane-dense store

    return kernel


# ----------------------------------------------------------------------------
# Parameters (deterministic synthetic init; BN folded in eval mode)
# ----------------------------------------------------------------------------
def _conv_bn(key, w_shape, cout):
    kw, kb, kg, kbe = jax.random.split(key, 4)
    w = jax.random.normal(kw, w_shape, jnp.float32) * 0.2
    conv_b = jax.random.normal(kb, (cout,), jnp.float32) * 0.1
    gamma = jax.random.uniform(kg, (cout,), jnp.float32, minval=0.5, maxval=1.5)
    beta = jax.random.normal(kbe, (cout,), jnp.float32) * 0.1
    eps = 1e-5
    scale = gamma / jnp.sqrt(1.0 + eps)      # running_mean=0, running_var=1
    bias = scale * conv_b + beta
    return {"w": w, "scale": scale, "bias": bias}


def init_up_sample_params(key, c_in, c_out_p1, c_out_p2, c_out):
    ch = c_out // 2
    kt1, kt2, kt3, k11, k12, k13, k21, k22, k23 = jax.random.split(key, 9)
    fire_T = {
        "conv1":  _conv_bn(kt1, (c_out_p1, c_in), c_out_p1),        # Conv2d 1x1
        "conv2T": _conv_bn(kt2, (c_out_p1, ch, 2, 2), ch),          # ConvT k2 s2
        "conv3T": _conv_bn(kt3, (c_out_p1, ch, 1, 1), ch),          # ConvT k1 s2
    }
    fire_1 = {
        "conv1": _conv_bn(k11, (c_out_p2, 2 * c_out), c_out_p2),
        "conv2": _conv_bn(k12, (ch, c_out_p2, 3, 3), ch),
        "conv3": _conv_bn(k13, (ch, c_out_p2), ch),
    }
    fire_2 = {
        "conv1": _conv_bn(k21, (c_out_p2, c_out), c_out_p2),
        "conv2": _conv_bn(k22, (ch, c_out_p2, 3, 3), ch),
        "conv3": _conv_bn(k23, (ch, c_out_p2), ch),
    }
    return {"fire_T": fire_T, "fire_1": fire_1, "fire_2": fire_2}


# ----------------------------------------------------------------------------
# weight packing (fold BN scale into weights; build fused matmul matrices)
# ----------------------------------------------------------------------------
def _pack_fire_t(p):
    w1 = p["conv1"]["w"] * p["conv1"]["scale"][:, None]            # (Cp1, Cin)
    b1 = p["conv1"]["bias"][:, None]                               # (Cp1, 1)
    w2 = p["conv2T"]["w"]                                          # (Cp1, ch, 2, 2)
    s2, b2 = p["conv2T"]["scale"], p["conv2T"]["bias"]
    w3 = p["conv3T"]["w"][:, :, 0, 0]                              # (Cp1, ch)
    s3, b3 = p["conv3T"]["scale"], p["conv3T"]["bias"]
    rows, biases = [], []
    for ky in range(2):
        for kx in range(2):
            rows.append(w2[:, :, ky, kx].T * s2[:, None])          # (ch, Cp1)
            biases.append(b2)
    rows.append(w3.T * s3[:, None])                                # conv_3_T even
    biases.append(b3)
    wup = jnp.concatenate(rows, axis=0)                            # (5*ch, Cp1)
    bup = jnp.concatenate(biases)[:, None]                         # (5*ch, 1)
    c3 = jnp.minimum(jnp.maximum(b3, 0.0), 6.0)[:, None]           # (ch, 1)
    return w1, b1, wup, bup, c3


def _pack_fire(p, cpp):
    w1 = p["conv1"]["w"] * p["conv1"]["scale"][:, None]            # (cp, cin_tot)
    b1 = p["conv1"]["bias"]
    cp = w1.shape[0]
    ch = p["conv2"]["w"].shape[0]
    if cpp > cp:                                  # pad conv_1 rows to 8-aligned
        w1 = jnp.concatenate(
            [w1, jnp.zeros((cpp - cp, w1.shape[1]), jnp.float32)], axis=0)
        b1 = jnp.concatenate([b1, jnp.zeros((cpp - cp,), jnp.float32)])
    w2 = p["conv2"]["w"] * p["conv2"]["scale"][:, None, None, None]  # (ch,cp,3,3)
    w3 = p["conv3"]["w"] * p["conv3"]["scale"][:, None]              # (ch, cp)
    wbig = jnp.zeros((2 * ch, 9 * cpp), jnp.float32)
    for t in range(9):
        dy, dx = divmod(t, 3)
        wbig = wbig.at[0:ch, t * cpp:t * cpp + cp].set(w2[:, :, dy, dx])
    wbig = wbig.at[ch:2 * ch, 4 * cpp:4 * cpp + cp].set(w3)   # center tap = 1x1
    bbig = jnp.concatenate([p["conv2"]["bias"], p["conv3"]["bias"]])[:, None]
    return w1, b1[:, None], wbig, bbig


# ----------------------------------------------------------------------------
# Module forward (channels-first, NCHW at the API)
# ----------------------------------------------------------------------------
def up_sample_forward(params, x_nchw, y_nchw):
    N, c_in, H, W = x_nchw.shape
    c_out = y_nchw.shape[1]
    ch = c_out // 2
    H2, W2 = 2 * H, 2 * W
    HW, HW2 = H * W, H2 * W2

    # ----------------- fire_module_T (one fused pallas_call) ----------------
    w1t, b1t, wup, bup, c3 = _pack_fire_t(params["fire_T"])
    cp1 = w1t.shape[0]
    x_flat = x_nchw.reshape(N, c_in, HW)
    blk = pl.pallas_call(
        _make_fire_t_kernel(H, W, ch),
        out_shape=jax.ShapeDtypeStruct((N, 2, 2, c_out, HW), jnp.float32),
        grid_spec=pltpu.PrefetchScalarGridSpec(
            num_scalar_prefetch=0,
            grid=(N,),
            in_specs=[
                pl.BlockSpec((1, c_in, HW), lambda n: (n, 0, 0)),
                pl.BlockSpec((cp1, c_in), lambda n: (0, 0)),
                pl.BlockSpec((cp1, 1), lambda n: (0, 0)),
                pl.BlockSpec((5 * ch, cp1), lambda n: (0, 0)),
                pl.BlockSpec((5 * ch, 1), lambda n: (0, 0)),
                pl.BlockSpec((ch, 1), lambda n: (0, 0)),
            ],
            out_specs=pl.BlockSpec((1, 2, 2, c_out, HW),
                                   lambda n: (n, 0, 0, 0, 0)),
        ),
        compiler_params=pltpu.CompilerParams(
            dimension_semantics=("parallel",)),
    )(x_flat, w1t, b1t, wup, bup, c3)

    # depth-to-space: block layout (N, ky, kx, C, H, W) -> NCHW (N, C, 2H, 2W)
    # (single small XLA transpose; reshapes are free).
    up = (blk.reshape(N, 2, 2, c_out, H, W)
             .transpose(0, 3, 4, 1, 5, 2)
             .reshape(N, c_out, HW2))
    y_flat = y_nchw.reshape(N, c_out, HW2)

    # ----------- fire_module_1 + fire_module_2 (one fused pallas_call) ------
    cp2 = params["fire_1"]["conv1"]["w"].shape[0]
    cpp = ((cp2 + 7) // 8) * 8
    w1f1, b1f1, wb1, bb1 = _pack_fire(params["fire_1"], cpp)
    w1a, w1b = w1f1[:, :c_out], w1f1[:, c_out:]       # split: upsample vs skip
    w1f2, b1f2, wb2, bb2 = _pack_fire(params["fire_2"], cpp)

    D = ((W2 + 1 + 127) // 128) * 128                 # aligned halo (>= W2 + 1)
    L = 2 * D + HW2

    out = pl.pallas_call(
        _make_fire_chain_kernel(H2, W2, cpp, ch, D),
        out_shape=jax.ShapeDtypeStruct((N, c_out, HW2), jnp.float32),
        grid_spec=pltpu.PrefetchScalarGridSpec(
            num_scalar_prefetch=0,
            grid=(N,),
            in_specs=[
                pl.BlockSpec((1, c_out, HW2), lambda n: (n, 0, 0)),
                pl.BlockSpec((1, c_out, HW2), lambda n: (n, 0, 0)),
                pl.BlockSpec((cpp, c_out), lambda n: (0, 0)),
                pl.BlockSpec((cpp, c_out), lambda n: (0, 0)),
                pl.BlockSpec((cpp, 1), lambda n: (0, 0)),
                pl.BlockSpec((2 * ch, 9 * cpp), lambda n: (0, 0)),
                pl.BlockSpec((2 * ch, 1), lambda n: (0, 0)),
                pl.BlockSpec((cpp, c_out), lambda n: (0, 0)),
                pl.BlockSpec((cpp, 1), lambda n: (0, 0)),
                pl.BlockSpec((2 * ch, 9 * cpp), lambda n: (0, 0)),
                pl.BlockSpec((2 * ch, 1), lambda n: (0, 0)),
            ],
            out_specs=pl.BlockSpec((1, c_out, HW2), lambda n: (n, 0, 0)),
            scratch_shapes=[pltpu.VMEM((cpp, L), jnp.float32)],
        ),
        compiler_params=pltpu.CompilerParams(
            dimension_semantics=("parallel",)),
    )(up, y_flat, w1a, w1b, b1f1, wb1, bb1, w1f2, b1f2, wb2, bb2)

    return out.reshape(N, c_out, H2, W2)


# ----------------------------------------------------------------------------
if __name__ == "__main__":
    key = jax.random.PRNGKey(0)
    kp, kx, kyk = jax.random.split(key, 3)

    # Up_Sample(c_in=8, c_out_p1=4, c_out_p2=6, c_out=8)
    c_in, c_out_p1, c_out_p2, c_out = 8, 4, 6, 8
    N, H, W = 2, 16, 16

    params = init_up_sample_params(kp, c_in, c_out_p1, c_out_p2, c_out)
    x = jax.random.normal(kx, (N, c_in, H, W), jnp.float32)            # NCHW
    y = jax.random.normal(kyk, (N, c_out, 2 * H, 2 * W), jnp.float32)  # NCHW skip

    out = jax.jit(up_sample_forward)(params, x, y)
    out = jax.block_until_ready(out)
    assert out.shape == (N, c_out, 2 * H, 2 * W), out.shape
    assert bool(jnp.all(jnp.isfinite(out)))
    print("KERNEL_OK")
</pallas_src>

<mosaic_0001>
module attributes {stable_mosaic.version = 11 : i64} {
  func.func @kernel(%arg0: i32, %arg1: memref<1x8x256xf32, #tpu.memory_space<vmem>>, %arg2: memref<4x8xf32, #tpu.memory_space<vmem>>, %arg3: memref<4x1xf32, #tpu.memory_space<vmem>>, %arg4: memref<20x4xf32, #tpu.memory_space<vmem>>, %arg5: memref<20x1xf32, #tpu.memory_space<vmem>>, %arg6: memref<4x1xf32, #tpu.memory_space<vmem>>, %arg7: memref<1x2x2x8x256xf32, #tpu.memory_space<vmem>>) attributes {dimension_semantics = [#tpu.dimension_semantics<parallel>], iteration_bounds = array<i64: 2>, scalar_prefetch = 0 : i64, scratch_operands = 0 : i64, tpu.core_type = #tpu.core_type<tc>, window_params = [{transform_indices = @transform_0, window_bounds = array<i64: 1, 8, 256>}, {pipeline_mode = #tpu.pipeline_mode<synchronous>, transform_indices = @transform_1, window_bounds = array<i64: 4, 8>}, {pipeline_mode = #tpu.pipeline_mode<synchronous>, transform_indices = @transform_2, window_bounds = array<i64: 4, 1>}, {pipeline_mode = #tpu.pipeline_mode<synchronous>, transform_indices = @transform_3, window_bounds = array<i64: 20, 4>}, {pipeline_mode = #tpu.pipeline_mode<synchronous>, transform_indices = @transform_4, window_bounds = array<i64: 20, 1>}, {pipeline_mode = #tpu.pipeline_mode<synchronous>, transform_indices = @transform_5, window_bounds = array<i64: 4, 1>}, {transform_indices = @transform_6, window_bounds = array<i64: 1, 2, 2, 8, 256>}]} {
    %c0 = arith.constant 0 : index
    %c0_0 = arith.constant 0 : index
    %c0_1 = arith.constant 0 : index
    %0 = vector.load %arg1[%c0, %c0_0, %c0_1] : memref<1x8x256xf32, #tpu.memory_space<vmem>>, vector<1x8x256xf32>
    %1 = vector.shape_cast %0 : vector<1x8x256xf32> to vector<8x256xf32>
    %c0_2 = arith.constant 0 : index
    %c0_3 = arith.constant 0 : index
    %2 = vector.load %arg2[%c0_2, %c0_3] : memref<4x8xf32, #tpu.memory_space<vmem>>, vector<4x8xf32>
    %cst = arith.constant dense<0.000000e+00> : vector<4x256xf32>
    %3 = tpu.matmul %2, %1, %cst {dimension_numbers = #tpu.dot_dimension_numbers<[1], [0], [0], [1], [0, 0, 1, 1], [], []>} : vector<4x8xf32>, vector<8x256xf32>, vector<4x256xf32> -> vector<4x256xf32>
    %c0_4 = arith.constant 0 : index
    %c0_5 = arith.constant 0 : index
    %4 = vector.load %arg3[%c0_4, %c0_5] : memref<4x1xf32, #tpu.memory_space<vmem>>, vector<4x1xf32>
    %5 = vector.broadcast %4 : vector<4x1xf32> to vector<4x256xf32>
    %6 = arith.addf %3, %5 : vector<4x256xf32>
    %cst_6 = arith.constant 0.000000e+00 : f32
    %7 = vector.broadcast %cst_6 : f32 to vector<4x256xf32>
    %8 = arith.maximumf %6, %7 : vector<4x256xf32>
    %cst_7 = arith.constant 6.000000e+00 : f32
    %9 = vector.broadcast %cst_7 : f32 to vector<4x256xf32>
    %10 = arith.minimumf %8, %9 : vector<4x256xf32>
    %c0_8 = arith.constant 0 : index
    %c0_9 = arith.constant 0 : index
    %11 = vector.load %arg4[%c0_8, %c0_9] : memref<20x4xf32, #tpu.memory_space<vmem>>, vector<20x4xf32>
    %cst_10 = arith.constant dense<0.000000e+00> : vector<20x256xf32>
    %12 = tpu.matmul %11, %10, %cst_10 {dimension_numbers = #tpu.dot_dimension_numbers<[1], [0], [0], [1], [0, 0, 1, 1], [], []>} : vector<20x4xf32>, vector<4x256xf32>, vector<20x256xf32> -> vector<20x256xf32>
    %c0_11 = arith.constant 0 : index
    %c0_12 = arith.constant 0 : index
    %13 = vector.load %arg5[%c0_11, %c0_12] : memref<20x1xf32, #tpu.memory_space<vmem>>, vector<20x1xf32>
    %14 = vector.broadcast %13 : vector<20x1xf32> to vector<20x256xf32>
    %15 = arith.addf %12, %14 : vector<20x256xf32>
    %cst_13 = arith.constant 0.000000e+00 : f32
    %16 = vector.broadcast %cst_13 : f32 to vector<20x256xf32>
    %17 = arith.maximumf %15, %16 : vector<20x256xf32>
    %cst_14 = arith.constant 6.000000e+00 : f32
    %18 = vector.broadcast %cst_14 : f32 to vector<20x256xf32>
    %19 = arith.minimumf %17, %18 : vector<20x256xf32>
    %20 = tpu.iota {dimensions = array<i32: 1>} : vector<1x256xi32>
    %c16_i32 = arith.constant 16 : i32
    %c0_i32 = arith.constant 0 : i32
    %21 = arith.cmpi eq, %c16_i32, %c0_i32 : i32
    %c1_i32 = arith.constant 1 : i32
    %22 = arith.select %21, %c1_i32, %c16_i32 : i32
    %23 = vector.broadcast %22 : i32 to vector<1x256xi32>
    %24 = arith.remsi %20, %23 : vector<1x256xi32>
    %c0_i32_15 = arith.constant 0 : i32
    %25 = vector.broadcast %c0_i32_15 : i32 to vector<1x256xi32>
    %26 = arith.cmpi ne, %24, %25 : vector<1x256xi32>
    %c0_i32_16 = arith.constant 0 : i32
    %27 = vector.broadcast %c0_i32_16 : i32 to vector<1x256xi32>
    %28 = arith.cmpi slt, %24, %27 : vector<1x256xi32>
    %c0_i32_17 = arith.constant 0 : i32
    %29 = arith.cmpi slt, %22, %c0_i32_17 : i32
    %30 = vector.broadcast %29 : i1 to vector<1x256xi1>
    %31 = vector.broadcast %30 : vector<1x256xi1> to vector<1x256xi1>
    %32 = arith.xori %28, %31 : vector<1x256xi1>
    %33 = arith.andi %32, %26 : vector<1x256xi1>
    %34 = vector.broadcast %22 : i32 to vector<1x256xi32>
    %35 = arith.addi %24, %34 : vector<1x256xi32>
    %36 = arith.select %33, %35, %24 : vector<1x256xi1>, vector<1x256xi32>
    %c15_i32 = arith.constant 15 : i32
    %37 = vector.broadcast %c15_i32 : i32 to vector<1x256xi32>
    %38 = arith.cmpi eq, %36, %37 : vector<1x256xi32>
    %c240_i32 = arith.constant 240 : i32
    %39 = vector.broadcast %c240_i32 : i32 to vector<1x256xi32>
    %40 = arith.cmpi sge, %20, %39 : vector<1x256xi32>
    %c0_18 = arith.constant 0 : index
    %c0_19 = arith.constant 0 : index
    %41 = vector.load %arg6[%c0_18, %c0_19] : memref<4x1xf32, #tpu.memory_space<vmem>>, vector<4x1xf32>
    %42 = vector.extract_strided_slice %19 {offsets = [0, 0], sizes = [4, 256], strides = [1, 1]} : vector<20x256xf32> to vector<4x256xf32>
    %43 = vector.extract_strided_slice %19 {offsets = [16, 0], sizes = [4, 256], strides = [1, 1]} : vector<20x256xf32> to vector<4x256xf32>
    %44 = tpu.concatenate %42, %43 in 0 : vector<4x256xf32>, vector<4x256xf32> -> vector<8x256xf32>
    %c0_20 = arith.constant 0 : index
    %c0_21 = arith.constant 0 : index
    %c0_22 = arith.constant 0 : index
    %c0_23 = arith.constant 0 : index
    %c0_24 = arith.constant 0 : index
    %45 = vector.load %arg7[%c0_20, %c0_21, %c0_22, %c0_23, %c0_24] : memref<1x2x2x8x256xf32, #tpu.memory_space<vmem>>, vector<1x1x1x8x256xf32>
    %46 = vector.shape_cast %45 : vector<1x1x1x8x256xf32> to vector<8x256xf32>
    %47 = vector.shape_cast %44 : vector<8x256xf32> to vector<1x1x1x8x256xf32>
    tpu.vector_store %arg7[%c0_20, %c0_21, %c0_22, %c0_23, %c0_24], %47 {strides = array<i32>} : memref<1x2x2x8x256xf32, #tpu.memory_space<vmem>>, vector<1x1x1x8x256xf32>,
    %48 = vector.extract_strided_slice %19 {offsets = [4, 0], sizes = [4, 256], strides = [1, 1]} : vector<20x256xf32> to vector<4x256xf32>
    %cst_25 = arith.constant 0.000000e+00 : f32
    %49 = vector.shape_cast %38 : vector<1x256xi1> to vector<1x256xi1>
    %50 = vector.broadcast %49 : vector<1x256xi1> to vector<4x256xi1>
    %51 = vector.broadcast %cst_25 : f32 to vector<4x256xf32>
    %52 = vector.shape_cast %41 : vector<4x1xf32> to vector<4x1xf32>
    %53 = vector.broadcast %52 : vector<4x1xf32> to vector<4x256xf32>
    %54 = arith.select %50, %51, %53 : vector<4x256xi1>, vector<4x256xf32>
    %55 = tpu.concatenate %48, %54 in 0 : vector<4x256xf32>, vector<4x256xf32> -> vector<8x256xf32>
    %c0_26 = arith.constant 0 : index
    %c0_27 = arith.constant 0 : index
    %c1 = arith.constant 1 : index
    %c0_28 = arith.constant 0 : index
    %c0_29 = arith.constant 0 : index
    %56 = vector.load %arg7[%c0_26, %c0_27, %c1, %c0_28, %c0_29] : memref<1x2x2x8x256xf32, #tpu.memory_space<vmem>>, vector<1x1x1x8x256xf32>
    %57 = vector.shape_cast %56 : vector<1x1x1x8x256xf32> to vector<8x256xf32>
    %58 = vector.shape_cast %55 : vector<8x256xf32> to vector<1x1x1x8x256xf32>
    tpu.vector_store %arg7[%c0_26, %c0_27, %c1, %c0_28, %c0_29], %58 {strides = array<i32>} : memref<1x2x2x8x256xf32, #tpu.memory_space<vmem>>, vector<1x1x1x8x256xf32>,
    %59 = vector.extract_strided_slice %19 {offsets = [8, 0], sizes = [4, 256], strides = [1, 1]} : vector<20x256xf32> to vector<4x256xf32>
    %cst_30 = arith.constant 0.000000e+00 : f32
    %60 = vector.shape_cast %40 : vector<1x256xi1> to vector<1x256xi1>
    %61 = vector.broadcast %60 : vector<1x256xi1> to vector<4x256xi1>
    %62 = vector.broadcast %cst_30 : f32 to vector<4x256xf32>
    %63 = vector.shape_cast %41 : vector<4x1xf32> to vector<4x1xf32>
    %64 = vector.broadcast %63 : vector<4x1xf32> to vector<4x256xf32>
    %65 = arith.select %61, %62, %64 : vector<4x256xi1>, vector<4x256xf32>
    %66 = tpu.concatenate %59, %65 in 0 : vector<4x256xf32>, vector<4x256xf32> -> vector<8x256xf32>
    %c0_31 = arith.constant 0 : index
    %c1_32 = arith.constant 1 : index
    %c0_33 = arith.constant 0 : index
    %c0_34 = arith.constant 0 : index
    %c0_35 = arith.constant 0 : index
    %67 = vector.load %arg7[%c0_31, %c1_32, %c0_33, %c0_34, %c0_35] : memref<1x2x2x8x256xf32, #tpu.memory_space<vmem>>, vector<1x1x1x8x256xf32>
    %68 = vector.shape_cast %67 : vector<1x1x1x8x256xf32> to vector<8x256xf32>
    %69 = vector.shape_cast %66 : vector<8x256xf32> to vector<1x1x1x8x256xf32>
    tpu.vector_store %arg7[%c0_31, %c1_32, %c0_33, %c0_34, %c0_35], %69 {strides = array<i32>} : memref<1x2x2x8x256xf32, #tpu.memory_space<vmem>>, vector<1x1x1x8x256xf32>,
    %70 = vector.extract_strided_slice %19 {offsets = [12, 0], sizes = [4, 256], strides = [1, 1]} : vector<20x256xf32> to vector<4x256xf32>
    %71 = arith.ori %40, %38 : vector<1x256xi1>
    %cst_36 = arith.constant 0.000000e+00 : f32
    %72 = vector.shape_cast %71 : vector<1x256xi1> to vector<1x256xi1>
    %73 = vector.broadcast %72 : vector<1x256xi1> to vector<4x256xi1>
    %74 = vector.broadcast %cst_36 : f32 to vector<4x256xf32>
    %75 = vector.shape_cast %41 : vector<4x1xf32> to vector<4x1xf32>
    %76 = vector.broadcast %75 : vector<4x1xf32> to vector<4x256xf32>
    %77 = arith.select %73, %74, %76 : vector<4x256xi1>, vector<4x256xf32>
    %78 = tpu.concatenate %70, %77 in 0 : vector<4x256xf32>, vector<4x256xf32> -> vector<8x256xf32>
    %c0_37 = arith.constant 0 : index
    %c1_38 = arith.constant 1 : index
    %c1_39 = arith.constant 1 : index
    %c0_40 = arith.constant 0 : index
    %c0_41 = arith.constant 0 : index
    %79 = vector.load %arg7[%c0_37, %c1_38, %c1_39, %c0_40, %c0_41] : memref<1x2x2x8x256xf32, #tpu.memory_space<vmem>>, vector<1x1x1x8x256xf32>
    %80 = vector.shape_cast %79 : vector<1x1x1x8x256xf32> to vector<8x256xf32>
    %81 = vector.shape_cast %78 : vector<8x256xf32> to vector<1x1x1x8x256xf32>
    tpu.vector_store %arg7[%c0_37, %c1_38, %c1_39, %c0_40, %c0_41], %81 {strides = array<i32>} : memref<1x2x2x8x256xf32, #tpu.memory_space<vmem>>, vector<1x1x1x8x256xf32>,
    return
  }
  func.func @transform_0(%arg0: i32) -> (i32, i32, i32) {
    %c0_i32 = arith.constant 0 : i32
    %c0_i32_0 = arith.constant 0 : i32
    %c0_i32_1 = arith.constant 0 : i32
    return %arg0, %c0_i32, %c0_i32_0 : i32, i32, i32
  }
  func.func @transform_1(%arg0: i32) -> (i32, i32) {
    %c0_i32 = arith.constant 0 : i32
    %c0_i32_0 = arith.constant 0 : i32
    %c0_i32_1 = arith.constant 0 : i32
    return %c0_i32, %c0_i32_0 : i32, i32
  }
  func.func @transform_2(%arg0: i32) -> (i32, i32) {
    %c0_i32 = arith.constant 0 : i32
    %c0_i32_0 = arith.constant 0 : i32
    %c0_i32_1 = arith.constant 0 : i32
    return %c0_i32, %c0_i32_0 : i32, i32
  }
  func.func @transform_3(%arg0: i32) -> (i32, i32) {
    %c0_i32 = arith.constant 0 : i32
    %c0_i32_0 = arith.constant 0 : i32
    %c0_i32_1 = arith.constant 0 : i32
    return %c0_i32, %c0_i32_0 : i32, i32
  }
  func.func @transform_4(%arg0: i32) -> (i32, i32) {
    %c0_i32 = arith.constant 0 : i32
    %c0_i32_0 = arith.constant 0 : i32
    %c0_i32_1 = arith.constant 0 : i32
    return %c0_i32, %c0_i32_0 : i32, i32
  }
  func.func @transform_5(%arg0: i32) -> (i32, i32) {
    %c0_i32 = arith.constant 0 : i32
    %c0_i32_0 = arith.constant 0 : i32
    %c0_i32_1 = arith.constant 0 : i32
    return %c0_i32, %c0_i32_0 : i32, i32
  }
  func.func @transform_6(%arg0: i32) -> (i32, i32, i32, i32, i32) {
    %c0_i32 = arith.constant 0 : i32
    %c0_i32_0 = arith.constant 0 : i32
    %c0_i32_1 = arith.constant 0 : i32
    %c0_i32_2 = arith.constant 0 : i32
    %c0_i32_3 = arith.constant 0 : i32
    return %arg0, %c0_i32, %c0_i32_0, %c0_i32_1, %c0_i32_2 : i32, i32, i32, i32, i32
  }
}

module attributes {stable_mosaic.version = 11 : i64} {
  func.func @kernel(%arg0: i32, %arg1: memref<1x8x1024xf32, #tpu.memory_space<vmem>>, %arg2: memref<1x8x1024xf32, #tpu.memory_space<vmem>>, %arg3: memref<8x8xf32, #tpu.memory_space<vmem>>, %arg4: memref<8x8xf32, #tpu.memory_space<vmem>>, %arg5: memref<8x1xf32, #tpu.memory_space<vmem>>, %arg6: memref<8x72xf32, #tpu.memory_space<vmem>>, %arg7: memref<8x1xf32, #tpu.memory_space<vmem>>, %arg8: memref<8x8xf32, #tpu.memory_space<vmem>>, %arg9: memref<8x1xf32, #tpu.memory_space<vmem>>, %arg10: memref<8x72xf32, #tpu.memory_space<vmem>>, %arg11: memref<8x1xf32, #tpu.memory_space<vmem>>, %arg12: memref<1x8x1024xf32, #tpu.memory_space<vmem>>, %arg13: memref<8x1280xf32, #tpu.memory_space<vmem>>) attributes {dimension_semantics = [#tpu.dimension_semantics<parallel>], iteration_bounds = array<i64: 2>, scalar_prefetch = 0 : i64, scratch_operands = 1 : i64, tpu.core_type = #tpu.core_type<tc>, window_params = [{transform_indices = @transform_0, window_bounds = array<i64: 1, 8, 1024>}, {transform_indices = @transform_1, window_bounds = array<i64: 1, 8, 1024>}, {pipeline_mode = #tpu.pipeline_mode<synchronous>, transform_indices = @transform_2, window_bounds = array<i64: 8, 8>}, {pipeline_mode = #tpu.pipeline_mode<synchronous>, transform_indices = @transform_3, window_bounds = array<i64: 8, 8>}, {pipeline_mode = #tpu.pipeline_mode<synchronous>, transform_indices = @transform_4, window_bounds = array<i64: 8, 1>}, {pipeline_mode = #tpu.pipeline_mode<synchronous>, transform_indices = @transform_5, window_bounds = array<i64: 8, 72>}, {pipeline_mode = #tpu.pipeline_mode<synchronous>, transform_indices = @transform_6, window_bounds = array<i64: 8, 1>}, {pipeline_mode = #tpu.pipeline_mode<synchronous>, transform_indices = @transform_7, window_bounds = array<i64: 8, 8>}, {pipeline_mode = #tpu.pipeline_mode<synchronous>, transform_indices = @transform_8, window_bounds = array<i64: 8, 1>}, {pipeline_mode = #tpu.pipeline_mode<synchronous>, transform_indices = @transform_9, window_bounds = array<i64: 8, 72>}, {pipeline_mode = #tpu.pipeline_mode<synchronous>, transform_indices = @transform_10, window_bounds = array<i64: 8, 1>}, {transform_indices = @transform_11, window_bounds = array<i64: 1, 8, 1024>}]} {
    %cst = arith.constant 0.000000e+00 : f32
    %0 = vector.broadcast %cst : f32 to vector<8x128xf32>
    %c0 = arith.constant 0 : index
    %c0_0 = arith.constant 0 : index
    %1 = vector.load %arg13[%c0, %c0_0] : memref<8x1280xf32, #tpu.memory_space<vmem>>, vector<8x128xf32>
    tpu.vector_store %arg13[%c0, %c0_0], %0 {strides = array<i32>} : memref<8x1280xf32, #tpu.memory_space<vmem>>, vector<8x128xf32>,
    %cst_1 = arith.constant 0.000000e+00 : f32
    %2 = vector.broadcast %cst_1 : f32 to vector<8x128xf32>
    %c0_2 = arith.constant 0 : index
    %c1152 = arith.constant 1152 : index
    %3 = vector.load %arg13[%c0_2, %c1152] : memref<8x1280xf32, #tpu.memory_space<vmem>>, vector<8x128xf32>
    tpu.vector_store %arg13[%c0_2, %c1152], %2 {strides = array<i32>} : memref<8x1280xf32, #tpu.memory_space<vmem>>, vector<8x128xf32>,
    %c0_3 = arith.constant 0 : index
    %c0_4 = arith.constant 0 : index
    %c0_5 = arith.constant 0 : index
    %4 = vector.load %arg1[%c0_3, %c0_4, %c0_5] : memref<1x8x1024xf32, #tpu.memory_space<vmem>>, vector<1x8x1024xf32>
    %5 = vector.shape_cast %4 : vector<1x8x1024xf32> to vector<8x1024xf32>
    %c0_6 = arith.constant 0 : index
    %c0_7 = arith.constant 0 : index
    %c0_8 = arith.constant 0 : index
    %6 = vector.load %arg2[%c0_6, %c0_7, %c0_8] : memref<1x8x1024xf32, #tpu.memory_space<vmem>>, vector<1x8x1024xf32>
    %7 = vector.shape_cast %6 : vector<1x8x1024xf32> to vector<8x1024xf32>
    %c0_9 = arith.constant 0 : index
    %c0_10 = arith.constant 0 : index
    %8 = vector.load %arg3[%c0_9, %c0_10] : memref<8x8xf32, #tpu.memory_space<vmem>>, vector<8x8xf32>
    %cst_11 = arith.constant dense<0.000000e+00> : vector<8x1024xf32>
    %9 = tpu.matmul %8, %5, %cst_11 {dimension_numbers = #tpu.dot_dimension_numbers<[1], [0], [0], [1], [0, 0, 1, 1], [], []>} : vector<8x8xf32>, vector<8x1024xf32>, vector<8x1024xf32> -> vector<8x1024xf32>
    %c0_12 = arith.constant 0 : index
    %c0_13 = arith.constant 0 : index
    %10 = vector.load %arg4[%c0_12, %c0_13] : memref<8x8xf32, #tpu.memory_space<vmem>>, vector<8x8xf32>
    %cst_14 = arith.constant dense<0.000000e+00> : vector<8x1024xf32>
    %11 = tpu.matmul %10, %7, %cst_14 {dimension_numbers = #tpu.dot_dimension_numbers<[1], [0], [0], [1], [0, 0, 1, 1], [], []>} : vector<8x8xf32>, vector<8x1024xf32>, vector<8x1024xf32> -> vector<8x1024xf32>
    %12 = arith.addf %9, %11 : vector<8x1024xf32>
    %c0_15 = arith.constant 0 : index
    %c0_16 = arith.constant 0 : index
    %13 = vector.load %arg5[%c0_15, %c0_16] : memref<8x1xf32, #tpu.memory_space<vmem>>, vector<8x1xf32>
    %14 = vector.broadcast %13 : vector<8x1xf32> to vector<8x1024xf32>
    %15 = arith.addf %12, %14 : vector<8x1024xf32>
    %cst_17 = arith.constant 0.000000e+00 : f32
    %16 = vector.broadcast %cst_17 : f32 to vector<8x1024xf32>
    %17 = arith.maximumf %15, %16 : vector<8x1024xf32>
    %cst_18 = arith.constant 6.000000e+00 : f32
    %18 = vector.broadcast %cst_18 : f32 to vector<8x1024xf32>
    %19 = arith.minimumf %17, %18 : vector<8x1024xf32>
    %c0_19 = arith.constant 0 : index
    %c0_20 = arith.constant 0 : index
    %20 = vector.load %arg6[%c0_19, %c0_20] : memref<8x72xf32, #tpu.memory_space<vmem>>, vector<8x72xf32>
    %c0_21 = arith.constant 0 : index
    %c0_22 = arith.constant 0 : index
    %21 = vector.load %arg7[%c0_21, %c0_22] : memref<8x1xf32, #tpu.memory_space<vmem>>, vector<8x1xf32>
    %c0_23 = arith.constant 0 : index
    %c128 = arith.constant 128 : index
    %22 = vector.load %arg13[%c0_23, %c128] : memref<8x1280xf32, #tpu.memory_space<vmem>>, vector<8x1024xf32>
    tpu.vector_store %arg13[%c0_23, %c128], %19 {strides = array<i32>} : memref<8x1280xf32, #tpu.memory_space<vmem>>, vector<8x1024xf32>,
    %23 = tpu.iota {dimensions = array<i32: 1>} : vector<1x1024xi32>
    %c32_i32 = arith.constant 32 : i32
    %c0_i32 = arith.constant 0 : i32
    %24 = arith.cmpi eq, %c32_i32, %c0_i32 : i32
    %c1_i32 = arith.constant 1 : i32
    %25 = arith.select %24, %c1_i32, %c32_i32 : i32
    %26 = vector.broadcast %25 : i32 to vector<1x1024xi32>
    %27 = arith.remsi %23, %26 : vector<1x1024xi32>
    %c0_i32_24 = arith.constant 0 : i32
    %28 = vector.broadcast %c0_i32_24 : i32 to vector<1x1024xi32>
    %29 = arith.cmpi ne, %27, %28 : vector<1x1024xi32>
    %c0_i32_25 = arith.constant 0 : i32
    %30 = vector.broadcast %c0_i32_25 : i32 to vector<1x1024xi32>
    %31 = arith.cmpi slt, %27, %30 : vector<1x1024xi32>
    %c0_i32_26 = arith.constant 0 : i32
    %32 = arith.cmpi slt, %25, %c0_i32_26 : i32
    %33 = vector.broadcast %32 : i1 to vector<1x1024xi1>
    %34 = vector.broadcast %33 : vector<1x1024xi1> to vector<1x1024xi1>
    %35 = arith.xori %31, %34 : vector<1x1024xi1>
    %36 = arith.andi %35, %29 : vector<1x1024xi1>
    %37 = vector.broadcast %25 : i32 to vector<1x1024xi32>
    %38 = arith.addi %27, %37 : vector<1x1024xi32>
    %39 = arith.select %36, %38, %27 : vector<1x1024xi1>, vector<1x1024xi32>
    %c0_i32_27 = arith.constant 0 : i32
    %40 = vector.broadcast %c0_i32_27 : i32 to vector<1x1024xi32>
    %41 = arith.cmpi ne, %39, %40 : vector<1x1024xi32>
    %c31_i32 = arith.constant 31 : i32
    %42 = vector.broadcast %c31_i32 : i32 to vector<1x1024xi32>
    %43 = arith.cmpi ne, %39, %42 : vector<1x1024xi32>
    %c0_28 = arith.constant 0 : index
    %c95 = arith.constant 95 : index
    %44 = vector.load %arg13[%c0_28, %c95] : memref<8x1280xf32, #tpu.memory_space<vmem>>, vector<8x1024xf32>
    %cst_29 = arith.constant 0.000000e+00 : f32
    %45 = vector.shape_cast %41 : vector<1x1024xi1> to vector<1x1024xi1>
    %46 = vector.broadcast %45 : vector<1x1024xi1> to vector<8x1024xi1>
    %47 = vector.broadcast %cst_29 : f32 to vector<8x1024xf32>
    %48 = arith.select %46, %44, %47 : vector<8x1024xi1>, vector<8x1024xf32>
    %c0_30 = arith.constant 0 : index
    %c96 = arith.constant 96 : index
    %49 = vector.load %arg13[%c0_30, %c96] : memref<8x1280xf32, #tpu.memory_space<vmem>>, vector<8x1024xf32>
    %c0_31 = arith.constant 0 : index
    %c97 = arith.constant 97 : index
    %50 = vector.load %arg13[%c0_31, %c97] : memref<8x1280xf32, #tpu.memory_space<vmem>>, vector<8x1024xf32>
    %cst_32 = arith.constant 0.000000e+00 : f32
    %51 = vector.shape_cast %43 : vector<1x1024xi1> to vector<1x1024xi1>
    %52 = vector.broadcast %51 : vector<1x1024xi1> to vector<8x1024xi1>
    %53 = vector.broadcast %cst_32 : f32 to vector<8x1024xf32>
    %54 = arith.select %52, %50, %53 : vector<8x1024xi1>, vector<8x1024xf32>
    %c0_33 = arith.constant 0 : index
    %c127 = arith.constant 127 : index
    %55 = vector.load %arg13[%c0_33, %c127] : memref<8x1280xf32, #tpu.memory_space<vmem>>, vector<8x1024xf32>
    %cst_34 = arith.constant 0.000000e+00 : f32
    %56 = vector.shape_cast %41 : vector<1x1024xi1> to vector<1x1024xi1>
    %57 = vector.broadcast %56 : vector<1x1024xi1> to vector<8x1024xi1>
    %58 = vector.broadcast %cst_34 : f32 to vector<8x1024xf32>
    %59 = arith.select %57, %55, %58 : vector<8x1024xi1>, vector<8x1024xf32>
    %c0_35 = arith.constant 0 : index
    %c128_36 = arith.constant 128 : index
    %60 = vector.load %arg13[%c0_35, %c128_36] : memref<8x1280xf32, #tpu.memory_space<vmem>>, vector<8x1024xf32>
    %c0_37 = arith.constant 0 : index
    %c129 = arith.constant 129 : index
    %61 = vector.load %arg13[%c0_37, %c129] : memref<8x1280xf32, #tpu.memory_space<vmem>>, vector<8x1024xf32>
    %cst_38 = arith.constant 0.000000e+00 : f32
    %62 = vector.shape_cast %43 : vector<1x1024xi1> to vector<1x1024xi1>
    %63 = vector.broadcast %62 : vector<1x1024xi1> to vector<8x1024xi1>
    %64 = vector.broadcast %cst_38 : f32 to vector<8x1024xf32>
    %65 = arith.select %63, %61, %64 : vector<8x1024xi1>, vector<8x1024xf32>
    %c0_39 = arith.constant 0 : index
    %c159 = arith.constant 159 : index
    %66 = vector.load %arg13[%c0_39, %c159] : memref<8x1280xf32, #tpu.memory_space<vmem>>, vector<8x1024xf32>
    %cst_40 = arith.constant 0.000000e+00 : f32
    %67 = vector.shape_cast %41 : vector<1x1024xi1> to vector<1x1024xi1>
    %68 = vector.broadcast %67 : vector<1x1024xi1> to vector<8x1024xi1>
    %69 = vector.broadcast %cst_40 : f32 to vector<8x1024xf32>
    %70 = arith.select %68, %66, %69 : vector<8x1024xi1>, vector<8x1024xf32>
    %c0_41 = arith.constant 0 : index
    %c160 = arith.constant 160 : index
    %71 = vector.load %arg13[%c0_41, %c160] : memref<8x1280xf32, #tpu.memory_space<vmem>>, vector<8x1024xf32>
    %c0_42 = arith.constant 0 : index
    %c161 = arith.constant 161 : index
    %72 = vector.load %arg13[%c0_42, %c161] : memref<8x1280xf32, #tpu.memory_space<vmem>>, vector<8x1024xf32>
    %cst_43 = arith.constant 0.000000e+00 : f32
    %73 = vector.shape_cast %43 : vector<1x1024xi1> to vector<1x1024xi1>
    %74 = vector.broadcast %73 : vector<1x1024xi1> to vector<8x1024xi1>
    %75 = vector.broadcast %cst_43 : f32 to vector<8x1024xf32>
    %76 = arith.select %74, %72, %75 : vector<8x1024xi1>, vector<8x1024xf32>
    %77 = tpu.concatenate %48, %49, %54, %59, %60, %65, %70, %71, %76 in 0 : vector<8x1024xf32>, vector<8x1024xf32>, vector<8x1024xf32>, vector<8x1024xf32>, vector<8x1024xf32>, vector<8x1024xf32>, vector<8x1024xf32>, vector<8x1024xf32>, vector<8x1024xf32> -> vector<72x1024xf32>
    %cst_44 = arith.constant dense<0.000000e+00> : vector<8x1024xf32>
    %78 = tpu.matmul %20, %77, %cst_44 {dimension_numbers = #tpu.dot_dimension_numbers<[1], [0], [0], [1], [0, 0, 1, 1], [], []>} : vector<8x72xf32>, vector<72x1024xf32>, vector<8x1024xf32> -> vector<8x1024xf32>
    %79 = vector.broadcast %21 : vector<8x1xf32> to vector<8x1024xf32>
    %80 = arith.addf %78, %79 : vector<8x1024xf32>
    %cst_45 = arith.constant 0.000000e+00 : f32
    %81 = vector.broadcast %cst_45 : f32 to vector<8x1024xf32>
    %82 = arith.maximumf %80, %81 : vector<8x1024xf32>
    %cst_46 = arith.constant 6.000000e+00 : f32
    %83 = vector.broadcast %cst_46 : f32 to vector<8x1024xf32>
    %84 = arith.minimumf %82, %83 : vector<8x1024xf32>
    %c0_47 = arith.constant 0 : index
    %c0_48 = arith.constant 0 : index
    %85 = vector.load %arg8[%c0_47, %c0_48] : memref<8x8xf32, #tpu.memory_space<vmem>>, vector<8x8xf32>
    %cst_49 = arith.constant dense<0.000000e+00> : vector<8x1024xf32>
    %86 = tpu.matmul %85, %84, %cst_49 {dimension_numbers = #tpu.dot_dimension_numbers<[1], [0], [0], [1], [0, 0, 1, 1], [], []>} : vector<8x8xf32>, vector<8x1024xf32>, vector<8x1024xf32> -> vector<8x1024xf32>
    %c0_50 = arith.constant 0 : index
    %c0_51 = arith.constant 0 : index
    %87 = vector.load %arg9[%c0_50, %c0_51] : memref<8x1xf32, #tpu.memory_space<vmem>>, vector<8x1xf32>
    %88 = vector.broadcast %87 : vector<8x1xf32> to vector<8x1024xf32>
    %89 = arith.addf %86, %88 : vector<8x1024xf32>
    %cst_52 = arith.constant 0.000000e+00 : f32
    %90 = vector.broadcast %cst_52 : f32 to vector<8x1024xf32>
    %91 = arith.maximumf %89, %90 : vector<8x1024xf32>
    %cst_53 = arith.constant 6.000000e+00 : f32
    %92 = vector.broadcast %cst_53 : f32 to vector<8x1024xf32>
    %93 = arith.minimumf %91, %92 : vector<8x1024xf32>
    %c0_54 = arith.constant 0 : index
    %c0_55 = arith.constant 0 : index
    %94 = vector.load %arg10[%c0_54, %c0_55] : memref<8x72xf32, #tpu.memory_space<vmem>>, vector<8x72xf32>
    %c0_56 = arith.constant 0 : index
    %c0_57 = arith.constant 0 : index
    %95 = vector.load %arg11[%c0_56, %c0_57] : memref<8x1xf32, #tpu.memory_space<vmem>>, vector<8x1xf32>
    %c0_58 = arith.constant 0 : index
    %c128_59 = arith.constant 128 : index
    %96 = vector.load %arg13[%c0_58, %c128_59] : memref<8x1280xf32, #tpu.memory_space<vmem>>, vector<8x1024xf32>
    tpu.vector_store %arg13[%c0_58, %c128_59], %93 {strides = array<i32>} : memref<8x1280xf32, #tpu.memory_space<vmem>>, vector<8x1024xf32>,
    %97 = tpu.iota {dimensions = array<i32: 1>} : vector<1x1024xi32>
    %c32_i32_60 = arith.constant 32 : i32
    %c0_i32_61 = arith.constant 0 : i32
    %98 = arith.cmpi eq, %c32_i32_60, %c0_i32_61 : i32
    %c1_i32_62 = arith.constant 1 : i32
    %99 = arith.select %98, %c1_i32_62, %c32_i32_60 : i32
    %100 = vector.broadcast %99 : i32 to vector<1x1024xi32>
    %101 = arith.remsi %97, %100 : vector<1x1024xi32>
    %c0_i32_63 = arith.constant 0 : i32
    %102 = vector.broadcast %c0_i32_63 : i32 to vector<1x1024xi32>
    %103 = arith.cmpi ne, %101, %102 : vector<1x1024xi32>
    %c0_i32_64 = arith.constant 0 : i32
    %104 = vector.broadcast %c0_i32_64 : i32 to vector<1x1024xi32>
    %105 = arith.cmpi slt, %101, %104 : vector<1x1024xi32>
    %c0_i32_65 = arith.constant 0 : i32
    %106 = arith.cmpi slt, %99, %c0_i32_65 : i32
    %107 = vector.broadcast %106 : i1 to vector<1x1024xi1>
    %108 = vector.broadcast %107 : vector<1x1024xi1> to vector<1x1024xi1>
    %109 = arith.xori %105, %108 : vector<1x1024xi1>
    %110 = arith.andi %109, %103 : vector<1x1024xi1>
    %111 = vector.broadcast %99 : i32 to vector<1x1024xi32>
    %112 = arith.addi %101, %111 : vector<1x1024xi32>
    %113 = arith.select %110, %112, %101 : vector<1x1024xi1>, vector<1x1024xi32>
    %c0_i32_66 = arith.constant 0 : i32
    %114 = vector.broadcast %c0_i32_66 : i32 to vector<1x1024xi32>
    %115 = arith.cmpi ne, %113, %114 : vector<1x1024xi32>
    %c31_i32_67 = arith.constant 31 : i32
    %116 = vector.broadcast %c31_i32_67 : i32 to vector<1x1024xi32>
    %117 = arith.cmpi ne, %113, %116 : vector<1x1024xi32>
    %c0_68 = arith.constant 0 : index
    %c95_69 = arith.constant 95 : index
    %118 = vector.load %arg13[%c0_68, %c95_69] : memref<8x1280xf32, #tpu.memory_space<vmem>>, vector<8x1024xf32>
    %cst_70 = arith.constant 0.000000e+00 : f32
    %119 = vector.shape_cast %115 : vector<1x1024xi1> to vector<1x1024xi1>
    %120 = vector.broadcast %119 : vector<1x1024xi1> to vector<8x1024xi1>
    %121 = vector.broadcast %cst_70 : f32 to vector<8x1024xf32>
    %122 = arith.select %120, %118, %121 : vector<8x1024xi1>, vector<8x1024xf32>
    %c0_71 = arith.constant 0 : index
    %c96_72 = arith.constant 96 : index
    %123 = vector.load %arg13[%c0_71, %c96_72] : memref<8x1280xf32, #tpu.memory_space<vmem>>, vector<8x1024xf32>
    %c0_73 = arith.constant 0 : index
    %c97_74 = arith.constant 97 : index
    %124 = vector.load %arg13[%c0_73, %c97_74] : memref<8x1280xf32, #tpu.memory_space<vmem>>, vector<8x1024xf32>
    %cst_75 = arith.constant 0.000000e+00 : f32
    %125 = vector.shape_cast %117 : vector<1x1024xi1> to vector<1x1024xi1>
    %126 = vector.broadcast %125 : vector<1x1024xi1> to vector<8x1024xi1>
    %127 = vector.broadcast %cst_75 : f32 to vector<8x1024xf32>
    %128 = arith.select %126, %124, %127 : vector<8x1024xi1>, vector<8x1024xf32>
    %c0_76 = arith.constant 0 : index
    %c127_77 = arith.constant 127 : index
    %129 = vector.load %arg13[%c0_76, %c127_77] : memref<8x1280xf32, #tpu.memory_space<vmem>>, vector<8x1024xf32>
    %cst_78 = arith.constant 0.000000e+00 : f32
    %130 = vector.shape_cast %115 : vector<1x1024xi1> to vector<1x1024xi1>
    %131 = vector.broadcast %130 : vector<1x1024xi1> to vector<8x1024xi1>
    %132 = vector.broadcast %cst_78 : f32 to vector<8x1024xf32>
    %133 = arith.select %131, %129, %132 : vector<8x1024xi1>, vector<8x1024xf32>
    %c0_79 = arith.constant 0 : index
    %c128_80 = arith.constant 128 : index
    %134 = vector.load %arg13[%c0_79, %c128_80] : memref<8x1280xf32, #tpu.memory_space<vmem>>, vector<8x1024xf32>
    %c0_81 = arith.constant 0 : index
    %c129_82 = arith.constant 129 : index
    %135 = vector.load %arg13[%c0_81, %c129_82] : memref<8x1280xf32, #tpu.memory_space<vmem>>, vector<8x1024xf32>
    %cst_83 = arith.constant 0.000000e+00 : f32
    %136 = vector.shape_cast %117 : vector<1x1024xi1> to vector<1x1024xi1>
    %137 = vector.broadcast %136 : vector<1x1024xi1> to vector<8x1024xi1>
    %138 = vector.broadcast %cst_83 : f32 to vector<8x1024xf32>
    %139 = arith.select %137, %135, %138 : vector<8x1024xi1>, vector<8x1024xf32>
    %c0_84 = arith.constant 0 : index
    %c159_85 = arith.constant 159 : index
    %140 = vector.load %arg13[%c0_84, %c159_85] : memref<8x1280xf32, #tpu.memory_space<vmem>>, vector<8x1024xf32>
    %cst_86 = arith.constant 0.000000e+00 : f32
    %141 = vector.shape_cast %115 : vector<1x1024xi1> to vector<1x1024xi1>
    %142 = vector.broadcast %141 : vector<1x1024xi1> to vector<8x1024xi1>
    %143 = vector.broadcast %cst_86 : f32 to vector<8x1024xf32>
    %144 = arith.select %142, %140, %143 : vector<8x1024xi1>, vector<8x1024xf32>
    %c0_87 = arith.constant 0 : index
    %c160_88 = arith.constant 160 : index
    %145 = vector.load %arg13[%c0_87, %c160_88] : memref<8x1280xf32, #tpu.memory_space<vmem>>, vector<8x1024xf32>
    %c0_89 = arith.constant 0 : index
    %c161_90 = arith.constant 161 : index
    %146 = vector.load %arg13[%c0_89, %c161_90] : memref<8x1280xf32, #tpu.memory_space<vmem>>, vector<8x1024xf32>
    %cst_91 = arith.constant 0.000000e+00 : f32
    %147 = vector.shape_cast %117 : vector<1x1024xi1> to vector<1x1024xi1>
    %148 = vector.broadcast %147 : vector<1x1024xi1> to vector<8x1024xi1>
    %149 = vector.broadcast %cst_91 : f32 to vector<8x1024xf32>
    %150 = arith.select %148, %146, %149 : vector<8x1024xi1>, vector<8x1024xf32>
    %151 = tpu.concatenate %122, %123, %128, %133, %134, %139, %144, %145, %150 in 0 : vector<8x1024xf32>, vector<8x1024xf32>, vector<8x1024xf32>, vector<8x1024xf32>, vector<8x1024xf32>, vector<8x1024xf32>, vector<8x1024xf32>, vector<8x1024xf32>, vector<8x1024xf32> -> vector<72x1024xf32>
    %cst_92 = arith.constant dense<0.000000e+00> : vector<8x1024xf32>
    %152 = tpu.matmul %94, %151, %cst_92 {dimension_numbers = #tpu.dot_dimension_numbers<[1], [0], [0], [1], [0, 0, 1, 1], [], []>} : vector<8x72xf32>, vector<72x1024xf32>, vector<8x1024xf32> -> vector<8x1024xf32>
    %153 = vector.broadcast %95 : vector<8x1xf32> to vector<8x1024xf32>
    %154 = arith.addf %152, %153 : vector<8x1024xf32>
    %cst_93 = arith.constant 0.000000e+00 : f32
    %155 = vector.broadcast %cst_93 : f32 to vector<8x1024xf32>
    %156 = arith.maximumf %154, %155 : vector<8x1024xf32>
    %cst_94 = arith.constant 6.000000e+00 : f32
    %157 = vector.broadcast %cst_94 : f32 to vector<8x1024xf32>
    %158 = arith.minimumf %156, %157 : vector<8x1024xf32>
    %c0_95 = arith.constant 0 : index
    %c0_96 = arith.constant 0 : index
    %c0_97 = arith.constant 0 : index
    %159 = vector.load %arg12[%c0_95, %c0_96, %c0_97] : memref<1x8x1024xf32, #tpu.memory_space<vmem>>, vector<1x8x1024xf32>
    %160 = vector.shape_cast %159 : vector<1x8x1024xf32> to vector<8x1024xf32>
    %161 = vector.shape_cast %158 : vector<8x1024xf32> to vector<1x8x1024xf32>
    tpu.vector_store %arg12[%c0_95, %c0_96, %c0_97], %161 {strides = array<i32>} : memref<1x8x1024xf32, #tpu.memory_space<vmem>>, vector<1x8x1024xf32>,
    return
  }
  func.func @transform_0(%arg0: i32) -> (i32, i32, i32) {
    %c0_i32 = arith.constant 0 : i32
    %c0_i32_0 = arith.constant 0 : i32
    %c0_i32_1 = arith.constant 0 : i32
    return %arg0, %c0_i32, %c0_i32_0 : i32, i32, i32
  }
  func.func @transform_1(%arg0: i32) -> (i32, i32, i32) {
    %c0_i32 = arith.constant 0 : i32
    %c0_i32_0 = arith.constant 0 : i32
    %c0_i32_1 = arith.constant 0 : i32
    return %arg0, %c0_i32, %c0_i32_0 : i32, i32, i32
  }
  func.func @transform_2(%arg0: i32) -> (i32, i32) {
    %c0_i32 = arith.constant 0 : i32
    %c0_i32_0 = arith.constant 0 : i32
    %c0_i32_1 = arith.constant 0 : i32
    return %c0_i32, %c0_i32_0 : i32, i32
  }
  func.func @transform_3(%arg0: i32) -> (i32, i32) {
    %c0_i32 = arith.constant 0 : i32
    %c0_i32_0 = arith.constant 0 : i32
    %c0_i32_1 = arith.constant 0 : i32
    return %c0_i32, %c0_i32_0 : i32, i32
  }
  func.func @transform_4(%arg0: i32) -> (i32, i32) {
    %c0_i32 = arith.constant 0 : i32
    %c0_i32_0 = arith.constant 0 : i32
    %c0_i32_1 = arith.constant 0 : i32
    return %c0_i32, %c0_i32_0 : i32, i32
  }
  func.func @transform_5(%arg0: i32) -> (i32, i32) {
    %c0_i32 = arith.constant 0 : i32
    %c0_i32_0 = arith.constant 0 : i32
    %c0_i32_1 = arith.constant 0 : i32
    return %c0_i32, %c0_i32_0 : i32, i32
  }
  func.func @transform_6(%arg0: i32) -> (i32, i32) {
    %c0_i32 = arith.constant 0 : i32
    %c0_i32_0 = arith.constant 0 : i32
    %c0_i32_1 = arith.constant 0 : i32
    return %c0_i32, %c0_i32_0 : i32, i32
  }
  func.func @transform_7(%arg0: i32) -> (i32, i32) {
    %c0_i32 = arith.constant 0 : i32
    %c0_i32_0 = arith.constant 0 : i32
    %c0_i32_1 = arith.constant 0 : i32
    return %c0_i32, %c0_i32_0 : i32, i32
  }
  func.func @transform_8(%arg0: i32) -> (i32, i32) {
    %c0_i32 = arith.constant 0 : i32
    %c0_i32_0 = arith.constant 0 : i32
    %c0_i32_1 = arith.constant 0 : i32
    return %c0_i32, %c0_i32_0 : i32, i32
  }
  func.func @transform_9(%arg0: i32) -> (i32, i32) {
    %c0_i32 = arith.constant 0 : i32
    %c0_i32_0 = arith.constant 0 : i32
    %c0_i32_1 = arith.constant 0 : i32
    return %c0_i32, %c0_i32_0 : i32, i32
  }
  func.func @transform_10(%arg0: i32) -> (i32, i32) {
    %c0_i32 = arith.constant 0 : i32
    %c0_i32_0 = arith.constant 0 : i32
    %c0_i32_1 = arith.constant 0 : i32
    return %c0_i32, %c0_i32_0 : i32, i32
  }
  func.func @transform_11(%arg0: i32) -> (i32, i32, i32) {
    %c0_i32 = arith.constant 0 : i32
    %c0_i32_0 = arith.constant 0 : i32
    %c0_i32_1 = arith.constant 0 : i32
    return %arg0, %c0_i32, %c0_i32_0 : i32, i32, i32
  }
}

</mosaic_0001>

<llo_original>
// kernel: up_sample_forward.2
$region0: #{up_sample_forward.2}
  #allocation0 [shape = 'u32[]', space=smem, size = 0x4, offset = 0x4, fixed_abs, tag = 'smem constant byte address 0x4 - core index']
  #allocation1 [shape = 'u32[72,128]{1,0:T(1,128)}', space=vmem, size = 0x9000, scoped, tag = 'internal scratch']
  %s0 = inlined_call_operand.vmem [shape: f32[2,8,256], index: 0, kind: input, shape index: {}]
  %s1 = inlined_call_operand.vmem [shape: f32[4,8], index: 1, kind: input, shape index: {}]
  %s2 = inlined_call_operand.vmem [shape: f32[4,1], index: 2, kind: input, shape index: {}]
  %s3 = inlined_call_operand.vmem [shape: f32[20,4], index: 3, kind: input, shape index: {}]
  %s4 = inlined_call_operand.vmem [shape: f32[20,1], index: 4, kind: input, shape index: {}]
  %s5 = inlined_call_operand.vmem [shape: f32[4,1], index: 5, kind: input, shape index: {}]
  %s6 = inlined_call_operand.vmem [shape: f32[2,2,2,8,256], index: 6, kind: output, shape index: {}]
  %s7 = sld [smem:[#allocation0]]
  $region57: #{up_sample_forward.2} parent=0
    _
  %s9 = ssub.s32 1, %s7
  %s10 = scalar_select 0, %s9, %s7
  loop: start=0, step=1, limit=4
  $region2: #{up_sample_forward.2} parent=0 // loop_pre_header
    _
  $region3: #{up_sample_forward.2} parent=0 // loop_header
    %s12 = sphi 0, %s16
    %p13 = scmp.ge.s32.totalorder %s12, 4
    %s22 = sphi 0, %s24
    %s25 = sphi 0, %s22
    %s26 = sphi 0, %s25
    %s42 = sphi 0, %s26
    %s46 = sphi 0, %s46
    %s48 = sphi 0, %s46
    %s49 = sphi 0, %s48
    %s63 = sphi 0, %s49
    %s67 = sphi 0, %s67
    %s69 = sphi 0, %s67
    %s70 = sphi 0, %s69
    %s84 = sphi 0, %s70
    %s88 = sphi 0, %s88
    %s90 = sphi 0, %s88
    %s91 = sphi 0, %s90
    %s105 = sphi 0, %s91
    %s109 = sphi 0, %s109
    %s111 = sphi 0, %s109
    %s112 = sphi 0, %s111
    %s126 = sphi 0, %s112
    %s130 = sphi 0, %s130
    %s132 = sphi 0, %s130
    %s133 = sphi 0, %s132
    %s147 = sphi 0, %s133
    %s153 = sphi 0, %s155
    %s156 = sphi 0, %s153
    %s157 = sphi 0, %s156
    %s173 = sphi 0, %s157
  $region4: #{up_sample_forward.2} parent=0 // loop_header_branch
    %15 = sbr.rel (%p13) target = $region8
  $region5: #{up_sample_forward.2} parent=0 // loop_body
    %s17 = ssub.s32 %s12, 1
    %s18 = ssub.s32 %s12, 2
    %s19 = sadd.s32 %s12, 1
    %s20 = ssub.s32 %s12, %s19
    %p21 = scmp.eq.s32.totalorder %s20, 0
    %s23 = sadd.s32 %s22, 1
    %s24 = scalar_select %p21, %s22, %s23
    %p27 = pneg %p21
    %p28 = scmp.eq.s32.totalorder %s12, 1
    %p29 = por %p27, %p28
    %p30 = scmp.ne.s32.totalorder %s22, %s25
    %p31 = scmp.eq.s32.totalorder %s12, 0
    %p32 = por %p30, %p31
    %p33 = scmp.ne.s32.totalorder %s22, %s25
    %p34 = scmp.eq.s32.totalorder %s17, 1
    %p35 = por %p33, %p34
    %p36 = scmp.ne.s32.totalorder %s25, %s26
    %p37 = scmp.eq.s32.totalorder %s17, 0
    %p38 = por %p36, %p37
    %p39 = scmp.ne.s32.totalorder %s25, %s26
    %p40 = scmp.eq.s32.totalorder %s18, 1
    %p41 = por %p39, %p40
    %p43 = scmp.ne.s32.totalorder %s26, %s42
    %p44 = scmp.eq.s32.totalorder %s18, 0
    %p45 = por %p43, %p44
    %s47 = sadd.s32 %s46, 1
    %p50 = scmp.eq.s32.totalorder %s12, 1
    %p51 = scmp.ne.s32.totalorder %s46, %s48
    %p52 = scmp.eq.s32.totalorder %s12, 0
    %p53 = por %p51, %p52
    %p54 = scmp.ne.s32.totalorder %s46, %s48
    %p55 = scmp.eq.s32.totalorder %s17, 1
    %p56 = por %p54, %p55
    %p57 = scmp.ne.s32.totalorder %s48, %s49
    %p58 = scmp.eq.s32.totalorder %s17, 0
    %p59 = por %p57, %p58
    %p60 = scmp.ne.s32.totalorder %s48, %s49
    %p61 = scmp.eq.s32.totalorder %s18, 1
    %p62 = por %p60, %p61
    %p64 = scmp.ne.s32.totalorder %s49, %s63
    %p65 = scmp.eq.s32.totalorder %s18, 0
    %p66 = por %p64, %p65
    %s68 = sadd.s32 %s67, 1
    %p71 = scmp.eq.s32.totalorder %s12, 1
    %p72 = scmp.ne.s32.totalorder %s67, %s69
    %p73 = scmp.eq.s32.totalorder %s12, 0
    %p74 = por %p72, %p73
    %p75 = scmp.ne.s32.totalorder %s67, %s69
    %p76 = scmp.eq.s32.totalorder %s17, 1
    %p77 = por %p75, %p76
    %p78 = scmp.ne.s32.totalorder %s69, %s70
    %p79 = scmp.eq.s32.totalorder %s17, 0
    %p80 = por %p78, %p79
    %p81 = scmp.ne.s32.totalorder %s69, %s70
    %p82 = scmp.eq.s32.totalorder %s18, 1
    %p83 = por %p81, %p82
    %p85 = scmp.ne.s32.totalorder %s70, %s84
    %p86 = scmp.eq.s32.totalorder %s18, 0
    %p87 = por %p85, %p86
    %s89 = sadd.s32 %s88, 1
    %p92 = scmp.eq.s32.totalorder %s12, 1
    %p93 = scmp.ne.s32.totalorder %s88, %s90
    %p94 = scmp.eq.s32.totalorder %s12, 0
    %p95 = por %p93, %p94
    %p96 = scmp.ne.s32.totalorder %s88, %s90
    %p97 = scmp.eq.s32.totalorder %s17, 1
    %p98 = por %p96, %p97
    %p99 = scmp.ne.s32.totalorder %s90, %s91
    %p100 = scmp.eq.s32.totalorder %s17, 0
    %p101 = por %p99, %p100
    %p102 = scmp.ne.s32.totalorder %s90, %s91
    %p103 = scmp.eq.s32.totalorder %s18, 1
    %p104 = por %p102, %p103
    %p106 = scmp.ne.s32.totalorder %s91, %s105
    %p107 = scmp.eq.s32.totalorder %s18, 0
    %p108 = por %p106, %p107
    %s110 = sadd.s32 %s109, 1
    %p113 = scmp.eq.s32.totalorder %s12, 1
    %p114 = scmp.ne.s32.totalorder %s109, %s111
    %p115 = scmp.eq.s32.totalorder %s12, 0
    %p116 = por %p114, %p115
    %p117 = scmp.ne.s32.totalorder %s109, %s111
    %p118 = scmp.eq.s32.totalorder %s17, 1
    %p119 = por %p117, %p118
    %p120 = scmp.ne.s32.totalorder %s111, %s112
    %p121 = scmp.eq.s32.totalorder %s17, 0
    %p122 = por %p120, %p121
    %p123 = scmp.ne.s32.totalorder %s111, %s112
    %p124 = scmp.eq.s32.totalorder %s18, 1
    %p125 = por %p123, %p124
    %p127 = scmp.ne.s32.totalorder %s112, %s126
    %p128 = scmp.eq.s32.totalorder %s18, 0
    %p129 = por %p127, %p128
    %s131 = sadd.s32 %s130, 1
    %p134 = scmp.eq.s32.totalorder %s12, 1
    %p135 = scmp.ne.s32.totalorder %s130, %s132
    %p136 = scmp.eq.s32.totalorder %s12, 0
    %p137 = por %p135, %p136
    %p138 = scmp.ne.s32.totalorder %s130, %s132
    %p139 = scmp.eq.s32.totalorder %s17, 1
    %p140 = por %p138, %p139
    %p141 = scmp.ne.s32.totalorder %s132, %s133
    %p142 = scmp.eq.s32.totalorder %s17, 0
    %p143 = por %p141, %p142
    %p144 = scmp.ne.s32.totalorder %s132, %s133
    %p145 = scmp.eq.s32.totalorder %s18, 1
    %p146 = por %p144, %p145
    %p148 = scmp.ne.s32.totalorder %s133, %s147
    %p149 = scmp.eq.s32.totalorder %s18, 0
    %p150 = por %p148, %p149
    %s151 = ssub.s32 %s12, %s19
    %p152 = scmp.eq.s32.totalorder %s151, 0
    %s154 = sadd.s32 %s153, 1
    %s155 = scalar_select %p152, %s153, %s154
    %p158 = pneg %p152
    %p159 = scmp.eq.s32.totalorder %s12, 1
    %p160 = por %p158, %p159
    %p161 = scmp.ne.s32.totalorder %s153, %s156
    %p162 = scmp.eq.s32.totalorder %s12, 0
    %p163 = por %p161, %p162
    %p164 = scmp.ne.s32.totalorder %s153, %s156
    %p165 = scmp.eq.s32.totalorder %s17, 1
    %p166 = por %p164, %p165
    %p167 = scmp.ne.s32.totalorder %s156, %s157
    %p168 = scmp.eq.s32.totalorder %s17, 0
    %p169 = por %p167, %p168
    %p170 = scmp.ne.s32.totalorder %s156, %s157
    %p171 = scmp.eq.s32.totalorder %s18, 1
    %p172 = por %p170, %p171
    %p174 = scmp.ne.s32.totalorder %s157, %s173
    %p175 = scmp.eq.s32.totalorder %s18, 0
    %p176 = por %p174, %p175
    %p177 = scmp.le.s32.totalorder 1, %s12
    %p178 = scmp.lt.s32.totalorder %s12, 3
    %p179 = pnand %p177, %p178
    %p180 = pneg %p179
    // Predicated region
    $region9: #{up_sample_forward.2} parent=5 // pred_check
      _
    $region10: #{up_sample_forward.2} parent=5 // pred_check_branch
      %182 = sbr.rel (%p179) target = $region12
    $region11: #{up_sample_forward.2} parent=5 // pred_region
      %s183 = ssub.s32 %s12, 1
      // Predicated region
      $region13: #{up_sample_forward.2} parent=11 // pred_check
        %p184 = pneg %p59
      $region14: #{up_sample_forward.2} parent=11 // pred_check_branch
        %186 = sbr.rel (%p184) target = $region16
      $region15: #{up_sample_forward.2} parent=11 // pred_region
        _
      $region16: #{up_sample_forward.2} parent=11 // pred_fallthru
        _
      // Predicated region
      $region17: #{up_sample_forward.2} parent=11 // pred_check
        %p187 = pneg %p80
      $region18: #{up_sample_forward.2} parent=11 // pred_check_branch
        %189 = sbr.rel (%p187) target = $region20
      $region19: #{up_sample_forward.2} parent=11 // pred_region
        _
      $region20: #{up_sample_forward.2} parent=11 // pred_fallthru
        _
      // Predicated region
      $region21: #{up_sample_forward.2} parent=11 // pred_check
        %p190 = pneg %p101
      $region22: #{up_sample_forward.2} parent=11 // pred_check_branch
        %192 = sbr.rel (%p190) target = $region24
      $region23: #{up_sample_forward.2} parent=11 // pred_region
        _
      $region24: #{up_sample_forward.2} parent=11 // pred_fallthru
        _
      // Predicated region
      $region25: #{up_sample_forward.2} parent=11 // pred_check
        %p193 = pneg %p122
      $region26: #{up_sample_forward.2} parent=11 // pred_check_branch
        %195 = sbr.rel (%p193) target = $region28
      $region27: #{up_sample_forward.2} parent=11 // pred_region
        _
      $region28: #{up_sample_forward.2} parent=11 // pred_fallthru
        _
      // Predicated region
      $region29: #{up_sample_forward.2} parent=11 // pred_check
        %p196 = pneg %p143
      $region30: #{up_sample_forward.2} parent=11 // pred_check_branch
        %198 = sbr.rel (%p196) target = $region32
      $region31: #{up_sample_forward.2} parent=11 // pred_region
        _
      $region32: #{up_sample_forward.2} parent=11 // pred_fallthru
        _
    $region12: #{up_sample_forward.2} parent=5 // pred_fallthru
      _
    %p199 = scmp.lt.s32.totalorder %s12, 2
    // Predicated region
    $region33: #{up_sample_forward.2} parent=5 // pred_check
      %p200 = pneg %p199
    $region34: #{up_sample_forward.2} parent=5 // pred_check_branch
      %202 = sbr.rel (%p200) target = $region36
    $region35: #{up_sample_forward.2} parent=5 // pred_region
      // Predicated region
      $region37: #{up_sample_forward.2} parent=35 // pred_check
        %p203 = pneg %p32
      $region38: #{up_sample_forward.2} parent=35 // pred_check_branch
        %205 = sbr.rel (%p203) target = $region40
      $region39: #{up_sample_forward.2} parent=35 // pred_region
        %p206 = scmp.lt.s32.totalorder %s12, 1
        %s207 = scalar_select %p206, %s12, 1
        %s208 = smul.addr %s207, 2
        %s209 = smul.addr %s208, 8
        %s210 = scalar_lea.vmem %s0, %s209
      $region40: #{up_sample_forward.2} parent=35 // pred_fallthru
        _
    $region36: #{up_sample_forward.2} parent=5 // pred_fallthru
      _
    %p211 = scmp.le.s32.totalorder 1, %s12
    %p212 = scmp.lt.s32.totalorder %s12, 3
    %p213 = pnand %p211, %p212
    %p214 = pneg %p213
    // Predicated region
    $region41: #{up_sample_forward.2} parent=5 // pred_check
      _
    $region42: #{up_sample_forward.2} parent=5 // pred_check_branch
      %216 = sbr.rel (%p213) target = $region44
    $region43: #{up_sample_forward.2} parent=5 // pred_region
      %s217 = ssub.s32 %s12, 1
      %p218 = scmp.lt.s32.totalorder %s17, 1
      %s219 = scalar_select %p218, %s17, 1
      %s220 = smul.addr %s219, 2
      %s221 = smul.addr %s220, 8
      %s222 = scalar_lea.vmem %s0, %s221
      %p223 = pneg %p38
      %p224 = pneg %p35
      %p225 = pneg %p59
      %p226 = pneg %p56
      %p227 = pneg %p80
      %p228 = pneg %p77
      %p229 = pneg %p101
      %p230 = pneg %p98
      %p231 = pneg %p122
      %p232 = pneg %p119
      %p233 = pneg %p143
      %p234 = pneg %p140
      %p235 = pneg %p169
      %p236 = pneg %p166
      %p237 = scmp.lt.s32.totalorder %s17, 1
      %s238 = scalar_select %p237, %s17, 1
      %s239 = smul.addr %s238, 8
      %s240 = smul.addr %s239, 8
      %s241 = scalar_lea.vmem %s6, %s240
      %p242 = scmp.lt.s32.totalorder %s17, 1
      %s243 = scalar_select %p242, %s17, 1
      %s244 = smul.addr %s243, 2
      %s245 = smul.addr %s244, 8
      %s246 = scalar_lea.vmem %s0, %s245
      %p247 = scmp.lt.s32.totalorder %s17, 1
      %s248 = scalar_select %p247, %s17, 1
      %s249 = smul.addr %s248, 8
      %s250 = smul.addr %s249, 8
      %s251 = scalar_lea.vmem %s6, %s250
      %v252 = vld [vmem:[%s246] sm:$0xff]
      %v253 = vld [vmem:[%s246 + $0x8] sm:$0xff]
      %v254 = vld [vmem:[%s1] sm:$0xf]
      %v255 = vld [vmem:[%s2] sm:$0xf]
      %257 = vset.pattern.permute.xlu0 0
      %258 = vperm.xlu0 %257, %v255
      %v259 = vpop.permute.xlu0 %258
      %vm261 = vcmask 64512
      %v263 = vsel %vm261, %v254, 0
      %265 = vmatpush.msra.mxu0 0.0
      %266 = vmatpush.msra.mxu0 0.0
      %267 = vmatpush.msra.mxu0 0.0
      %268 = vmatpush.msra.mxu0 0.0
      %269 = vmatpush.msra.mxu0 0.0
      %270 = vmatpush.msra.mxu0 0.0
      %271 = vmatpush.msra.mxu0 0.0
      %272 = vmatpush.msra.mxu0 0.0
      %273 = vmatpush.msra.mxu0 0.0
      %274 = vmatpush.msra.mxu0 0.0
      %275 = vmatpush.msra.mxu0 0.0
      %276 = vmatpush.msra.mxu0 0.0
      %277 = vmatpush.msra.mxu0 0.0
      %278 = vmatpush.msra.mxu0 0.0
      %279 = vmatpush.msra.mxu0 0.0
      %280 = vmatpush.msra.mxu0 %v252
      %281 = vmatmul.f32.gmra.mxu0 %v263
      %v282 = vpop.f32.mrf.mxu0
      %v283 = vadd.f32 %v259, %v282
      %284 = vdwg.mxu0
      %285 = vmatpush.msra.mxu0 0.0
      %286 = vmatpush.msra.mxu0 0.0
      %287 = vmatpush.msra.mxu0 0.0
      %288 = vmatpush.msra.mxu0 0.0
      %289 = vmatpush.msra.mxu0 0.0
      %290 = vmatpush.msra.mxu0 0.0
      %291 = vmatpush.msra.mxu0 0.0
      %292 = vmatpush.msra.mxu0 0.0
      %293 = vmatpush.msra.mxu0 0.0
      %294 = vmatpush.msra.mxu0 0.0
      %295 = vmatpush.msra.mxu0 0.0
      %296 = vmatpush.msra.mxu0 0.0
      %297 = vmatpush.msra.mxu0 0.0
      %298 = vmatpush.msra.mxu0 0.0
      %299 = vmatpush.msra.mxu0 0.0
      %300 = vmatpush.msra.mxu0 %v253
      %301 = vmatmul.f32.gmra.mxu0 %v263
      %v302 = vpop.f32.mrf.mxu0
      %v303 = vadd.f32 %v259, %v302
      %304 = vdwg.mxu0
      %v305 = vmax.f32 %v283, 0.0
      %v306 = vmax.f32 %v303, 0.0
      %v307 = vmin.f32 %v305, 6.0
      %v308 = vmin.f32 %v306, 6.0
      %v309 = vld [vmem:[%s3] sm:$0xff]
      %v310 = vld [vmem:[%s3 + $0x8] sm:$0xff]
      %v311 = vld [vmem:[%s3 + $0x10] sm:$0xf]
      %v312 = vld [vmem:[%s4] sm:$0xff]
      %v313 = vld [vmem:[%s4 + $0x8] sm:$0xff]
      %v314 = vld [vmem:[%s4 + $0x10] sm:$0xf]
      %316 = vset.pattern.permute.xlu0 0
      %317 = vperm.xlu0 %316, %v312
      %v318 = vpop.permute.xlu0 %317
      %321 = vset.pattern.permute.xlu0 0
      %322 = vperm.xlu0 %321, %v313
      %v323 = vpop.permute.xlu0 %322
      %326 = vset.pattern.permute.xlu0 0
      %327 = vperm.xlu0 %326, %v314
      %v328 = vpop.permute.xlu0 %327
      %vm330 = vcmask 31744
      %v332 = vsel %vm330, %v309, 0
      %v335 = vsel %vm330, %v310, 0
      %v338 = vsel %vm330, %v311, 0
      %vm340 = vcmask 1043456
      %v342 = vsel %vm340, %v307, 0
      %v345 = vsel %vm340, %v308, 0
      %347 = vmatpush.msra.mxu0 0.0
      %348 = vmatpush.msra.mxu0 0.0
      %349 = vmatpush.msra.mxu0 0.0
      %350 = vmatpush.msra.mxu0 0.0
      %351 = vmatpush.msra.mxu0 0.0
      %352 = vmatpush.msra.mxu0 0.0
      %353 = vmatpush.msra.mxu0 0.0
      %354 = vmatpush.msra.mxu0 0.0
      %355 = vmatpush.msra.mxu0 0.0
      %356 = vmatpush.msra.mxu0 0.0
      %357 = vmatpush.msra.mxu0 0.0
      %358 = vmatpush.msra.mxu0 0.0
      %359 = vmatpush.msra.mxu0 0.0
      %360 = vmatpush.msra.mxu0 0.0
      %361 = vmatpush.msra.mxu0 0.0
      %362 = vmatpush.msra.mxu0 %v342
      %363 = vmatmul.f32.gmra.mxu0 %v332
      %v364 = vpop.f32.mrf.mxu0
      %v365 = vadd.f32 %v318, %v364
      %366 = vmatmul.f32.gmra.mxu0 %v335
      %v367 = vpop.f32.mrf.mxu0
      %v368 = vadd.f32 %v323, %v367
      %369 = vmatmul.f32.gmra.mxu0 %v338
      %v370 = vpop.f32.mrf.mxu0
      %v371 = vadd.f32 %v328, %v370
      %372 = vdwg.mxu0
      %373 = vmatpush.msra.mxu0 0.0
      %374 = vmatpush.msra.mxu0 0.0
      %375 = vmatpush.msra.mxu0 0.0
      %376 = vmatpush.msra.mxu0 0.0
      %377 = vmatpush.msra.mxu0 0.0
      %378 = vmatpush.msra.mxu0 0.0
      %379 = vmatpush.msra.mxu0 0.0
      %380 = vmatpush.msra.mxu0 0.0
      %381 = vmatpush.msra.mxu0 0.0
      %382 = vmatpush.msra.mxu0 0.0
      %383 = vmatpush.msra.mxu0 0.0
      %384 = vmatpush.msra.mxu0 0.0
      %385 = vmatpush.msra.mxu0 0.0
      %386 = vmatpush.msra.mxu0 0.0
      %387 = vmatpush.msra.mxu0 0.0
      %388 = vmatpush.msra.mxu0 %v345
      %389 = vmatmul.f32.gmra.mxu0 %v332
      %v390 = vpop.f32.mrf.mxu0
      %v391 = vadd.f32 %v318, %v390
      %392 = vmatmul.f32.gmra.mxu0 %v335
      %v393 = vpop.f32.mrf.mxu0
      %v394 = vadd.f32 %v323, %v393
      %395 = vmatmul.f32.gmra.mxu0 %v338
      %v396 = vpop.f32.mrf.mxu0
      %v397 = vadd.f32 %v328, %v396
      %398 = vdwg.mxu0
      %v399 = vmax.f32 %v365, 0.0
      %v400 = vmax.f32 %v391, 0.0
      %v401 = vmax.f32 %v368, 0.0
      %v402 = vmax.f32 %v394, 0.0
      %v403 = vmax.f32 %v371, 0.0
      %v404 = vmax.f32 %v397, 0.0
      %v405 = vmin.f32 %v399, 6.0
      %v406 = vmin.f32 %v400, 6.0
      %v407 = vmin.f32 %v401, 6.0
      %v408 = vmin.f32 %v402, 6.0
      %v409 = vmin.f32 %v403, 6.0
      %v410 = vmin.f32 %v404, 6.0
      %v411 = vlaneseq
      %v412 = vand.u32 %v411, 127
      %v413 = vadd.s32 %v412, 128
      %vm414 = vcmp.lt.s32.totalorder %v412, 0
      %v415 = vsub.s32 0, %v412
      %v416 = vsel %vm414, %v415, %v412
      %v417 = vshrl.u32 %v416, 4
      %v418 = vand.u32 %v416, 15
      %v419 = vsub.s32 0, %v418
      %v420 = vsel %vm414, %v419, %v418
      %vm421 = vcmp.lt.s32.totalorder %v413, 0
      %v422 = vsub.s32 0, %v413
      %v423 = vsel %vm421, %v422, %v413
      %v424 = vshrl.u32 %v423, 4
      %v425 = vand.u32 %v423, 15
      %v426 = vsub.s32 0, %v425
      %v427 = vsel %vm421, %v426, %v425
      %vm428 = vcmp.ne.s32.totalorder %v420, 0
      %vm429 = vcmp.ne.s32.totalorder %v427, 0
      %vm430 = vcmp.lt.s32.totalorder %v420, 0
      %vm431 = vcmp.lt.s32.totalorder %v427, 0
      %vm432 = vmand %vm430, %vm428
      %vm433 = vmand %vm431, %vm429
      %v434 = vadd.s32 %v420, 16
      %v435 = vadd.s32 %v427, 16
      %v436 = vsel %vm432, %v434, %v420
      %v437 = vsel %vm433, %v435, %v427
      %vm438 = vcmp.eq.s32.totalorder %v436, 15
      %vm439 = vcmp.eq.s32.totalorder %v437, 15
      %vm440 = vcmp.ge.s32.totalorder %v412, 240
      %vm441 = vcmp.ge.s32.totalorder %v413, 240
      %v442 = vld [vmem:[%s5] sm:$0xf]
      %v445 = vrot.slane %v409, 4
      %v446 = vrot.slane %v410, 4
      %v449 = vsel %vm340, %v405, %v445
      %v450 = vsel %vm340, %v406, %v446
      %451 = vst [vmem:[%s251] sm:$0xff] %v449
      %452 = vst [vmem:[%s251 + $0x8] sm:$0xff] %v450
      %v453 = vsel %vm438, 1, 0
      %v454 = vsel %vm439, 1, 0
      %vm455 = vcmp.eq.s32.totalorder %v453, 1
      %vm456 = vcmp.eq.s32.totalorder %v454, 1
      %458 = vset.pattern.permute.xlu0 0
      %459 = vperm.xlu0 %458, %v442
      %v460 = vpop.permute.xlu0 %459
      %v462 = vsel %vm455, 0.0, %v460
      %v463 = vsel %vm456, 0.0, %v460
      %v466 = vrot.slane %v405, 4
      %v467 = vrot.slane %v406, 4
      %v472 = vrot.slane %v462, 4
      %v473 = vrot.slane %v463, 4
      %v476 = vsel %vm340, %v466, %v472
      %v477 = vsel %vm340, %v467, %v473
      %s478 = scalar_lea.vmem %s251, 16
      %479 = vst [vmem:[%s478] sm:$0xff] %v476
      %480 = vst [vmem:[%s478 + $0x8] sm:$0xff] %v477
      %v481 = vsel %vm440, 1, 0
      %v482 = vsel %vm441, 1, 0
      %vm483 = vcmp.eq.s32.totalorder %v481, 1
      %vm484 = vcmp.eq.s32.totalorder %v482, 1
      %v485 = vsel %vm483, 0.0, %v460
      %v486 = vsel %vm484, 0.0, %v460
      %v489 = vrot.slane %v485, 4
      %v490 = vrot.slane %v486, 4
      %v493 = vsel %vm340, %v407, %v489
      %v494 = vsel %vm340, %v408, %v490
      %s495 = scalar_lea.vmem %s251, 32
      %496 = vst [vmem:[%s495] sm:$0xff] %v493
      %497 = vst [vmem:[%s495 + $0x8] sm:$0xff] %v494
      %vm498 = vmor %vm440, %vm438
      %vm499 = vmor %vm441, %vm439
      %v500 = vsel %vm498, 1, 0
      %v501 = vsel %vm499, 1, 0
      %vm502 = vcmp.eq.s32.totalorder %v500, 1
      %vm503 = vcmp.eq.s32.totalorder %v501, 1
      %v504 = vsel %vm502, 0.0, %v460
      %v505 = vsel %vm503, 0.0, %v460
      %v508 = vrot.slane %v407, 4
      %v509 = vrot.slane %v408, 4
      %v514 = vrot.slane %v504, 4
      %v515 = vrot.slane %v505, 4
      %v518 = vsel %vm340, %v508, %v514
      %v519 = vsel %vm340, %v509, %v515
      %s520 = scalar_lea.vmem %s251, 48
      %521 = vst [vmem:[%s520] sm:$0xff] %v518
      %522 = vst [vmem:[%s520 + $0x8] sm:$0xff] %v519
      %p523 = scmp.lt.s32.totalorder %s17, 1
      %s524 = scalar_select %p523, %s17, 1
      %s525 = smul.addr %s524, 8
      %s526 = smul.addr %s525, 8
      %s527 = scalar_lea.vmem %s6, %s526
      // Predicated region
      $region45: #{up_sample_forward.2} parent=43 // pred_check
        %p528 = pneg %p166
      $region46: #{up_sample_forward.2} parent=43 // pred_check_branch
        %530 = sbr.rel (%p528) target = $region48
      $region47: #{up_sample_forward.2} parent=43 // pred_region
        _
      $region48: #{up_sample_forward.2} parent=43 // pred_fallthru
        _
    $region44: #{up_sample_forward.2} parent=5 // pred_fallthru
      _
    %p531 = scmp.le.s32.totalorder 2, %s12
    // Predicated region
    $region49: #{up_sample_forward.2} parent=5 // pred_check
      %p532 = pneg %p531
    $region50: #{up_sample_forward.2} parent=5 // pred_check_branch
      %534 = sbr.rel (%p532) target = $region52
    $region51: #{up_sample_forward.2} parent=5 // pred_region
      %s535 = ssub.s32 %s12, 2
      // Predicated region
      $region53: #{up_sample_forward.2} parent=51 // pred_check
        %p536 = pneg %p172
      $region54: #{up_sample_forward.2} parent=51 // pred_check_branch
        %538 = sbr.rel (%p536) target = $region56
      $region55: #{up_sample_forward.2} parent=51 // pred_region
        %p539 = scmp.lt.s32.totalorder %s18, 1
        %s540 = scalar_select %p539, %s18, 1
        %s541 = smul.addr %s540, 8
        %s542 = smul.addr %s541, 8
        %s543 = scalar_lea.vmem %s6, %s542
      $region56: #{up_sample_forward.2} parent=51 // pred_fallthru
        _
    $region52: #{up_sample_forward.2} parent=5 // pred_fallthru
      _
  $region6: #{up_sample_forward.2} parent=0 // loop_footer
    %s16 = sadd.s32 1, %s12
  $region7: #{up_sample_forward.2} parent=0 // loop_footer_branch
    %11 = sbr.rel target = $region3
  $region8: #{up_sample_forward.2} parent=0 // loop_exit
    _

// kernel: up_sample_forward.3
$region0: #{up_sample_forward.3}
  #allocation0 [shape = 'u32[]', space=smem, size = 0x4, offset = 0x4, fixed_abs, tag = 'smem constant byte address 0x4 - core index']
  #allocation1 [shape = 'u32[72,128]{1,0:T(1,128)}', space=vmem, size = 0x9000, scoped, tag = 'internal scratch']
  #allocation2 [shape = 'f32[8,1280]{1,0:T(8,128)}', space=vmem, size = 0xa000, scoped, tag = 'scratch operand']
  %s0 = inlined_call_operand.vmem [shape: f32[2,8,1024], index: 0, kind: input, shape index: {}]
  %s1 = inlined_call_operand.vmem [shape: f32[2,8,1024], index: 1, kind: input, shape index: {}]
  %s2 = inlined_call_operand.vmem [shape: f32[8,8], index: 2, kind: input, shape index: {}]
  %s3 = inlined_call_operand.vmem [shape: f32[8,8], index: 3, kind: input, shape index: {}]
  %s4 = inlined_call_operand.vmem [shape: f32[8,1], index: 4, kind: input, shape index: {}]
  %s5 = inlined_call_operand.vmem [shape: f32[8,72], index: 5, kind: input, shape index: {}]
  %s6 = inlined_call_operand.vmem [shape: f32[8,1], index: 6, kind: input, shape index: {}]
  %s7 = inlined_call_operand.vmem [shape: f32[8,8], index: 7, kind: input, shape index: {}]
  %s8 = inlined_call_operand.vmem [shape: f32[8,1], index: 8, kind: input, shape index: {}]
  %s9 = inlined_call_operand.vmem [shape: f32[8,72], index: 9, kind: input, shape index: {}]
  %s10 = inlined_call_operand.vmem [shape: f32[8,1], index: 10, kind: input, shape index: {}]
  %s11 = inlined_call_operand.vmem [shape: f32[2,8,1024], index: 11, kind: output, shape index: {}]
  %s12 = sld [smem:[#allocation0]]
  $region77: #{up_sample_forward.3} parent=0
    _
  %s14 = ssub.s32 1, %s12
  %s15 = scalar_select 0, %s14, %s12
  loop: start=0, step=1, limit=4
  $region2: #{up_sample_forward.3} parent=0 // loop_pre_header
    _
  $region3: #{up_sample_forward.3} parent=0 // loop_header
    %s17 = sphi 0, %s21
    %p18 = scmp.ge.s32.totalorder %s17, 4
    %s27 = sphi 0, %s29
    %s30 = sphi 0, %s27
    %s31 = sphi 0, %s30
    %s47 = sphi 0, %s31
    %s53 = sphi 0, %s55
    %s56 = sphi 0, %s53
    %s57 = sphi 0, %s56
    %s73 = sphi 0, %s57
    %s77 = sphi 0, %s77
    %s79 = sphi 0, %s77
    %s80 = sphi 0, %s79
    %s94 = sphi 0, %s80
    %s98 = sphi 0, %s98
    %s100 = sphi 0, %s98
    %s101 = sphi 0, %s100
    %s115 = sphi 0, %s101
    %s119 = sphi 0, %s119
    %s121 = sphi 0, %s119
    %s122 = sphi 0, %s121
    %s136 = sphi 0, %s122
    %s140 = sphi 0, %s140
    %s142 = sphi 0, %s140
    %s143 = sphi 0, %s142
    %s157 = sphi 0, %s143
    %s161 = sphi 0, %s161
    %s163 = sphi 0, %s161
    %s164 = sphi 0, %s163
    %s178 = sphi 0, %s164
    %s182 = sphi 0, %s182
    %s184 = sphi 0, %s182
    %s185 = sphi 0, %s184
    %s199 = sphi 0, %s185
    %s203 = sphi 0, %s203
    %s205 = sphi 0, %s203
    %s206 = sphi 0, %s205
    %s220 = sphi 0, %s206
    %s224 = sphi 0, %s224
    %s226 = sphi 0, %s224
    %s227 = sphi 0, %s226
    %s241 = sphi 0, %s227
    %s245 = sphi 0, %s245
    %s247 = sphi 0, %s245
    %s248 = sphi 0, %s247
    %s262 = sphi 0, %s248
    %s268 = sphi 0, %s270
    %s271 = sphi 0, %s268
    %s272 = sphi 0, %s271
    %s288 = sphi 0, %s272
  $region4: #{up_sample_forward.3} parent=0 // loop_header_branch
    %20 = sbr.rel (%p18) target = $region8
  $region5: #{up_sample_forward.3} parent=0 // loop_body
    %s22 = ssub.s32 %s17, 1
    %s23 = ssub.s32 %s17, 2
    %s24 = sadd.s32 %s17, 1
    %s25 = ssub.s32 %s17, %s24
    %p26 = scmp.eq.s32.totalorder %s25, 0
    %s28 = sadd.s32 %s27, 1
    %s29 = scalar_select %p26, %s27, %s28
    %p32 = pneg %p26
    %p33 = scmp.eq.s32.totalorder %s17, 1
    %p34 = por %p32, %p33
    %p35 = scmp.ne.s32.totalorder %s27, %s30
    %p36 = scmp.eq.s32.totalorder %s17, 0
    %p37 = por %p35, %p36
    %p38 = scmp.ne.s32.totalorder %s27, %s30
    %p39 = scmp.eq.s32.totalorder %s22, 1
    %p40 = por %p38, %p39
    %p41 = scmp.ne.s32.totalorder %s30, %s31
    %p42 = scmp.eq.s32.totalorder %s22, 0
    %p43 = por %p41, %p42
    %p44 = scmp.ne.s32.totalorder %s30, %s31
    %p45 = scmp.eq.s32.totalorder %s23, 1
    %p46 = por %p44, %p45
    %p48 = scmp.ne.s32.totalorder %s31, %s47
    %p49 = scmp.eq.s32.totalorder %s23, 0
    %p50 = por %p48, %p49
    %s51 = ssub.s32 %s17, %s24
    %p52 = scmp.eq.s32.totalorder %s51, 0
    %s54 = sadd.s32 %s53, 1
    %s55 = scalar_select %p52, %s53, %s54
    %p58 = pneg %p52
    %p59 = scmp.eq.s32.totalorder %s17, 1
    %p60 = por %p58, %p59
    %p61 = scmp.ne.s32.totalorder %s53, %s56
    %p62 = scmp.eq.s32.totalorder %s17, 0
    %p63 = por %p61, %p62
    %p64 = scmp.ne.s32.totalorder %s53, %s56
    %p65 = scmp.eq.s32.totalorder %s22, 1
    %p66 = por %p64, %p65
    %p67 = scmp.ne.s32.totalorder %s56, %s57
    %p68 = scmp.eq.s32.totalorder %s22, 0
    %p69 = por %p67, %p68
    %p70 = scmp.ne.s32.totalorder %s56, %s57
    %p71 = scmp.eq.s32.totalorder %s23, 1
    %p72 = por %p70, %p71
    %p74 = scmp.ne.s32.totalorder %s57, %s73
    %p75 = scmp.eq.s32.totalorder %s23, 0
    %p76 = por %p74, %p75
    %s78 = sadd.s32 %s77, 1
    %p81 = scmp.eq.s32.totalorder %s17, 1
    %p82 = scmp.ne.s32.totalorder %s77, %s79
    %p83 = scmp.eq.s32.totalorder %s17, 0
    %p84 = por %p82, %p83
    %p85 = scmp.ne.s32.totalorder %s77, %s79
    %p86 = scmp.eq.s32.totalorder %s22, 1
    %p87 = por %p85, %p86
    %p88 = scmp.ne.s32.totalorder %s79, %s80
    %p89 = scmp.eq.s32.totalorder %s22, 0
    %p90 = por %p88, %p89
    %p91 = scmp.ne.s32.totalorder %s79, %s80
    %p92 = scmp.eq.s32.totalorder %s23, 1
    %p93 = por %p91, %p92
    %p95 = scmp.ne.s32.totalorder %s80, %s94
    %p96 = scmp.eq.s32.totalorder %s23, 0
    %p97 = por %p95, %p96
    %s99 = sadd.s32 %s98, 1
    %p102 = scmp.eq.s32.totalorder %s17, 1
    %p103 = scmp.ne.s32.totalorder %s98, %s100
    %p104 = scmp.eq.s32.totalorder %s17, 0
    %p105 = por %p103, %p104
    %p106 = scmp.ne.s32.totalorder %s98, %s100
    %p107 = scmp.eq.s32.totalorder %s22, 1
    %p108 = por %p106, %p107
    %p109 = scmp.ne.s32.totalorder %s100, %s101
    %p110 = scmp.eq.s32.totalorder %s22, 0
    %p111 = por %p109, %p110
    %p112 = scmp.ne.s32.totalorder %s100, %s101
    %p113 = scmp.eq.s32.totalorder %s23, 1
    %p114 = por %p112, %p113
    %p116 = scmp.ne.s32.totalorder %s101, %s115
    %p117 = scmp.eq.s32.totalorder %s23, 0
    %p118 = por %p116, %p117
    %s120 = sadd.s32 %s119, 1
    %p123 = scmp.eq.s32.totalorder %s17, 1
    %p124 = scmp.ne.s32.totalorder %s119, %s121
    %p125 = scmp.eq.s32.totalorder %s17, 0
    %p126 = por %p124, %p125
    %p127 = scmp.ne.s32.totalorder %s119, %s121
    %p128 = scmp.eq.s32.totalorder %s22, 1
    %p129 = por %p127, %p128
    %p130 = scmp.ne.s32.totalorder %s121, %s122
    %p131 = scmp.eq.s32.totalorder %s22, 0
    %p132 = por %p130, %p131
    %p133 = scmp.ne.s32.totalorder %s121, %s122
    %p134 = scmp.eq.s32.totalorder %s23, 1
    %p135 = por %p133, %p134
    %p137 = scmp.ne.s32.totalorder %s122, %s136
    %p138 = scmp.eq.s32.totalorder %s23, 0
    %p139 = por %p137, %p138
    %s141 = sadd.s32 %s140, 1
    %p144 = scmp.eq.s32.totalorder %s17, 1
    %p145 = scmp.ne.s32.totalorder %s140, %s142
    %p146 = scmp.eq.s32.totalorder %s17, 0
    %p147 = por %p145, %p146
    %p148 = scmp.ne.s32.totalorder %s140, %s142
    %p149 = scmp.eq.s32.totalorder %s22, 1
    %p150 = por %p148, %p149
    %p151 = scmp.ne.s32.totalorder %s142, %s143
    %p152 = scmp.eq.s32.totalorder %s22, 0
    %p153 = por %p151, %p152
    %p154 = scmp.ne.s32.totalorder %s142, %s143
    %p155 = scmp.eq.s32.totalorder %s23, 1
    %p156 = por %p154, %p155
    %p158 = scmp.ne.s32.totalorder %s143, %s157
    %p159 = scmp.eq.s32.totalorder %s23, 0
    %p160 = por %p158, %p159
    %s162 = sadd.s32 %s161, 1
    %p165 = scmp.eq.s32.totalorder %s17, 1
    %p166 = scmp.ne.s32.totalorder %s161, %s163
    %p167 = scmp.eq.s32.totalorder %s17, 0
    %p168 = por %p166, %p167
    %p169 = scmp.ne.s32.totalorder %s161, %s163
    %p170 = scmp.eq.s32.totalorder %s22, 1
    %p171 = por %p169, %p170
    %p172 = scmp.ne.s32.totalorder %s163, %s164
    %p173 = scmp.eq.s32.totalorder %s22, 0
    %p174 = por %p172, %p173
    %p175 = scmp.ne.s32.totalorder %s163, %s164
    %p176 = scmp.eq.s32.totalorder %s23, 1
    %p177 = por %p175, %p176
    %p179 = scmp.ne.s32.totalorder %s164, %s178
    %p180 = scmp.eq.s32.totalorder %s23, 0
    %p181 = por %p179, %p180
    %s183 = sadd.s32 %s182, 1
    %p186 = scmp.eq.s32.totalorder %s17, 1
    %p187 = scmp.ne.s32.totalorder %s182, %s184
    %p188 = scmp.eq.s32.totalorder %s17, 0
    %p189 = por %p187, %p188
    %p190 = scmp.ne.s32.totalorder %s182, %s184
    %p191 = scmp.eq.s32.totalorder %s22, 1
    %p192 = por %p190, %p191
    %p193 = scmp.ne.s32.totalorder %s184, %s185
    %p194 = scmp.eq.s32.totalorder %s22, 0
    %p195 = por %p193, %p194
    %p196 = scmp.ne.s32.totalorder %s184, %s185
    %p197 = scmp.eq.s32.totalorder %s23, 1
    %p198 = por %p196, %p197
    %p200 = scmp.ne.s32.totalorder %s185, %s199
    %p201 = scmp.eq.s32.totalorder %s23, 0
    %p202 = por %p200, %p201
    %s204 = sadd.s32 %s203, 1
    %p207 = scmp.eq.s32.totalorder %s17, 1
    %p208 = scmp.ne.s32.totalorder %s203, %s205
    %p209 = scmp.eq.s32.totalorder %s17, 0
    %p210 = por %p208, %p209
    %p211 = scmp.ne.s32.totalorder %s203, %s205
    %p212 = scmp.eq.s32.totalorder %s22, 1
    %p213 = por %p211, %p212
    %p214 = scmp.ne.s32.totalorder %s205, %s206
    %p215 = scmp.eq.s32.totalorder %s22, 0
    %p216 = por %p214, %p215
    %p217 = scmp.ne.s32.totalorder %s205, %s206
    %p218 = scmp.eq.s32.totalorder %s23, 1
    %p219 = por %p217, %p218
    %p221 = scmp.ne.s32.totalorder %s206, %s220
    %p222 = scmp.eq.s32.totalorder %s23, 0
    %p223 = por %p221, %p222
    %s225 = sadd.s32 %s224, 1
    %p228 = scmp.eq.s32.totalorder %s17, 1
    %p229 = scmp.ne.s32.totalorder %s224, %s226
    %p230 = scmp.eq.s32.totalorder %s17, 0
    %p231 = por %p229, %p230
    %p232 = scmp.ne.s32.totalorder %s224, %s226
    %p233 = scmp.eq.s32.totalorder %s22, 1
    %p234 = por %p232, %p233
    %p235 = scmp.ne.s32.totalorder %s226, %s227
    %p236 = scmp.eq.s32.totalorder %s22, 0
    %p237 = por %p235, %p236
    %p238 = scmp.ne.s32.totalorder %s226, %s227
    %p239 = scmp.eq.s32.totalorder %s23, 1
    %p240 = por %p238, %p239
    %p242 = scmp.ne.s32.totalorder %s227, %s241
    %p243 = scmp.eq.s32.totalorder %s23, 0
    %p244 = por %p242, %p243
    %s246 = sadd.s32 %s245, 1
    %p249 = scmp.eq.s32.totalorder %s17, 1
    %p250 = scmp.ne.s32.totalorder %s245, %s247
    %p251 = scmp.eq.s32.totalorder %s17, 0
    %p252 = por %p250, %p251
    %p253 = scmp.ne.s32.totalorder %s245, %s247
    %p254 = scmp.eq.s32.totalorder %s22, 1
    %p255 = por %p253, %p254
    %p256 = scmp.ne.s32.totalorder %s247, %s248
    %p257 = scmp.eq.s32.totalorder %s22, 0
    %p258 = por %p256, %p257
    %p259 = scmp.ne.s32.totalorder %s247, %s248
    %p260 = scmp.eq.s32.totalorder %s23, 1
    %p261 = por %p259, %p260
    %p263 = scmp.ne.s32.totalorder %s248, %s262
    %p264 = scmp.eq.s32.totalorder %s23, 0
    %p265 = por %p263, %p264
    %s266 = ssub.s32 %s17, %s24
    %p267 = scmp.eq.s32.totalorder %s266, 0
    %s269 = sadd.s32 %s268, 1
    %s270 = scalar_select %p267, %s268, %s269
    %p273 = pneg %p267
    %p274 = scmp.eq.s32.totalorder %s17, 1
    %p275 = por %p273, %p274
    %p276 = scmp.ne.s32.totalorder %s268, %s271
    %p277 = scmp.eq.s32.totalorder %s17, 0
    %p278 = por %p276, %p277
    %p279 = scmp.ne.s32.totalorder %s268, %s271
    %p280 = scmp.eq.s32.totalorder %s22, 1
    %p281 = por %p279, %p280
    %p282 = scmp.ne.s32.totalorder %s271, %s272
    %p283 = scmp.eq.s32.totalorder %s22, 0
    %p284 = por %p282, %p283
    %p285 = scmp.ne.s32.totalorder %s271, %s272
    %p286 = scmp.eq.s32.totalorder %s23, 1
    %p287 = por %p285, %p286
    %p289 = scmp.ne.s32.totalorder %s272, %s288
    %p290 = scmp.eq.s32.totalorder %s23, 0
    %p291 = por %p289, %p290
    %p292 = scmp.le.s32.totalorder 1, %s17
    %p293 = scmp.lt.s32.totalorder %s17, 3
    %p294 = pnand %p292, %p293
    %p295 = pneg %p294
    // Predicated region
    $region9: #{up_sample_forward.3} parent=5 // pred_check
      _
    $region10: #{up_sample_forward.3} parent=5 // pred_check_branch
      %297 = sbr.rel (%p294) target = $region12
    $region11: #{up_sample_forward.3} parent=5 // pred_region
      %s298 = ssub.s32 %s17, 1
      // Predicated region
      $region13: #{up_sample_forward.3} parent=11 // pred_check
        %p299 = pneg %p90
      $region14: #{up_sample_forward.3} parent=11 // pred_check_branch
        %301 = sbr.rel (%p299) target = $region16
      $region15: #{up_sample_forward.3} parent=11 // pred_region
        _
      $region16: #{up_sample_forward.3} parent=11 // pred_fallthru
        _
      // Predicated region
      $region17: #{up_sample_forward.3} parent=11 // pred_check
        %p302 = pneg %p111
      $region18: #{up_sample_forward.3} parent=11 // pred_check_branch
        %304 = sbr.rel (%p302) target = $region20
      $region19: #{up_sample_forward.3} parent=11 // pred_region
        _
      $region20: #{up_sample_forward.3} parent=11 // pred_fallthru
        _
      // Predicated region
      $region21: #{up_sample_forward.3} parent=11 // pred_check
        %p305 = pneg %p132
      $region22: #{up_sample_forward.3} parent=11 // pred_check_branch
        %307 = sbr.rel (%p305) target = $region24
      $region23: #{up_sample_forward.3} parent=11 // pred_region
        _
      $region24: #{up_sample_forward.3} parent=11 // pred_fallthru
        _
      // Predicated region
      $region25: #{up_sample_forward.3} parent=11 // pred_check
        %p308 = pneg %p153
      $region26: #{up_sample_forward.3} parent=11 // pred_check_branch
        %310 = sbr.rel (%p308) target = $region28
      $region27: #{up_sample_forward.3} parent=11 // pred_region
        _
      $region28: #{up_sample_forward.3} parent=11 // pred_fallthru
        _
      // Predicated region
      $region29: #{up_sample_forward.3} parent=11 // pred_check
        %p311 = pneg %p174
      $region30: #{up_sample_forward.3} parent=11 // pred_check_branch
        %313 = sbr.rel (%p311) target = $region32
      $region31: #{up_sample_forward.3} parent=11 // pred_region
        _
      $region32: #{up_sample_forward.3} parent=11 // pred_fallthru
        _
      // Predicated region
      $region33: #{up_sample_forward.3} parent=11 // pred_check
        %p314 = pneg %p195
      $region34: #{up_sample_forward.3} parent=11 // pred_check_branch
        %316 = sbr.rel (%p314) target = $region36
      $region35: #{up_sample_forward.3} parent=11 // pred_region
        _
      $region36: #{up_sample_forward.3} parent=11 // pred_fallthru
        _
      // Predicated region
      $region37: #{up_sample_forward.3} parent=11 // pred_check
        %p317 = pneg %p216
      $region38: #{up_sample_forward.3} parent=11 // pred_check_branch
        %319 = sbr.rel (%p317) target = $region40
      $region39: #{up_sample_forward.3} parent=11 // pred_region
        _
      $region40: #{up_sample_forward.3} parent=11 // pred_fallthru
        _
      // Predicated region
      $region41: #{up_sample_forward.3} parent=11 // pred_check
        %p320 = pneg %p237
      $region42: #{up_sample_forward.3} parent=11 // pred_check_branch
        %322 = sbr.rel (%p320) target = $region44
      $region43: #{up_sample_forward.3} parent=11 // pred_region
        _
      $region44: #{up_sample_forward.3} parent=11 // pred_fallthru
        _
      // Predicated region
      $region45: #{up_sample_forward.3} parent=11 // pred_check
        %p323 = pneg %p258
      $region46: #{up_sample_forward.3} parent=11 // pred_check_branch
        %325 = sbr.rel (%p323) target = $region48
      $region47: #{up_sample_forward.3} parent=11 // pred_region
        _
      $region48: #{up_sample_forward.3} parent=11 // pred_fallthru
        _
    $region12: #{up_sample_forward.3} parent=5 // pred_fallthru
      _
    %p326 = scmp.lt.s32.totalorder %s17, 2
    // Predicated region
    $region49: #{up_sample_forward.3} parent=5 // pred_check
      %p327 = pneg %p326
    $region50: #{up_sample_forward.3} parent=5 // pred_check_branch
      %329 = sbr.rel (%p327) target = $region52
    $region51: #{up_sample_forward.3} parent=5 // pred_region
      // Predicated region
      $region53: #{up_sample_forward.3} parent=51 // pred_check
        %p330 = pneg %p37
      $region54: #{up_sample_forward.3} parent=51 // pred_check_branch
        %332 = sbr.rel (%p330) target = $region56
      $region55: #{up_sample_forward.3} parent=51 // pred_region
        %p333 = scmp.lt.s32.totalorder %s17, 1
        %s334 = scalar_select %p333, %s17, 1
        %s335 = smul.addr %s334, 8
        %s336 = smul.addr %s335, 8
        %s337 = scalar_lea.vmem %s0, %s336
      $region56: #{up_sample_forward.3} parent=51 // pred_fallthru
        _
      // Predicated region
      $region57: #{up_sample_forward.3} parent=51 // pred_check
        %p338 = pneg %p63
      $region58: #{up_sample_forward.3} parent=51 // pred_check_branch
        %340 = sbr.rel (%p338) target = $region60
      $region59: #{up_sample_forward.3} parent=51 // pred_region
        %p341 = scmp.lt.s32.totalorder %s17, 1
        %s342 = scalar_select %p341, %s17, 1
        %s343 = smul.addr %s342, 8
        %s344 = smul.addr %s343, 8
        %s345 = scalar_lea.vmem %s1, %s344
      $region60: #{up_sample_forward.3} parent=51 // pred_fallthru
        _
    $region52: #{up_sample_forward.3} parent=5 // pred_fallthru
      _
    %p346 = scmp.le.s32.totalorder 1, %s17
    %p347 = scmp.lt.s32.totalorder %s17, 3
    %p348 = pnand %p346, %p347
    %p349 = pneg %p348
    // Predicated region
    $region61: #{up_sample_forward.3} parent=5 // pred_check
      _
    $region62: #{up_sample_forward.3} parent=5 // pred_check_branch
      %351 = sbr.rel (%p348) target = $region64
    $region63: #{up_sample_forward.3} parent=5 // pred_region
      %s352 = ssub.s32 %s17, 1
      %p353 = scmp.lt.s32.totalorder %s22, 1
      %s354 = scalar_select %p353, %s22, 1
      %s355 = smul.addr %s354, 8
      %s356 = smul.addr %s355, 8
      %s357 = scalar_lea.vmem %s0, %s356
      %p358 = pneg %p43
      %p359 = pneg %p40
      %p360 = scmp.lt.s32.totalorder %s22, 1
      %s361 = scalar_select %p360, %s22, 1
      %s362 = smul.addr %s361, 8
      %s363 = smul.addr %s362, 8
      %s364 = scalar_lea.vmem %s1, %s363
      %p365 = pneg %p69
      %p366 = pneg %p66
      %p367 = pneg %p90
      %p368 = pneg %p87
      %p369 = pneg %p111
      %p370 = pneg %p108
      %p371 = pneg %p132
      %p372 = pneg %p129
      %p373 = pneg %p153
      %p374 = pneg %p150
      %p375 = pneg %p174
      %p376 = pneg %p171
      %p377 = pneg %p195
      %p378 = pneg %p192
      %p379 = pneg %p216
      %p380 = pneg %p213
      %p381 = pneg %p237
      %p382 = pneg %p234
      %p383 = pneg %p258
      %p384 = pneg %p255
      %p385 = pneg %p284
      %p386 = pneg %p281
      %p387 = scmp.lt.s32.totalorder %s22, 1
      %s388 = scalar_select %p387, %s22, 1
      %s389 = smul.addr %s388, 8
      %s390 = smul.addr %s389, 8
      %s391 = scalar_lea.vmem %s11, %s390
      %p392 = scmp.lt.s32.totalorder %s22, 1
      %s393 = scalar_select %p392, %s22, 1
      %s394 = smul.addr %s393, 8
      %s395 = smul.addr %s394, 8
      %s396 = scalar_lea.vmem %s0, %s395
      %p397 = scmp.lt.s32.totalorder %s22, 1
      %s398 = scalar_select %p397, %s22, 1
      %s399 = smul.addr %s398, 8
      %s400 = smul.addr %s399, 8
      %s401 = scalar_lea.vmem %s1, %s400
      %p402 = scmp.lt.s32.totalorder %s22, 1
      %s403 = scalar_select %p402, %s22, 1
      %s404 = smul.addr %s403, 8
      %s405 = smul.addr %s404, 8
      %s406 = scalar_lea.vmem %s11, %s405
      %407 = vst [vmem:[#allocation2] sm:$0xff] 0.0
      %408 = vst [vmem:[#allocation2 + $0x48] sm:$0xff] 0.0
      %v409 = vld [vmem:[%s396] sm:$0xff]
      %v410 = vld [vmem:[%s396 + $0x8] sm:$0xff]
      %v411 = vld [vmem:[%s396 + $0x10] sm:$0xff]
      %v412 = vld [vmem:[%s396 + $0x18] sm:$0xff]
      %v413 = vld [vmem:[%s396 + $0x20] sm:$0xff]
      %v414 = vld [vmem:[%s396 + $0x28] sm:$0xff]
      %v415 = vld [vmem:[%s396 + $0x30] sm:$0xff]
      %v416 = vld [vmem:[%s396 + $0x38] sm:$0xff]
      %v417 = vld [vmem:[%s401] sm:$0xff]
      %v418 = vld [vmem:[%s401 + $0x8] sm:$0xff]
      %v419 = vld [vmem:[%s401 + $0x10] sm:$0xff]
      %v420 = vld [vmem:[%s401 + $0x18] sm:$0xff]
      %v421 = vld [vmem:[%s401 + $0x20] sm:$0xff]
      %v422 = vld [vmem:[%s401 + $0x28] sm:$0xff]
      %v423 = vld [vmem:[%s401 + $0x30] sm:$0xff]
      %v424 = vld [vmem:[%s401 + $0x38] sm:$0xff]
      %v425 = vld [vmem:[%s2] sm:$0xff]
      %v426 = vld [vmem:[%s3] sm:$0xff]
      %vm427 = vcmask 64512
      %v429 = vsel %vm427, %v426, 0
      %431 = vmatpush.msra.mxu0 0.0
      %432 = vmatpush.msra.mxu0 0.0
      %433 = vmatpush.msra.mxu0 0.0
      %434 = vmatpush.msra.mxu0 0.0
      %435 = vmatpush.msra.mxu0 0.0
      %436 = vmatpush.msra.mxu0 0.0
      %437 = vmatpush.msra.mxu0 0.0
      %438 = vmatpush.msra.mxu0 0.0
      %439 = vmatpush.msra.mxu0 0.0
      %440 = vmatpush.msra.mxu0 0.0
      %441 = vmatpush.msra.mxu0 0.0
      %442 = vmatpush.msra.mxu0 0.0
      %443 = vmatpush.msra.mxu0 0.0
      %444 = vmatpush.msra.mxu0 0.0
      %445 = vmatpush.msra.mxu0 0.0
      %446 = vmatpush.msra.mxu0 %v417
      %447 = vmatmul.f32.gmra.mxu0 %v429
      %v448 = vpop.f32.mrf.mxu0
      %v449 = vadd.f32 0.0, %v448
      %450 = vdwg.mxu0
      %451 = vmatpush.msra.mxu0 0.0
      %452 = vmatpush.msra.mxu0 0.0
      %453 = vmatpush.msra.mxu0 0.0
      %454 = vmatpush.msra.mxu0 0.0
      %455 = vmatpush.msra.mxu0 0.0
      %456 = vmatpush.msra.mxu0 0.0
      %457 = vmatpush.msra.mxu0 0.0
      %458 = vmatpush.msra.mxu0 0.0
      %459 = vmatpush.msra.mxu0 0.0
      %460 = vmatpush.msra.mxu0 0.0
      %461 = vmatpush.msra.mxu0 0.0
      %462 = vmatpush.msra.mxu0 0.0
      %463 = vmatpush.msra.mxu0 0.0
      %464 = vmatpush.msra.mxu0 0.0
      %465 = vmatpush.msra.mxu0 0.0
      %466 = vmatpush.msra.mxu0 %v418
      %467 = vmatmul.f32.gmra.mxu0 %v429
      %v468 = vpop.f32.mrf.mxu0
      %v469 = vadd.f32 0.0, %v468
      %470 = vdwg.mxu0
      %471 = vmatpush.msra.mxu0 0.0
      %472 = vmatpush.msra.mxu0 0.0
      %473 = vmatpush.msra.mxu0 0.0
      %474 = vmatpush.msra.mxu0 0.0
      %475 = vmatpush.msra.mxu0 0.0
      %476 = vmatpush.msra.mxu0 0.0
      %477 = vmatpush.msra.mxu0 0.0
      %478 = vmatpush.msra.mxu0 0.0
      %479 = vmatpush.msra.mxu0 0.0
      %480 = vmatpush.msra.mxu0 0.0
      %481 = vmatpush.msra.mxu0 0.0
      %482 = vmatpush.msra.mxu0 0.0
      %483 = vmatpush.msra.mxu0 0.0
      %484 = vmatpush.msra.mxu0 0.0
      %485 = vmatpush.msra.mxu0 0.0
      %486 = vmatpush.msra.mxu0 %v419
      %487 = vmatmul.f32.gmra.mxu0 %v429
      %v488 = vpop.f32.mrf.mxu0
      %v489 = vadd.f32 0.0, %v488
      %490 = vdwg.mxu0
      %491 = vmatpush.msra.mxu0 0.0
      %492 = vmatpush.msra.mxu0 0.0
      %493 = vmatpush.msra.mxu0 0.0
      %494 = vmatpush.msra.mxu0 0.0
      %495 = vmatpush.msra.mxu0 0.0
      %496 = vmatpush.msra.mxu0 0.0
      %497 = vmatpush.msra.mxu0 0.0
      %498 = vmatpush.msra.mxu0 0.0
      %499 = vmatpush.msra.mxu0 0.0
      %500 = vmatpush.msra.mxu0 0.0
      %501 = vmatpush.msra.mxu0 0.0
      %502 = vmatpush.msra.mxu0 0.0
      %503 = vmatpush.msra.mxu0 0.0
      %504 = vmatpush.msra.mxu0 0.0
      %505 = vmatpush.msra.mxu0 0.0
      %506 = vmatpush.msra.mxu0 %v420
      %507 = vmatmul.f32.gmra.mxu0 %v429
      %v508 = vpop.f32.mrf.mxu0
      %v509 = vadd.f32 0.0, %v508
      %510 = vdwg.mxu0
      %511 = vmatpush.msra.mxu0 0.0
      %512 = vmatpush.msra.mxu0 0.0
      %513 = vmatpush.msra.mxu0 0.0
      %514 = vmatpush.msra.mxu0 0.0
      %515 = vmatpush.msra.mxu0 0.0
      %516 = vmatpush.msra.mxu0 0.0
      %517 = vmatpush.msra.mxu0 0.0
      %518 = vmatpush.msra.mxu0 0.0
      %519 = vmatpush.msra.mxu0 0.0
      %520 = vmatpush.msra.mxu0 0.0
      %521 = vmatpush.msra.mxu0 0.0
      %522 = vmatpush.msra.mxu0 0.0
      %523 = vmatpush.msra.mxu0 0.0
      %524 = vmatpush.msra.mxu0 0.0
      %525 = vmatpush.msra.mxu0 0.0
      %526 = vmatpush.msra.mxu0 %v421
      %527 = vmatmul.f32.gmra.mxu0 %v429
      %v528 = vpop.f32.mrf.mxu0
      %v529 = vadd.f32 0.0, %v528
      %530 = vdwg.mxu0
      %531 = vmatpush.msra.mxu0 0.0
      %532 = vmatpush.msra.mxu0 0.0
      %533 = vmatpush.msra.mxu0 0.0
      %534 = vmatpush.msra.mxu0 0.0
      %535 = vmatpush.msra.mxu0 0.0
      %536 = vmatpush.msra.mxu0 0.0
      %537 = vmatpush.msra.mxu0 0.0
      %538 = vmatpush.msra.mxu0 0.0
      %539 = vmatpush.msra.mxu0 0.0
      %540 = vmatpush.msra.mxu0 0.0
      %541 = vmatpush.msra.mxu0 0.0
      %542 = vmatpush.msra.mxu0 0.0
      %543 = vmatpush.msra.mxu0 0.0
      %544 = vmatpush.msra.mxu0 0.0
      %545 = vmatpush.msra.mxu0 0.0
      %546 = vmatpush.msra.mxu0 %v422
      %547 = vmatmul.f32.gmra.mxu0 %v429
      %v548 = vpop.f32.mrf.mxu0
      %v549 = vadd.f32 0.0, %v548
      %550 = vdwg.mxu0
      %551 = vmatpush.msra.mxu0 0.0
      %552 = vmatpush.msra.mxu0 0.0
      %553 = vmatpush.msra.mxu0 0.0
      %554 = vmatpush.msra.mxu0 0.0
      %555 = vmatpush.msra.mxu0 0.0
      %556 = vmatpush.msra.mxu0 0.0
      %557 = vmatpush.msra.mxu0 0.0
      %558 = vmatpush.msra.mxu0 0.0
      %559 = vmatpush.msra.mxu0 0.0
      %560 = vmatpush.msra.mxu0 0.0
      %561 = vmatpush.msra.mxu0 0.0
      %562 = vmatpush.msra.mxu0 0.0
      %563 = vmatpush.msra.mxu0 0.0
      %564 = vmatpush.msra.mxu0 0.0
      %565 = vmatpush.msra.mxu0 0.0
      %566 = vmatpush.msra.mxu0 %v423
      %567 = vmatmul.f32.gmra.mxu0 %v429
      %v568 = vpop.f32.mrf.mxu0
      %v569 = vadd.f32 0.0, %v568
      %570 = vdwg.mxu0
      %571 = vmatpush.msra.mxu0 0.0
      %572 = vmatpush.msra.mxu0 0.0
      %573 = vmatpush.msra.mxu0 0.0
      %574 = vmatpush.msra.mxu0 0.0
      %575 = vmatpush.msra.mxu0 0.0
      %576 = vmatpush.msra.mxu0 0.0
      %577 = vmatpush.msra.mxu0 0.0
      %578 = vmatpush.msra.mxu0 0.0
      %579 = vmatpush.msra.mxu0 0.0
      %580 = vmatpush.msra.mxu0 0.0
      %581 = vmatpush.msra.mxu0 0.0
      %582 = vmatpush.msra.mxu0 0.0
      %583 = vmatpush.msra.mxu0 0.0
      %584 = vmatpush.msra.mxu0 0.0
      %585 = vmatpush.msra.mxu0 0.0
      %586 = vmatpush.msra.mxu0 %v424
      %587 = vmatmul.f32.gmra.mxu0 %v429
      %v588 = vpop.f32.mrf.mxu0
      %v589 = vadd.f32 0.0, %v588
      %590 = vdwg.mxu0
      %v592 = vsel %vm427, %v425, 0
      %594 = vmatpush.msra.mxu0 0.0
      %595 = vmatpush.msra.mxu0 0.0
      %596 = vmatpush.msra.mxu0 0.0
      %597 = vmatpush.msra.mxu0 0.0
      %598 = vmatpush.msra.mxu0 0.0
      %599 = vmatpush.msra.mxu0 0.0
      %600 = vmatpush.msra.mxu0 0.0
      %601 = vmatpush.msra.mxu0 0.0
      %602 = vmatpush.msra.mxu0 0.0
      %603 = vmatpush.msra.mxu0 0.0
      %604 = vmatpush.msra.mxu0 0.0
      %605 = vmatpush.msra.mxu0 0.0
      %606 = vmatpush.msra.mxu0 0.0
      %607 = vmatpush.msra.mxu0 0.0
      %608 = vmatpush.msra.mxu0 0.0
      %609 = vmatpush.msra.mxu0 %v409
      %610 = vmatmul.f32.gmra.mxu0 %v592
      %v611 = vpop.f32.mrf.mxu0
      %v612 = vadd.f32 %v449, %v611
      %613 = vdwg.mxu0
      %614 = vmatpush.msra.mxu0 0.0
      %615 = vmatpush.msra.mxu0 0.0
      %616 = vmatpush.msra.mxu0 0.0
      %617 = vmatpush.msra.mxu0 0.0
      %618 = vmatpush.msra.mxu0 0.0
      %619 = vmatpush.msra.mxu0 0.0
      %620 = vmatpush.msra.mxu0 0.0
      %621 = vmatpush.msra.mxu0 0.0
      %622 = vmatpush.msra.mxu0 0.0
      %623 = vmatpush.msra.mxu0 0.0
      %624 = vmatpush.msra.mxu0 0.0
      %625 = vmatpush.msra.mxu0 0.0
      %626 = vmatpush.msra.mxu0 0.0
      %627 = vmatpush.msra.mxu0 0.0
      %628 = vmatpush.msra.mxu0 0.0
      %629 = vmatpush.msra.mxu0 %v410
      %630 = vmatmul.f32.gmra.mxu0 %v592
      %v631 = vpop.f32.mrf.mxu0
      %v632 = vadd.f32 %v469, %v631
      %633 = vdwg.mxu0
      %634 = vmatpush.msra.mxu0 0.0
      %635 = vmatpush.msra.mxu0 0.0
      %636 = vmatpush.msra.mxu0 0.0
      %637 = vmatpush.msra.mxu0 0.0
      %638 = vmatpush.msra.mxu0 0.0
      %639 = vmatpush.msra.mxu0 0.0
      %640 = vmatpush.msra.mxu0 0.0
      %641 = vmatpush.msra.mxu0 0.0
      %642 = vmatpush.msra.mxu0 0.0
      %643 = vmatpush.msra.mxu0 0.0
      %644 = vmatpush.msra.mxu0 0.0
      %645 = vmatpush.msra.mxu0 0.0
      %646 = vmatpush.msra.mxu0 0.0
      %647 = vmatpush.msra.mxu0 0.0
      %648 = vmatpush.msra.mxu0 0.0
      %649 = vmatpush.msra.mxu0 %v411
      %650 = vmatmul.f32.gmra.mxu0 %v592
      %v651 = vpop.f32.mrf.mxu0
      %v652 = vadd.f32 %v489, %v651
      %653 = vdwg.mxu0
      %654 = vmatpush.msra.mxu0 0.0
      %655 = vmatpush.msra.mxu0 0.0
      %656 = vmatpush.msra.mxu0 0.0
      %657 = vmatpush.msra.mxu0 0.0
      %658 = vmatpush.msra.mxu0 0.0
      %659 = vmatpush.msra.mxu0 0.0
      %660 = vmatpush.msra.mxu0 0.0
      %661 = vmatpush.msra.mxu0 0.0
      %662 = vmatpush.msra.mxu0 0.0
      %663 = vmatpush.msra.mxu0 0.0
      %664 = vmatpush.msra.mxu0 0.0
      %665 = vmatpush.msra.mxu0 0.0
      %666 = vmatpush.msra.mxu0 0.0
      %667 = vmatpush.msra.mxu0 0.0
      %668 = vmatpush.msra.mxu0 0.0
      %669 = vmatpush.msra.mxu0 %v412
      %670 = vmatmul.f32.gmra.mxu0 %v592
      %v671 = vpop.f32.mrf.mxu0
      %v672 = vadd.f32 %v509, %v671
      %673 = vdwg.mxu0
      %674 = vmatpush.msra.mxu0 0.0
      %675 = vmatpush.msra.mxu0 0.0
      %676 = vmatpush.msra.mxu0 0.0
      %677 = vmatpush.msra.mxu0 0.0
      %678 = vmatpush.msra.mxu0 0.0
      %679 = vmatpush.msra.mxu0 0.0
      %680 = vmatpush.msra.mxu0 0.0
      %681 = vmatpush.msra.mxu0 0.0
      %682 = vmatpush.msra.mxu0 0.0
      %683 = vmatpush.msra.mxu0 0.0
      %684 = vmatpush.msra.mxu0 0.0
      %685 = vmatpush.msra.mxu0 0.0
      %686 = vmatpush.msra.mxu0 0.0
      %687 = vmatpush.msra.mxu0 0.0
      %688 = vmatpush.msra.mxu0 0.0
      %689 = vmatpush.msra.mxu0 %v413
      %690 = vmatmul.f32.gmra.mxu0 %v592
      %v691 = vpop.f32.mrf.mxu0
      %v692 = vadd.f32 %v529, %v691
      %693 = vdwg.mxu0
      %694 = vmatpush.msra.mxu0 0.0
      %695 = vmatpush.msra.mxu0 0.0
      %696 = vmatpush.msra.mxu0 0.0
      %697 = vmatpush.msra.mxu0 0.0
      %698 = vmatpush.msra.mxu0 0.0
      %699 = vmatpush.msra.mxu0 0.0
      %700 = vmatpush.msra.mxu0 0.0
      %701 = vmatpush.msra.mxu0 0.0
      %702 = vmatpush.msra.mxu0 0.0
      %703 = vmatpush.msra.mxu0 0.0
      %704 = vmatpush.msra.mxu0 0.0
      %705 = vmatpush.msra.mxu0 0.0
      %706 = vmatpush.msra.mxu0 0.0
      %707 = vmatpush.msra.mxu0 0.0
      %708 = vmatpush.msra.mxu0 0.0
      %709 = vmatpush.msra.mxu0 %v414
      %710 = vmatmul.f32.gmra.mxu0 %v592
      %v711 = vpop.f32.mrf.mxu0
      %v712 = vadd.f32 %v549, %v711
      %713 = vdwg.mxu0
      %714 = vmatpush.msra.mxu0 0.0
      %715 = vmatpush.msra.mxu0 0.0
      %716 = vmatpush.msra.mxu0 0.0
      %717 = vmatpush.msra.mxu0 0.0
      %718 = vmatpush.msra.mxu0 0.0
      %719 = vmatpush.msra.mxu0 0.0
      %720 = vmatpush.msra.mxu0 0.0
      %721 = vmatpush.msra.mxu0 0.0
      %722 = vmatpush.msra.mxu0 0.0
      %723 = vmatpush.msra.mxu0 0.0
      %724 = vmatpush.msra.mxu0 0.0
      %725 = vmatpush.msra.mxu0 0.0
      %726 = vmatpush.msra.mxu0 0.0
      %727 = vmatpush.msra.mxu0 0.0
      %728 = vmatpush.msra.mxu0 0.0
      %729 = vmatpush.msra.mxu0 %v415
      %730 = vmatmul.f32.gmra.mxu0 %v592
      %v731 = vpop.f32.mrf.mxu0
      %v732 = vadd.f32 %v569, %v731
      %733 = vdwg.mxu0
      %734 = vmatpush.msra.mxu0 0.0
      %735 = vmatpush.msra.mxu0 0.0
      %736 = vmatpush.msra.mxu0 0.0
      %737 = vmatpush.msra.mxu0 0.0
      %738 = vmatpush.msra.mxu0 0.0
      %739 = vmatpush.msra.mxu0 0.0
      %740 = vmatpush.msra.mxu0 0.0
      %741 = vmatpush.msra.mxu0 0.0
      %742 = vmatpush.msra.mxu0 0.0
      %743 = vmatpush.msra.mxu0 0.0
      %744 = vmatpush.msra.mxu0 0.0
      %745 = vmatpush.msra.mxu0 0.0
      %746 = vmatpush.msra.mxu0 0.0
      %747 = vmatpush.msra.mxu0 0.0
      %748 = vmatpush.msra.mxu0 0.0
      %749 = vmatpush.msra.mxu0 %v416
      %750 = vmatmul.f32.gmra.mxu0 %v592
      %v751 = vpop.f32.mrf.mxu0
      %v752 = vadd.f32 %v589, %v751
      %753 = vdwg.mxu0
      %v754 = vld [vmem:[%s4] sm:$0xff]
      %756 = vset.pattern.permute.xlu0 0
      %757 = vperm.xlu0 %756, %v754
      %v758 = vpop.permute.xlu0 %757
      %v760 = vadd.f32 %v612, %v758
      %v761 = vadd.f32 %v632, %v758
      %v762 = vadd.f32 %v652, %v758
      %v763 = vadd.f32 %v672, %v758
      %v764 = vadd.f32 %v692, %v758
      %v765 = vadd.f32 %v712, %v758
      %v766 = vadd.f32 %v732, %v758
      %v767 = vadd.f32 %v752, %v758
      %v768 = vmax.f32 %v760, 0.0
      %v769 = vmax.f32 %v761, 0.0
      %v770 = vmax.f32 %v762, 0.0
      %v771 = vmax.f32 %v763, 0.0
      %v772 = vmax.f32 %v764, 0.0
      %v773 = vmax.f32 %v765, 0.0
      %v774 = vmax.f32 %v766, 0.0
      %v775 = vmax.f32 %v767, 0.0
      %v776 = vmin.f32 %v768, 6.0
      %v777 = vmin.f32 %v769, 6.0
      %v778 = vmin.f32 %v770, 6.0
      %v779 = vmin.f32 %v771, 6.0
      %v780 = vmin.f32 %v772, 6.0
      %v781 = vmin.f32 %v773, 6.0
      %v782 = vmin.f32 %v774, 6.0
      %v783 = vmin.f32 %v775, 6.0
      %v784 = vld [vmem:[%s5] sm:$0xff]
      %v785 = vld [vmem:[%s6] sm:$0xff]
      %786 = vst [vmem:[#allocation2 + $0x8] sm:$0xff] %v776
      %787 = vst [vmem:[#allocation2 + $0x10] sm:$0xff] %v777
      %788 = vst [vmem:[#allocation2 + $0x18] sm:$0xff] %v778
      %789 = vst [vmem:[#allocation2 + $0x20] sm:$0xff] %v779
      %790 = vst [vmem:[#allocation2 + $0x28] sm:$0xff] %v780
      %791 = vst [vmem:[#allocation2 + $0x30] sm:$0xff] %v781
      %792 = vst [vmem:[#allocation2 + $0x38] sm:$0xff] %v782
      %793 = vst [vmem:[#allocation2 + $0x40] sm:$0xff] %v783
      %v794 = vlaneseq
      %v795 = vand.u32 %v794, 127
      %v796 = vadd.s32 %v795, 128
      %v797 = vadd.s32 %v795, 256
      %v798 = vadd.s32 %v795, 384
      %v799 = vadd.s32 %v795, 512
      %v800 = vadd.s32 %v795, 640
      %v801 = vadd.s32 %v795, 768
      %v802 = vadd.s32 %v795, 896
      %vm803 = vcmp.lt.s32.totalorder %v795, 0
      %v804 = vsub.s32 0, %v795
      %v805 = vsel %vm803, %v804, %v795
      %v806 = vshrl.u32 %v805, 5
      %v807 = vand.u32 %v805, 31
      %v808 = vsub.s32 0, %v807
      %v809 = vsel %vm803, %v808, %v807
      %vm810 = vcmp.lt.s32.totalorder %v796, 0
      %v811 = vsub.s32 0, %v796
      %v812 = vsel %vm810, %v811, %v796
      %v813 = vshrl.u32 %v812, 5
      %v814 = vand.u32 %v812, 31
      %v815 = vsub.s32 0, %v814
      %v816 = vsel %vm810, %v815, %v814
      %vm817 = vcmp.lt.s32.totalorder %v797, 0
      %v818 = vsub.s32 0, %v797
      %v819 = vsel %vm817, %v818, %v797
      %v820 = vshrl.u32 %v819, 5
      %v821 = vand.u32 %v819, 31
      %v822 = vsub.s32 0, %v821
      %v823 = vsel %vm817, %v822, %v821
      %vm824 = vcmp.lt.s32.totalorder %v798, 0
      %v825 = vsub.s32 0, %v798
      %v826 = vsel %vm824, %v825, %v798
      %v827 = vshrl.u32 %v826, 5
      %v828 = vand.u32 %v826, 31
      %v829 = vsub.s32 0, %v828
      %v830 = vsel %vm824, %v829, %v828
      %vm831 = vcmp.lt.s32.totalorder %v799, 0
      %v832 = vsub.s32 0, %v799
      %v833 = vsel %vm831, %v832, %v799
      %v834 = vshrl.u32 %v833, 5
      %v835 = vand.u32 %v833, 31
      %v836 = vsub.s32 0, %v835
      %v837 = vsel %vm831, %v836, %v835
      %vm838 = vcmp.lt.s32.totalorder %v800, 0
      %v839 = vsub.s32 0, %v800
      %v840 = vsel %vm838, %v839, %v800
      %v841 = vshrl.u32 %v840, 5
      %v842 = vand.u32 %v840, 31
      %v843 = vsub.s32 0, %v842
      %v844 = vsel %vm838, %v843, %v842
      %vm845 = vcmp.lt.s32.totalorder %v801, 0
      %v846 = vsub.s32 0, %v801
      %v847 = vsel %vm845, %v846, %v801
      %v848 = vshrl.u32 %v847, 5
      %v849 = vand.u32 %v847, 31
      %v850 = vsub.s32 0, %v849
      %v851 = vsel %vm845, %v850, %v849
      %vm852 = vcmp.lt.s32.totalorder %v802, 0
      %v853 = vsub.s32 0, %v802
      %v854 = vsel %vm852, %v853, %v802
      %v855 = vshrl.u32 %v854, 5
      %v856 = vand.u32 %v854, 31
      %v857 = vsub.s32 0, %v856
      %v858 = vsel %vm852, %v857, %v856
      %vm859 = vcmp.ne.s32.totalorder %v809, 0
      %vm860 = vcmp.ne.s32.totalorder %v816, 0
      %vm861 = vcmp.ne.s32.totalorder %v823, 0
      %vm862 = vcmp.ne.s32.totalorder %v830, 0
      %vm863 = vcmp.ne.s32.totalorder %v837, 0
      %vm864 = vcmp.ne.s32.totalorder %v844, 0
      %vm865 = vcmp.ne.s32.totalorder %v851, 0
      %vm866 = vcmp.ne.s32.totalorder %v858, 0
      %vm867 = vcmp.lt.s32.totalorder %v809, 0
      %vm868 = vcmp.lt.s32.totalorder %v816, 0
      %vm869 = vcmp.lt.s32.totalorder %v823, 0
      %vm870 = vcmp.lt.s32.totalorder %v830, 0
      %vm871 = vcmp.lt.s32.totalorder %v837, 0
      %vm872 = vcmp.lt.s32.totalorder %v844, 0
      %vm873 = vcmp.lt.s32.totalorder %v851, 0
      %vm874 = vcmp.lt.s32.totalorder %v858, 0
      %vm875 = vmand %vm867, %vm859
      %vm876 = vmand %vm868, %vm860
      %vm877 = vmand %vm869, %vm861
      %vm878 = vmand %vm870, %vm862
      %vm879 = vmand %vm871, %vm863
      %vm880 = vmand %vm872, %vm864
      %vm881 = vmand %vm873, %vm865
      %vm882 = vmand %vm874, %vm866
      %v883 = vadd.s32 %v809, 32
      %v884 = vadd.s32 %v816, 32
      %v885 = vadd.s32 %v823, 32
      %v886 = vadd.s32 %v830, 32
      %v887 = vadd.s32 %v837, 32
      %v888 = vadd.s32 %v844, 32
      %v889 = vadd.s32 %v851, 32
      %v890 = vadd.s32 %v858, 32
      %v891 = vsel %vm875, %v883, %v809
      %v892 = vsel %vm876, %v884, %v816
      %v893 = vsel %vm877, %v885, %v823
      %v894 = vsel %vm878, %v886, %v830
      %v895 = vsel %vm879, %v887, %v837
      %v896 = vsel %vm880, %v888, %v844
      %v897 = vsel %vm881, %v889, %v851
      %v898 = vsel %vm882, %v890, %v858
      %vm899 = vcmp.ne.s32.totalorder %v891, 0
      %vm900 = vcmp.ne.s32.totalorder %v892, 0
      %vm901 = vcmp.ne.s32.totalorder %v893, 0
      %vm902 = vcmp.ne.s32.totalorder %v894, 0
      %vm903 = vcmp.ne.s32.totalorder %v895, 0
      %vm904 = vcmp.ne.s32.totalorder %v896, 0
      %vm905 = vcmp.ne.s32.totalorder %v897, 0
      %vm906 = vcmp.ne.s32.totalorder %v898, 0
      %vm907 = vcmp.ne.s32.totalorder %v891, 31
      %vm908 = vcmp.ne.s32.totalorder %v892, 31
      %vm909 = vcmp.ne.s32.totalorder %v893, 31
      %vm910 = vcmp.ne.s32.totalorder %v894, 31
      %vm911 = vcmp.ne.s32.totalorder %v895, 31
      %vm912 = vcmp.ne.s32.totalorder %v896, 31
      %vm913 = vcmp.ne.s32.totalorder %v897, 31
      %vm914 = vcmp.ne.s32.totalorder %v898, 31
      %v915 = vld [vmem:[#allocation2] sm:$0xff]
      %v916 = vld [vmem:[#allocation2 + $0x8] sm:$0xff]
      %v917 = vld [vmem:[#allocation2 + $0x10] sm:$0xff]
      %v918 = vld [vmem:[#allocation2 + $0x18] sm:$0xff]
      %v919 = vld [vmem:[#allocation2 + $0x20] sm:$0xff]
      %v920 = vld [vmem:[#allocation2 + $0x28] sm:$0xff]
      %v921 = vld [vmem:[#allocation2 + $0x30] sm:$0xff]
      %v922 = vld [vmem:[#allocation2 + $0x38] sm:$0xff]
      %v923 = vld [vmem:[#allocation2 + $0x40] sm:$0xff]
      %v924 = vsel %vm899, 1, 0
      %v925 = vsel %vm900, 1, 0
      %v926 = vsel %vm901, 1, 0
      %v927 = vsel %vm902, 1, 0
      %v928 = vsel %vm903, 1, 0
      %v929 = vsel %vm904, 1, 0
      %v930 = vsel %vm905, 1, 0
      %v931 = vsel %vm906, 1, 0
      %vm932 = vcmp.eq.s32.totalorder %v924, 1
      %vm933 = vcmp.eq.s32.totalorder %v925, 1
      %vm934 = vcmp.eq.s32.totalorder %v926, 1
      %vm935 = vcmp.eq.s32.totalorder %v927, 1
      %vm936 = vcmp.eq.s32.totalorder %v928, 1
      %vm937 = vcmp.eq.s32.totalorder %v929, 1
      %vm938 = vcmp.eq.s32.totalorder %v930, 1
      %vm939 = vcmp.eq.s32.totalorder %v931, 1
      %949 = vrot.lane.b32.xlu0 %v915, 33
      %v950 = vpop.permute.xlu0 %949
      %951 = vrot.lane.b32.xlu0 %v916, 33
      %v952 = vpop.permute.xlu0 %951
      %953 = vrot.lane.b32.xlu0 %v917, 33
      %v954 = vpop.permute.xlu0 %953
      %955 = vrot.lane.b32.xlu0 %v918, 33
      %v956 = vpop.permute.xlu0 %955
      %957 = vrot.lane.b32.xlu0 %v919, 33
      %v958 = vpop.permute.xlu0 %957
      %959 = vrot.lane.b32.xlu0 %v920, 33
      %v960 = vpop.permute.xlu0 %959
      %961 = vrot.lane.b32.xlu0 %v921, 33
      %v962 = vpop.permute.xlu0 %961
      %963 = vrot.lane.b32.xlu0 %v922, 33
      %v964 = vpop.permute.xlu0 %963
      %965 = vrot.lane.b32.xlu0 %v923, 33
      %v966 = vpop.permute.xlu0 %965
      %vm967 = vcmask 269312
      %v968 = vsel %vm967, %v950, %v952
      %v969 = vsel %vm967, %v952, %v954
      %v970 = vsel %vm967, %v954, %v956
      %v971 = vsel %vm967, %v956, %v958
      %v972 = vsel %vm967, %v958, %v960
      %v973 = vsel %vm967, %v960, %v962
      %v974 = vsel %vm967, %v962, %v964
      %v975 = vsel %vm967, %v964, %v966
      %v984 = vsel %vm932, %v968, 0.0
      %v985 = vsel %vm933, %v969, 0.0
      %v986 = vsel %vm934, %v970, 0.0
      %v987 = vsel %vm935, %v971, 0.0
      %v988 = vsel %vm936, %v972, 0.0
      %v989 = vsel %vm937, %v973, 0.0
      %v990 = vsel %vm938, %v974, 0.0
      %v991 = vsel %vm939, %v975, 0.0
      %v992 = vsel %vm907, 1, 0
      %v993 = vsel %vm908, 1, 0
      %v994 = vsel %vm909, 1, 0
      %v995 = vsel %vm910, 1, 0
      %v996 = vsel %vm911, 1, 0
      %v997 = vsel %vm912, 1, 0
      %v998 = vsel %vm913, 1, 0
      %v999 = vsel %vm914, 1, 0
      %vm1000 = vcmp.eq.s32.totalorder %v992, 1
      %vm1001 = vcmp.eq.s32.totalorder %v993, 1
      %vm1002 = vcmp.eq.s32.totalorder %v994, 1
      %vm1003 = vcmp.eq.s32.totalorder %v995, 1
      %vm1004 = vcmp.eq.s32.totalorder %v996, 1
      %vm1005 = vcmp.eq.s32.totalorder %v997, 1
      %vm1006 = vcmp.eq.s32.totalorder %v998, 1
      %vm1007 = vcmp.eq.s32.totalorder %v999, 1
      %1008 = vrot.lane.b32.xlu0 %v915, 31
      %v1009 = vpop.permute.xlu0 %1008
      %1010 = vrot.lane.b32.xlu0 %v916, 31
      %v1011 = vpop.permute.xlu0 %1010
      %1012 = vrot.lane.b32.xlu0 %v917, 31
      %v1013 = vpop.permute.xlu0 %1012
      %1014 = vrot.lane.b32.xlu0 %v918, 31
      %v1015 = vpop.permute.xlu0 %1014
      %1016 = vrot.lane.b32.xlu0 %v919, 31
      %v1017 = vpop.permute.xlu0 %1016
      %1018 = vrot.lane.b32.xlu0 %v920, 31
      %v1019 = vpop.permute.xlu0 %1018
      %1020 = vrot.lane.b32.xlu0 %v921, 31
      %v1021 = vpop.permute.xlu0 %1020
      %1022 = vrot.lane.b32.xlu0 %v922, 31
      %v1023 = vpop.permute.xlu0 %1022
      %1024 = vrot.lane.b32.xlu0 %v923, 31
      %v1025 = vpop.permute.xlu0 %1024
      %vm1026 = vcmask 252928
      %v1027 = vsel %vm1026, %v1009, %v1011
      %v1028 = vsel %vm1026, %v1011, %v1013
      %v1029 = vsel %vm1026, %v1013, %v1015
      %v1030 = vsel %vm1026, %v1015, %v1017
      %v1031 = vsel %vm1026, %v1017, %v1019
      %v1032 = vsel %vm1026, %v1019, %v1021
      %v1033 = vsel %vm1026, %v1021, %v1023
      %v1034 = vsel %vm1026, %v1023, %v1025
      %v1043 = vsel %vm1000, %v1027, 0.0
      %v1044 = vsel %vm1001, %v1028, 0.0
      %v1045 = vsel %vm1002, %v1029, 0.0
      %v1046 = vsel %vm1003, %v1030, 0.0
      %v1047 = vsel %vm1004, %v1031, 0.0
      %v1048 = vsel %vm1005, %v1032, 0.0
      %v1049 = vsel %vm1006, %v1033, 0.0
      %v1050 = vsel %vm1007, %v1034, 0.0
      %1051 = vrot.lane.b32.xlu0 %v915, 1
      %v1052 = vpop.permute.xlu0 %1051
      %1053 = vrot.lane.b32.xlu0 %v916, 1
      %v1054 = vpop.permute.xlu0 %1053
      %1055 = vrot.lane.b32.xlu0 %v917, 1
      %v1056 = vpop.permute.xlu0 %1055
      %1057 = vrot.lane.b32.xlu0 %v918, 1
      %v1058 = vpop.permute.xlu0 %1057
      %1059 = vrot.lane.b32.xlu0 %v919, 1
      %v1060 = vpop.permute.xlu0 %1059
      %1061 = vrot.lane.b32.xlu0 %v920, 1
      %v1062 = vpop.permute.xlu0 %1061
      %1063 = vrot.lane.b32.xlu0 %v921, 1
      %v1064 = vpop.permute.xlu0 %1063
      %1065 = vrot.lane.b32.xlu0 %v922, 1
      %v1066 = vpop.permute.xlu0 %1065
      %1067 = vrot.lane.b32.xlu0 %v923, 1
      %v1068 = vpop.permute.xlu0 %1067
      %vm1069 = vcmask 7168
      %v1070 = vsel %vm1069, %v1052, %v1054
      %v1071 = vsel %vm1069, %v1054, %v1056
      %v1072 = vsel %vm1069, %v1056, %v1058
      %v1073 = vsel %vm1069, %v1058, %v1060
      %v1074 = vsel %vm1069, %v1060, %v1062
      %v1075 = vsel %vm1069, %v1062, %v1064
      %v1076 = vsel %vm1069, %v1064, %v1066
      %v1077 = vsel %vm1069, %v1066, %v1068
      %v1086 = vsel %vm932, %v1070, 0.0
      %v1087 = vsel %vm933, %v1071, 0.0
      %v1088 = vsel %vm934, %v1072, 0.0
      %v1089 = vsel %vm935, %v1073, 0.0
      %v1090 = vsel %vm936, %v1074, 0.0
      %v1091 = vsel %vm937, %v1075, 0.0
      %v1092 = vsel %vm938, %v1076, 0.0
      %v1093 = vsel %vm939, %v1077, 0.0
      %v1094 = vld [vmem:[#allocation2 + $0x8] sm:$0xff]
      %v1095 = vld [vmem:[#allocation2 + $0x10] sm:$0xff]
      %v1096 = vld [vmem:[#allocation2 + $0x18] sm:$0xff]
      %v1097 = vld [vmem:[#allocation2 + $0x20] sm:$0xff]
      %v1098 = vld [vmem:[#allocation2 + $0x28] sm:$0xff]
      %v1099 = vld [vmem:[#allocation2 + $0x30] sm:$0xff]
      %v1100 = vld [vmem:[#allocation2 + $0x38] sm:$0xff]
      %v1101 = vld [vmem:[#allocation2 + $0x40] sm:$0xff]
      %v1102 = vld [vmem:[#allocation2 + $0x48] sm:$0xff]
      %1112 = vrot.lane.b32.xlu0 %v1094, 127
      %v1113 = vpop.permute.xlu0 %1112
      %1114 = vrot.lane.b32.xlu0 %v1095, 127
      %v1115 = vpop.permute.xlu0 %1114
      %1116 = vrot.lane.b32.xlu0 %v1096, 127
      %v1117 = vpop.permute.xlu0 %1116
      %1118 = vrot.lane.b32.xlu0 %v1097, 127
      %v1119 = vpop.permute.xlu0 %1118
      %1120 = vrot.lane.b32.xlu0 %v1098, 127
      %v1121 = vpop.permute.xlu0 %1120
      %1122 = vrot.lane.b32.xlu0 %v1099, 127
      %v1123 = vpop.permute.xlu0 %1122
      %1124 = vrot.lane.b32.xlu0 %v1100, 127
      %v1125 = vpop.permute.xlu0 %1124
      %1126 = vrot.lane.b32.xlu0 %v1101, 127
      %v1127 = vpop.permute.xlu0 %1126
      %1128 = vrot.lane.b32.xlu0 %v1102, 127
      %v1129 = vpop.permute.xlu0 %1128
      %vm1130 = vcmask 1039360
      %v1131 = vsel %vm1130, %v1113, %v1115
      %v1132 = vsel %vm1130, %v1115, %v1117
      %v1133 = vsel %vm1130, %v1117, %v1119
      %v1134 = vsel %vm1130, %v1119, %v1121
      %v1135 = vsel %vm1130, %v1121, %v1123
      %v1136 = vsel %vm1130, %v1123, %v1125
      %v1137 = vsel %vm1130, %v1125, %v1127
      %v1138 = vsel %vm1130, %v1127, %v1129
      %v1147 = vsel %vm1000, %v1131, 0.0
      %v1148 = vsel %vm1001, %v1132, 0.0
      %v1149 = vsel %vm1002, %v1133, 0.0
      %v1150 = vsel %vm1003, %v1134, 0.0
      %v1151 = vsel %vm1004, %v1135, 0.0
      %v1152 = vsel %vm1005, %v1136, 0.0
      %v1153 = vsel %vm1006, %v1137, 0.0
      %v1154 = vsel %vm1007, %v1138, 0.0
      %1155 = vrot.lane.b32.xlu0 %v1094, 97
      %v1156 = vpop.permute.xlu0 %1155
      %1157 = vrot.lane.b32.xlu0 %v1095, 97
      %v1158 = vpop.permute.xlu0 %1157
      %1159 = vrot.lane.b32.xlu0 %v1096, 97
      %v1160 = vpop.permute.xlu0 %1159
      %1161 = vrot.lane.b32.xlu0 %v1097, 97
      %v1162 = vpop.permute.xlu0 %1161
      %1163 = vrot.lane.b32.xlu0 %v1098, 97
      %v1164 = vpop.permute.xlu0 %1163
      %1165 = vrot.lane.b32.xlu0 %v1099, 97
      %v1166 = vpop.permute.xlu0 %1165
      %1167 = vrot.lane.b32.xlu0 %v1100, 97
      %v1168 = vpop.permute.xlu0 %1167
      %1169 = vrot.lane.b32.xlu0 %v1101, 97
      %v1170 = vpop.permute.xlu0 %1169
      %1171 = vrot.lane.b32.xlu0 %v1102, 97
      %v1172 = vpop.permute.xlu0 %1171
      %vm1173 = vcmask 793600
      %v1174 = vsel %vm1173, %v1156, %v1158
      %v1175 = vsel %vm1173, %v1158, %v1160
      %v1176 = vsel %vm1173, %v1160, %v1162
      %v1177 = vsel %vm1173, %v1162, %v1164
      %v1178 = vsel %vm1173, %v1164, %v1166
      %v1179 = vsel %vm1173, %v1166, %v1168
      %v1180 = vsel %vm1173, %v1168, %v1170
      %v1181 = vsel %vm1173, %v1170, %v1172
      %v1190 = vsel %vm932, %v1174, 0.0
      %v1191 = vsel %vm933, %v1175, 0.0
      %v1192 = vsel %vm934, %v1176, 0.0
      %v1193 = vsel %vm935, %v1177, 0.0
      %v1194 = vsel %vm936, %v1178, 0.0
      %v1195 = vsel %vm937, %v1179, 0.0
      %v1196 = vsel %vm938, %v1180, 0.0
      %v1197 = vsel %vm939, %v1181, 0.0
      %1198 = vrot.lane.b32.xlu0 %v1094, 95
      %v1199 = vpop.permute.xlu0 %1198
      %1200 = vrot.lane.b32.xlu0 %v1095, 95
      %v1201 = vpop.permute.xlu0 %1200
      %1202 = vrot.lane.b32.xlu0 %v1096, 95
      %v1203 = vpop.permute.xlu0 %1202
      %1204 = vrot.lane.b32.xlu0 %v1097, 95
      %v1205 = vpop.permute.xlu0 %1204
      %1206 = vrot.lane.b32.xlu0 %v1098, 95
      %v1207 = vpop.permute.xlu0 %1206
      %1208 = vrot.lane.b32.xlu0 %v1099, 95
      %v1209 = vpop.permute.xlu0 %1208
      %1210 = vrot.lane.b32.xlu0 %v1100, 95
      %v1211 = vpop.permute.xlu0 %1210
      %1212 = vrot.lane.b32.xlu0 %v1101, 95
      %v1213 = vpop.permute.xlu0 %1212
      %1214 = vrot.lane.b32.xlu0 %v1102, 95
      %v1215 = vpop.permute.xlu0 %1214
      %vm1216 = vcmask 777216
      %v1217 = vsel %vm1216, %v1199, %v1201
      %v1218 = vsel %vm1216, %v1201, %v1203
      %v1219 = vsel %vm1216, %v1203, %v1205
      %v1220 = vsel %vm1216, %v1205, %v1207
      %v1221 = vsel %vm1216, %v1207, %v1209
      %v1222 = vsel %vm1216, %v1209, %v1211
      %v1223 = vsel %vm1216, %v1211, %v1213
      %v1224 = vsel %vm1216, %v1213, %v1215
      %v1233 = vsel %vm1000, %v1217, 0.0
      %v1234 = vsel %vm1001, %v1218, 0.0
      %v1235 = vsel %vm1002, %v1219, 0.0
      %v1236 = vsel %vm1003, %v1220, 0.0
      %v1237 = vsel %vm1004, %v1221, 0.0
      %v1238 = vsel %vm1005, %v1222, 0.0
      %v1239 = vsel %vm1006, %v1223, 0.0
      %v1240 = vsel %vm1007, %v1224, 0.0
      %1241 = vrot.lane.b32.xlu0 %v915, 32
      %v1242 = vpop.permute.xlu0 %1241
      %1243 = vrot.lane.b32.xlu0 %v916, 32
      %v1244 = vpop.permute.xlu0 %1243
      %1245 = vrot.lane.b32.xlu0 %v917, 32
      %v1246 = vpop.permute.xlu0 %1245
      %1247 = vrot.lane.b32.xlu0 %v918, 32
      %v1248 = vpop.permute.xlu0 %1247
      %1249 = vrot.lane.b32.xlu0 %v919, 32
      %v1250 = vpop.permute.xlu0 %1249
      %1251 = vrot.lane.b32.xlu0 %v920, 32
      %v1252 = vpop.permute.xlu0 %1251
      %1253 = vrot.lane.b32.xlu0 %v921, 32
      %v1254 = vpop.permute.xlu0 %1253
      %1255 = vrot.lane.b32.xlu0 %v922, 32
      %v1256 = vpop.permute.xlu0 %1255
      %1257 = vrot.lane.b32.xlu0 %v923, 32
      %v1258 = vpop.permute.xlu0 %1257
      %vm1259 = vcmask 261120
      %v1260 = vsel %vm1259, %v1242, %v1244
      %v1261 = vsel %vm1259, %v1244, %v1246
      %v1262 = vsel %vm1259, %v1246, %v1248
      %v1263 = vsel %vm1259, %v1248, %v1250
      %v1264 = vsel %vm1259, %v1250, %v1252
      %v1265 = vsel %vm1259, %v1252, %v1254
      %v1266 = vsel %vm1259, %v1254, %v1256
      %v1267 = vsel %vm1259, %v1256, %v1258
      %1276 = vrot.lane.b32.xlu0 %v1094, 96
      %v1277 = vpop.permute.xlu0 %1276
      %1278 = vrot.lane.b32.xlu0 %v1095, 96
      %v1279 = vpop.permute.xlu0 %1278
      %1280 = vrot.lane.b32.xlu0 %v1096, 96
      %v1281 = vpop.permute.xlu0 %1280
      %1282 = vrot.lane.b32.xlu0 %v1097, 96
      %v1283 = vpop.permute.xlu0 %1282
      %1284 = vrot.lane.b32.xlu0 %v1098, 96
      %v1285 = vpop.permute.xlu0 %1284
      %1286 = vrot.lane.b32.xlu0 %v1099, 96
      %v1287 = vpop.permute.xlu0 %1286
      %1288 = vrot.lane.b32.xlu0 %v1100, 96
      %v1289 = vpop.permute.xlu0 %1288
      %1290 = vrot.lane.b32.xlu0 %v1101, 96
      %v1291 = vpop.permute.xlu0 %1290
      %1292 = vrot.lane.b32.xlu0 %v1102, 96
      %v1293 = vpop.permute.xlu0 %1292
      %vm1294 = vcmask 785408
      %v1295 = vsel %vm1294, %v1277, %v1279
      %v1296 = vsel %vm1294, %v1279, %v1281
      %v1297 = vsel %vm1294, %v1281, %v1283
      %v1298 = vsel %vm1294, %v1283, %v1285
      %v1299 = vsel %vm1294, %v1285, %v1287
      %v1300 = vsel %vm1294, %v1287, %v1289
      %v1301 = vsel %vm1294, %v1289, %v1291
      %v1302 = vsel %vm1294, %v1291, %v1293
      %1312 = vset.pattern.permute.xlu0 0
      %1313 = vperm.xlu0 %1312, %v785
      %v1314 = vpop.permute.xlu0 %1313
      %vm1316 = vcmask 588800
      %v1318 = vsel %vm1316, %v784, 0
      %1320 = vmatpush.msra.mxu0 0.0
      %1321 = vmatpush.msra.mxu0 0.0
      %1322 = vmatpush.msra.mxu0 0.0
      %1323 = vmatpush.msra.mxu0 0.0
      %1324 = vmatpush.msra.mxu0 0.0
      %1325 = vmatpush.msra.mxu0 0.0
      %1326 = vmatpush.msra.mxu0 0.0
      %1327 = vmatpush.msra.mxu0 %v1233
      %1328 = vmatpush.msra.mxu0 %v1295
      %1329 = vmatpush.msra.mxu0 %v1190
      %1330 = vmatpush.msra.mxu0 %v1147
      %1331 = vmatpush.msra.mxu0 %v916
      %1332 = vmatpush.msra.mxu0 %v1086
      %1333 = vmatpush.msra.mxu0 %v1043
      %1334 = vmatpush.msra.mxu0 %v1260
      %1335 = vmatpush.msra.mxu0 %v984
      %1336 = vmatmul.f32.gmra.mxu0 %v1318
      %v1337 = vpop.f32.mrf.mxu0
      %v1338 = vadd.f32 %v1314, %v1337
      %1339 = vdwg.mxu0
      %1340 = vmatpush.msra.mxu0 0.0
      %1341 = vmatpush.msra.mxu0 0.0
      %1342 = vmatpush.msra.mxu0 0.0
      %1343 = vmatpush.msra.mxu0 0.0
      %1344 = vmatpush.msra.mxu0 0.0
      %1345 = vmatpush.msra.mxu0 0.0
      %1346 = vmatpush.msra.mxu0 0.0
      %1347 = vmatpush.msra.mxu0 %v1234
      %1348 = vmatpush.msra.mxu0 %v1296
      %1349 = vmatpush.msra.mxu0 %v1191
      %1350 = vmatpush.msra.mxu0 %v1148
      %1351 = vmatpush.msra.mxu0 %v917
      %1352 = vmatpush.msra.mxu0 %v1087
      %1353 = vmatpush.msra.mxu0 %v1044
      %1354 = vmatpush.msra.mxu0 %v1261
      %1355 = vmatpush.msra.mxu0 %v985
      %1356 = vmatmul.f32.gmra.mxu0 %v1318
      %v1357 = vpop.f32.mrf.mxu0
      %v1358 = vadd.f32 %v1314, %v1357
      %1359 = vdwg.mxu0
      %1360 = vmatpush.msra.mxu0 0.0
      %1361 = vmatpush.msra.mxu0 0.0
      %1362 = vmatpush.msra.mxu0 0.0
      %1363 = vmatpush.msra.mxu0 0.0
      %1364 = vmatpush.msra.mxu0 0.0
      %1365 = vmatpush.msra.mxu0 0.0
      %1366 = vmatpush.msra.mxu0 0.0
      %1367 = vmatpush.msra.mxu0 %v1235
      %1368 = vmatpush.msra.mxu0 %v1297
      %1369 = vmatpush.msra.mxu0 %v1192
      %1370 = vmatpush.msra.mxu0 %v1149
      %1371 = vmatpush.msra.mxu0 %v918
      %1372 = vmatpush.msra.mxu0 %v1088
      %1373 = vmatpush.msra.mxu0 %v1045
      %1374 = vmatpush.msra.mxu0 %v1262
      %1375 = vmatpush.msra.mxu0 %v986
      %1376 = vmatmul.f32.gmra.mxu0 %v1318
      %v1377 = vpop.f32.mrf.mxu0
      %v1378 = vadd.f32 %v1314, %v1377
      %1379 = vdwg.mxu0
      %1380 = vmatpush.msra.mxu0 0.0
      %1381 = vmatpush.msra.mxu0 0.0
      %1382 = vmatpush.msra.mxu0 0.0
      %1383 = vmatpush.msra.mxu0 0.0
      %1384 = vmatpush.msra.mxu0 0.0
      %1385 = vmatpush.msra.mxu0 0.0
      %1386 = vmatpush.msra.mxu0 0.0
      %1387 = vmatpush.msra.mxu0 %v1236
      %1388 = vmatpush.msra.mxu0 %v1298
      %1389 = vmatpush.msra.mxu0 %v1193
      %1390 = vmatpush.msra.mxu0 %v1150
      %1391 = vmatpush.msra.mxu0 %v919
      %1392 = vmatpush.msra.mxu0 %v1089
      %1393 = vmatpush.msra.mxu0 %v1046
      %1394 = vmatpush.msra.mxu0 %v1263
      %1395 = vmatpush.msra.mxu0 %v987
      %1396 = vmatmul.f32.gmra.mxu0 %v1318
      %v1397 = vpop.f32.mrf.mxu0
      %v1398 = vadd.f32 %v1314, %v1397
      %1399 = vdwg.mxu0
      %1400 = vmatpush.msra.mxu0 0.0
      %1401 = vmatpush.msra.mxu0 0.0
      %1402 = vmatpush.msra.mxu0 0.0
      %1403 = vmatpush.msra.mxu0 0.0
      %1404 = vmatpush.msra.mxu0 0.0
      %1405 = vmatpush.msra.mxu0 0.0
      %1406 = vmatpush.msra.mxu0 0.0
      %1407 = vmatpush.msra.mxu0 %v1237
      %1408 = vmatpush.msra.mxu0 %v1299
      %1409 = vmatpush.msra.mxu0 %v1194
      %1410 = vmatpush.msra.mxu0 %v1151
      %1411 = vmatpush.msra.mxu0 %v920
      %1412 = vmatpush.msra.mxu0 %v1090
      %1413 = vmatpush.msra.mxu0 %v1047
      %1414 = vmatpush.msra.mxu0 %v1264
      %1415 = vmatpush.msra.mxu0 %v988
      %1416 = vmatmul.f32.gmra.mxu0 %v1318
      %v1417 = vpop.f32.mrf.mxu0
      %v1418 = vadd.f32 %v1314, %v1417
      %1419 = vdwg.mxu0
      %1420 = vmatpush.msra.mxu0 0.0
      %1421 = vmatpush.msra.mxu0 0.0
      %1422 = vmatpush.msra.mxu0 0.0
      %1423 = vmatpush.msra.mxu0 0.0
      %1424 = vmatpush.msra.mxu0 0.0
      %1425 = vmatpush.msra.mxu0 0.0
      %1426 = vmatpush.msra.mxu0 0.0
      %1427 = vmatpush.msra.mxu0 %v1238
      %1428 = vmatpush.msra.mxu0 %v1300
      %1429 = vmatpush.msra.mxu0 %v1195
      %1430 = vmatpush.msra.mxu0 %v1152
      %1431 = vmatpush.msra.mxu0 %v921
      %1432 = vmatpush.msra.mxu0 %v1091
      %1433 = vmatpush.msra.mxu0 %v1048
      %1434 = vmatpush.msra.mxu0 %v1265
      %1435 = vmatpush.msra.mxu0 %v989
      %1436 = vmatmul.f32.gmra.mxu0 %v1318
      %v1437 = vpop.f32.mrf.mxu0
      %v1438 = vadd.f32 %v1314, %v1437
      %1439 = vdwg.mxu0
      %1440 = vmatpush.msra.mxu0 0.0
      %1441 = vmatpush.msra.mxu0 0.0
      %1442 = vmatpush.msra.mxu0 0.0
      %1443 = vmatpush.msra.mxu0 0.0
      %1444 = vmatpush.msra.mxu0 0.0
      %1445 = vmatpush.msra.mxu0 0.0
      %1446 = vmatpush.msra.mxu0 0.0
      %1447 = vmatpush.msra.mxu0 %v1239
      %1448 = vmatpush.msra.mxu0 %v1301
      %1449 = vmatpush.msra.mxu0 %v1196
      %1450 = vmatpush.msra.mxu0 %v1153
      %1451 = vmatpush.msra.mxu0 %v922
      %1452 = vmatpush.msra.mxu0 %v1092
      %1453 = vmatpush.msra.mxu0 %v1049
      %1454 = vmatpush.msra.mxu0 %v1266
      %1455 = vmatpush.msra.mxu0 %v990
      %1456 = vmatmul.f32.gmra.mxu0 %v1318
      %v1457 = vpop.f32.mrf.mxu0
      %v1458 = vadd.f32 %v1314, %v1457
      %1459 = vdwg.mxu0
      %1460 = vmatpush.msra.mxu0 0.0
      %1461 = vmatpush.msra.mxu0 0.0
      %1462 = vmatpush.msra.mxu0 0.0
      %1463 = vmatpush.msra.mxu0 0.0
      %1464 = vmatpush.msra.mxu0 0.0
      %1465 = vmatpush.msra.mxu0 0.0
      %1466 = vmatpush.msra.mxu0 0.0
      %1467 = vmatpush.msra.mxu0 %v1240
      %1468 = vmatpush.msra.mxu0 %v1302
      %1469 = vmatpush.msra.mxu0 %v1197
      %1470 = vmatpush.msra.mxu0 %v1154
      %1471 = vmatpush.msra.mxu0 %v923
      %1472 = vmatpush.msra.mxu0 %v1093
      %1473 = vmatpush.msra.mxu0 %v1050
      %1474 = vmatpush.msra.mxu0 %v1267
      %1475 = vmatpush.msra.mxu0 %v991
      %1476 = vmatmul.f32.gmra.mxu0 %v1318
      %v1477 = vpop.f32.mrf.mxu0
      %v1478 = vadd.f32 %v1314, %v1477
      %1479 = vdwg.mxu0
      %v1480 = vmax.f32 %v1338, 0.0
      %v1481 = vmax.f32 %v1358, 0.0
      %v1482 = vmax.f32 %v1378, 0.0
      %v1483 = vmax.f32 %v1398, 0.0
      %v1484 = vmax.f32 %v1418, 0.0
      %v1485 = vmax.f32 %v1438, 0.0
      %v1486 = vmax.f32 %v1458, 0.0
      %v1487 = vmax.f32 %v1478, 0.0
      %v1488 = vmin.f32 %v1480, 6.0
      %v1489 = vmin.f32 %v1481, 6.0
      %v1490 = vmin.f32 %v1482, 6.0
      %v1491 = vmin.f32 %v1483, 6.0
      %v1492 = vmin.f32 %v1484, 6.0
      %v1493 = vmin.f32 %v1485, 6.0
      %v1494 = vmin.f32 %v1486, 6.0
      %v1495 = vmin.f32 %v1487, 6.0
      %v1496 = vld [vmem:[%s7] sm:$0xff]
      %v1497 = vld [vmem:[%s8] sm:$0xff]
      %1499 = vset.pattern.permute.xlu0 0
      %1500 = vperm.xlu0 %1499, %v1497
      %v1501 = vpop.permute.xlu0 %1500
      %v1504 = vsel %vm427, %v1496, 0
      %1506 = vmatpush.msra.mxu0 0.0
      %1507 = vmatpush.msra.mxu0 0.0
      %1508 = vmatpush.msra.mxu0 0.0
      %1509 = vmatpush.msra.mxu0 0.0
      %1510 = vmatpush.msra.mxu0 0.0
      %1511 = vmatpush.msra.mxu0 0.0
      %1512 = vmatpush.msra.mxu0 0.0
      %1513 = vmatpush.msra.mxu0 0.0
      %1514 = vmatpush.msra.mxu0 0.0
      %1515 = vmatpush.msra.mxu0 0.0
      %1516 = vmatpush.msra.mxu0 0.0
      %1517 = vmatpush.msra.mxu0 0.0
      %1518 = vmatpush.msra.mxu0 0.0
      %1519 = vmatpush.msra.mxu0 0.0
      %1520 = vmatpush.msra.mxu0 0.0
      %1521 = vmatpush.msra.mxu0 %v1488
      %1522 = vmatmul.f32.gmra.mxu0 %v1504
      %v1523 = vpop.f32.mrf.mxu0
      %v1524 = vadd.f32 %v1501, %v1523
      %1525 = vdwg.mxu0
      %1526 = vmatpush.msra.mxu0 0.0
      %1527 = vmatpush.msra.mxu0 0.0
      %1528 = vmatpush.msra.mxu0 0.0
      %1529 = vmatpush.msra.mxu0 0.0
      %1530 = vmatpush.msra.mxu0 0.0
      %1531 = vmatpush.msra.mxu0 0.0
      %1532 = vmatpush.msra.mxu0 0.0
      %1533 = vmatpush.msra.mxu0 0.0
      %1534 = vmatpush.msra.mxu0 0.0
      %1535 = vmatpush.msra.mxu0 0.0
      %1536 = vmatpush.msra.mxu0 0.0
      %1537 = vmatpush.msra.mxu0 0.0
      %1538 = vmatpush.msra.mxu0 0.0
      %1539 = vmatpush.msra.mxu0 0.0
      %1540 = vmatpush.msra.mxu0 0.0
      %1541 = vmatpush.msra.mxu0 %v1489
      %1542 = vmatmul.f32.gmra.mxu0 %v1504
      %v1543 = vpop.f32.mrf.mxu0
      %v1544 = vadd.f32 %v1501, %v1543
      %1545 = vdwg.mxu0
      %1546 = vmatpush.msra.mxu0 0.0
      %1547 = vmatpush.msra.mxu0 0.0
      %1548 = vmatpush.msra.mxu0 0.0
      %1549 = vmatpush.msra.mxu0 0.0
      %1550 = vmatpush.msra.mxu0 0.0
      %1551 = vmatpush.msra.mxu0 0.0
      %1552 = vmatpush.msra.mxu0 0.0
      %1553 = vmatpush.msra.mxu0 0.0
      %1554 = vmatpush.msra.mxu0 0.0
      %1555 = vmatpush.msra.mxu0 0.0
      %1556 = vmatpush.msra.mxu0 0.0
      %1557 = vmatpush.msra.mxu0 0.0
      %1558 = vmatpush.msra.mxu0 0.0
      %1559 = vmatpush.msra.mxu0 0.0
      %1560 = vmatpush.msra.mxu0 0.0
      %1561 = vmatpush.msra.mxu0 %v1490
      %1562 = vmatmul.f32.gmra.mxu0 %v1504
      %v1563 = vpop.f32.mrf.mxu0
      %v1564 = vadd.f32 %v1501, %v1563
      %1565 = vdwg.mxu0
      %1566 = vmatpush.msra.mxu0 0.0
      %1567 = vmatpush.msra.mxu0 0.0
      %1568 = vmatpush.msra.mxu0 0.0
      %1569 = vmatpush.msra.mxu0 0.0
      %1570 = vmatpush.msra.mxu0 0.0
      %1571 = vmatpush.msra.mxu0 0.0
      %1572 = vmatpush.msra.mxu0 0.0
      %1573 = vmatpush.msra.mxu0 0.0
      %1574 = vmatpush.msra.mxu0 0.0
      %1575 = vmatpush.msra.mxu0 0.0
      %1576 = vmatpush.msra.mxu0 0.0
      %1577 = vmatpush.msra.mxu0 0.0
      %1578 = vmatpush.msra.mxu0 0.0
      %1579 = vmatpush.msra.mxu0 0.0
      %1580 = vmatpush.msra.mxu0 0.0
      %1581 = vmatpush.msra.mxu0 %v1491
      %1582 = vmatmul.f32.gmra.mxu0 %v1504
      %v1583 = vpop.f32.mrf.mxu0
      %v1584 = vadd.f32 %v1501, %v1583
      %1585 = vdwg.mxu0
      %1586 = vmatpush.msra.mxu0 0.0
      %1587 = vmatpush.msra.mxu0 0.0
      %1588 = vmatpush.msra.mxu0 0.0
      %1589 = vmatpush.msra.mxu0 0.0
      %1590 = vmatpush.msra.mxu0 0.0
      %1591 = vmatpush.msra.mxu0 0.0
      %1592 = vmatpush.msra.mxu0 0.0
      %1593 = vmatpush.msra.mxu0 0.0
      %1594 = vmatpush.msra.mxu0 0.0
      %1595 = vmatpush.msra.mxu0 0.0
      %1596 = vmatpush.msra.mxu0 0.0
      %1597 = vmatpush.msra.mxu0 0.0
      %1598 = vmatpush.msra.mxu0 0.0
      %1599 = vmatpush.msra.mxu0 0.0
      %1600 = vmatpush.msra.mxu0 0.0
      %1601 = vmatpush.msra.mxu0 %v1492
      %1602 = vmatmul.f32.gmra.mxu0 %v1504
      %v1603 = vpop.f32.mrf.mxu0
      %v1604 = vadd.f32 %v1501, %v1603
      %1605 = vdwg.mxu0
      %1606 = vmatpush.msra.mxu0 0.0
      %1607 = vmatpush.msra.mxu0 0.0
      %1608 = vmatpush.msra.mxu0 0.0
      %1609 = vmatpush.msra.mxu0 0.0
      %1610 = vmatpush.msra.mxu0 0.0
      %1611 = vmatpush.msra.mxu0 0.0
      %1612 = vmatpush.msra.mxu0 0.0
      %1613 = vmatpush.msra.mxu0 0.0
      %1614 = vmatpush.msra.mxu0 0.0
      %1615 = vmatpush.msra.mxu0 0.0
      %1616 = vmatpush.msra.mxu0 0.0
      %1617 = vmatpush.msra.mxu0 0.0
      %1618 = vmatpush.msra.mxu0 0.0
      %1619 = vmatpush.msra.mxu0 0.0
      %1620 = vmatpush.msra.mxu0 0.0
      %1621 = vmatpush.msra.mxu0 %v1493
      %1622 = vmatmul.f32.gmra.mxu0 %v1504
      %v1623 = vpop.f32.mrf.mxu0
      %v1624 = vadd.f32 %v1501, %v1623
      %1625 = vdwg.mxu0
      %1626 = vmatpush.msra.mxu0 0.0
      %1627 = vmatpush.msra.mxu0 0.0
      %1628 = vmatpush.msra.mxu0 0.0
      %1629 = vmatpush.msra.mxu0 0.0
      %1630 = vmatpush.msra.mxu0 0.0
      %1631 = vmatpush.msra.mxu0 0.0
      %1632 = vmatpush.msra.mxu0 0.0
      %1633 = vmatpush.msra.mxu0 0.0
      %1634 = vmatpush.msra.mxu0 0.0
      %1635 = vmatpush.msra.mxu0 0.0
      %1636 = vmatpush.msra.mxu0 0.0
      %1637 = vmatpush.msra.mxu0 0.0
      %1638 = vmatpush.msra.mxu0 0.0
      %1639 = vmatpush.msra.mxu0 0.0
      %1640 = vmatpush.msra.mxu0 0.0
      %1641 = vmatpush.msra.mxu0 %v1494
      %1642 = vmatmul.f32.gmra.mxu0 %v1504
      %v1643 = vpop.f32.mrf.mxu0
      %v1644 = vadd.f32 %v1501, %v1643
      %1645 = vdwg.mxu0
      %1646 = vmatpush.msra.mxu0 0.0
      %1647 = vmatpush.msra.mxu0 0.0
      %1648 = vmatpush.msra.mxu0 0.0
      %1649 = vmatpush.msra.mxu0 0.0
      %1650 = vmatpush.msra.mxu0 0.0
      %1651 = vmatpush.msra.mxu0 0.0
      %1652 = vmatpush.msra.mxu0 0.0
      %1653 = vmatpush.msra.mxu0 0.0
      %1654 = vmatpush.msra.mxu0 0.0
      %1655 = vmatpush.msra.mxu0 0.0
      %1656 = vmatpush.msra.mxu0 0.0
      %1657 = vmatpush.msra.mxu0 0.0
      %1658 = vmatpush.msra.mxu0 0.0
      %1659 = vmatpush.msra.mxu0 0.0
      %1660 = vmatpush.msra.mxu0 0.0
      %1661 = vmatpush.msra.mxu0 %v1495
      %1662 = vmatmul.f32.gmra.mxu0 %v1504
      %v1663 = vpop.f32.mrf.mxu0
      %v1664 = vadd.f32 %v1501, %v1663
      %1665 = vdwg.mxu0
      %v1666 = vmax.f32 %v1524, 0.0
      %v1667 = vmax.f32 %v1544, 0.0
      %v1668 = vmax.f32 %v1564, 0.0
      %v1669 = vmax.f32 %v1584, 0.0
      %v1670 = vmax.f32 %v1604, 0.0
      %v1671 = vmax.f32 %v1624, 0.0
      %v1672 = vmax.f32 %v1644, 0.0
      %v1673 = vmax.f32 %v1664, 0.0
      %v1674 = vmin.f32 %v1666, 6.0
      %v1675 = vmin.f32 %v1667, 6.0
      %v1676 = vmin.f32 %v1668, 6.0
      %v1677 = vmin.f32 %v1669, 6.0
      %v1678 = vmin.f32 %v1670, 6.0
      %v1679 = vmin.f32 %v1671, 6.0
      %v1680 = vmin.f32 %v1672, 6.0
      %v1681 = vmin.f32 %v1673, 6.0
      %v1682 = vld [vmem:[%s9] sm:$0xff]
      %v1683 = vld [vmem:[%s10] sm:$0xff]
      %1684 = vst [vmem:[#allocation2 + $0x8] sm:$0xff] %v1674
      %1685 = vst [vmem:[#allocation2 + $0x10] sm:$0xff] %v1675
      %1686 = vst [vmem:[#allocation2 + $0x18] sm:$0xff] %v1676
      %1687 = vst [vmem:[#allocation2 + $0x20] sm:$0xff] %v1677
      %1688 = vst [vmem:[#allocation2 + $0x28] sm:$0xff] %v1678
      %1689 = vst [vmem:[#allocation2 + $0x30] sm:$0xff] %v1679
      %1690 = vst [vmem:[#allocation2 + $0x38] sm:$0xff] %v1680
      %1691 = vst [vmem:[#allocation2 + $0x40] sm:$0xff] %v1681
      %v1692 = vld [vmem:[#allocation2] sm:$0xff]
      %v1693 = vld [vmem:[#allocation2 + $0x8] sm:$0xff]
      %v1694 = vld [vmem:[#allocation2 + $0x10] sm:$0xff]
      %v1695 = vld [vmem:[#allocation2 + $0x18] sm:$0xff]
      %v1696 = vld [vmem:[#allocation2 + $0x20] sm:$0xff]
      %v1697 = vld [vmem:[#allocation2 + $0x28] sm:$0xff]
      %v1698 = vld [vmem:[#allocation2 + $0x30] sm:$0xff]
      %v1699 = vld [vmem:[#allocation2 + $0x38] sm:$0xff]
      %v1700 = vld [vmem:[#allocation2 + $0x40] sm:$0xff]
      %1710 = vrot.lane.b32.xlu0 %v1692, 33
      %v1711 = vpop.permute.xlu0 %1710
      %1712 = vrot.lane.b32.xlu0 %v1693, 33
      %v1713 = vpop.permute.xlu0 %1712
      %1714 = vrot.lane.b32.xlu0 %v1694, 33
      %v1715 = vpop.permute.xlu0 %1714
      %1716 = vrot.lane.b32.xlu0 %v1695, 33
      %v1717 = vpop.permute.xlu0 %1716
      %1718 = vrot.lane.b32.xlu0 %v1696, 33
      %v1719 = vpop.permute.xlu0 %1718
      %1720 = vrot.lane.b32.xlu0 %v1697, 33
      %v1721 = vpop.permute.xlu0 %1720
      %1722 = vrot.lane.b32.xlu0 %v1698, 33
      %v1723 = vpop.permute.xlu0 %1722
      %1724 = vrot.lane.b32.xlu0 %v1699, 33
      %v1725 = vpop.permute.xlu0 %1724
      %1726 = vrot.lane.b32.xlu0 %v1700, 33
      %v1727 = vpop.permute.xlu0 %1726
      %v1728 = vsel %vm967, %v1711, %v1713
      %v1729 = vsel %vm967, %v1713, %v1715
      %v1730 = vsel %vm967, %v1715, %v1717
      %v1731 = vsel %vm967, %v1717, %v1719
      %v1732 = vsel %vm967, %v1719, %v1721
      %v1733 = vsel %vm967, %v1721, %v1723
      %v1734 = vsel %vm967, %v1723, %v1725
      %v1735 = vsel %vm967, %v1725, %v1727
      %v1744 = vsel %vm932, %v1728, 0.0
      %v1745 = vsel %vm933, %v1729, 0.0
      %v1746 = vsel %vm934, %v1730, 0.0
      %v1747 = vsel %vm935, %v1731, 0.0
      %v1748 = vsel %vm936, %v1732, 0.0
      %v1749 = vsel %vm937, %v1733, 0.0
      %v1750 = vsel %vm938, %v1734, 0.0
      %v1751 = vsel %vm939, %v1735, 0.0
      %1752 = vrot.lane.b32.xlu0 %v1692, 31
      %v1753 = vpop.permute.xlu0 %1752
      %1754 = vrot.lane.b32.xlu0 %v1693, 31
      %v1755 = vpop.permute.xlu0 %1754
      %1756 = vrot.lane.b32.xlu0 %v1694, 31
      %v1757 = vpop.permute.xlu0 %1756
      %1758 = vrot.lane.b32.xlu0 %v1695, 31
      %v1759 = vpop.permute.xlu0 %1758
      %1760 = vrot.lane.b32.xlu0 %v1696, 31
      %v1761 = vpop.permute.xlu0 %1760
      %1762 = vrot.lane.b32.xlu0 %v1697, 31
      %v1763 = vpop.permute.xlu0 %1762
      %1764 = vrot.lane.b32.xlu0 %v1698, 31
      %v1765 = vpop.permute.xlu0 %1764
      %1766 = vrot.lane.b32.xlu0 %v1699, 31
      %v1767 = vpop.permute.xlu0 %1766
      %1768 = vrot.lane.b32.xlu0 %v1700, 31
      %v1769 = vpop.permute.xlu0 %1768
      %v1770 = vsel %vm1026, %v1753, %v1755
      %v1771 = vsel %vm1026, %v1755, %v1757
      %v1772 = vsel %vm1026, %v1757, %v1759
      %v1773 = vsel %vm1026, %v1759, %v1761
      %v1774 = vsel %vm1026, %v1761, %v1763
      %v1775 = vsel %vm1026, %v1763, %v1765
      %v1776 = vsel %vm1026, %v1765, %v1767
      %v1777 = vsel %vm1026, %v1767, %v1769
      %v1786 = vsel %vm1000, %v1770, 0.0
      %v1787 = vsel %vm1001, %v1771, 0.0
      %v1788 = vsel %vm1002, %v1772, 0.0
      %v1789 = vsel %vm1003, %v1773, 0.0
      %v1790 = vsel %vm1004, %v1774, 0.0
      %v1791 = vsel %vm1005, %v1775, 0.0
      %v1792 = vsel %vm1006, %v1776, 0.0
      %v1793 = vsel %vm1007, %v1777, 0.0
      %1794 = vrot.lane.b32.xlu0 %v1692, 1
      %v1795 = vpop.permute.xlu0 %1794
      %1796 = vrot.lane.b32.xlu0 %v1693, 1
      %v1797 = vpop.permute.xlu0 %1796
      %1798 = vrot.lane.b32.xlu0 %v1694, 1
      %v1799 = vpop.permute.xlu0 %1798
      %1800 = vrot.lane.b32.xlu0 %v1695, 1
      %v1801 = vpop.permute.xlu0 %1800
      %1802 = vrot.lane.b32.xlu0 %v1696, 1
      %v1803 = vpop.permute.xlu0 %1802
      %1804 = vrot.lane.b32.xlu0 %v1697, 1
      %v1805 = vpop.permute.xlu0 %1804
      %1806 = vrot.lane.b32.xlu0 %v1698, 1
      %v1807 = vpop.permute.xlu0 %1806
      %1808 = vrot.lane.b32.xlu0 %v1699, 1
      %v1809 = vpop.permute.xlu0 %1808
      %1810 = vrot.lane.b32.xlu0 %v1700, 1
      %v1811 = vpop.permute.xlu0 %1810
      %v1812 = vsel %vm1069, %v1795, %v1797
      %v1813 = vsel %vm1069, %v1797, %v1799
      %v1814 = vsel %vm1069, %v1799, %v1801
      %v1815 = vsel %vm1069, %v1801, %v1803
      %v1816 = vsel %vm1069, %v1803, %v1805
      %v1817 = vsel %vm1069, %v1805, %v1807
      %v1818 = vsel %vm1069, %v1807, %v1809
      %v1819 = vsel %vm1069, %v1809, %v1811
      %v1828 = vsel %vm932, %v1812, 0.0
      %v1829 = vsel %vm933, %v1813, 0.0
      %v1830 = vsel %vm934, %v1814, 0.0
      %v1831 = vsel %vm935, %v1815, 0.0
      %v1832 = vsel %vm936, %v1816, 0.0
      %v1833 = vsel %vm937, %v1817, 0.0
      %v1834 = vsel %vm938, %v1818, 0.0
      %v1835 = vsel %vm939, %v1819, 0.0
      %v1836 = vld [vmem:[#allocation2 + $0x8] sm:$0xff]
      %v1837 = vld [vmem:[#allocation2 + $0x10] sm:$0xff]
      %v1838 = vld [vmem:[#allocation2 + $0x18] sm:$0xff]
      %v1839 = vld [vmem:[#allocation2 + $0x20] sm:$0xff]
      %v1840 = vld [vmem:[#allocation2 + $0x28] sm:$0xff]
      %v1841 = vld [vmem:[#allocation2 + $0x30] sm:$0xff]
      %v1842 = vld [vmem:[#allocation2 + $0x38] sm:$0xff]
      %v1843 = vld [vmem:[#allocation2 + $0x40] sm:$0xff]
      %v1844 = vld [vmem:[#allocation2 + $0x48] sm:$0xff]
      %1854 = vrot.lane.b32.xlu0 %v1836, 127
      %v1855 = vpop.permute.xlu0 %1854
      %1856 = vrot.lane.b32.xlu0 %v1837, 127
      %v1857 = vpop.permute.xlu0 %1856
      %1858 = vrot.lane.b32.xlu0 %v1838, 127
      %v1859 = vpop.permute.xlu0 %1858
      %1860 = vrot.lane.b32.xlu0 %v1839, 127
      %v1861 = vpop.permute.xlu0 %1860
      %1862 = vrot.lane.b32.xlu0 %v1840, 127
      %v1863 = vpop.permute.xlu0 %1862
      %1864 = vrot.lane.b32.xlu0 %v1841, 127
      %v1865 = vpop.permute.xlu0 %1864
      %1866 = vrot.lane.b32.xlu0 %v1842, 127
      %v1867 = vpop.permute.xlu0 %1866
      %1868 = vrot.lane.b32.xlu0 %v1843, 127
      %v1869 = vpop.permute.xlu0 %1868
      %1870 = vrot.lane.b32.xlu0 %v1844, 127
      %v1871 = vpop.permute.xlu0 %1870
      %v1872 = vsel %vm1130, %v1855, %v1857
      %v1873 = vsel %vm1130, %v1857, %v1859
      %v1874 = vsel %vm1130, %v1859, %v1861
      %v1875 = vsel %vm1130, %v1861, %v1863
      %v1876 = vsel %vm1130, %v1863, %v1865
      %v1877 = vsel %vm1130, %v1865, %v1867
      %v1878 = vsel %vm1130, %v1867, %v1869
      %v1879 = vsel %vm1130, %v1869, %v1871
      %v1888 = vsel %vm1000, %v1872, 0.0
      %v1889 = vsel %vm1001, %v1873, 0.0
      %v1890 = vsel %vm1002, %v1874, 0.0
      %v1891 = vsel %vm1003, %v1875, 0.0
      %v1892 = vsel %vm1004, %v1876, 0.0
      %v1893 = vsel %vm1005, %v1877, 0.0
      %v1894 = vsel %vm1006, %v1878, 0.0
      %v1895 = vsel %vm1007, %v1879, 0.0
      %1896 = vrot.lane.b32.xlu0 %v1836, 97
      %v1897 = vpop.permute.xlu0 %1896
      %1898 = vrot.lane.b32.xlu0 %v1837, 97
      %v1899 = vpop.permute.xlu0 %1898
      %1900 = vrot.lane.b32.xlu0 %v1838, 97
      %v1901 = vpop.permute.xlu0 %1900
      %1902 = vrot.lane.b32.xlu0 %v1839, 97
      %v1903 = vpop.permute.xlu0 %1902
      %1904 = vrot.lane.b32.xlu0 %v1840, 97
      %v1905 = vpop.permute.xlu0 %1904
      %1906 = vrot.lane.b32.xlu0 %v1841, 97
      %v1907 = vpop.permute.xlu0 %1906
      %1908 = vrot.lane.b32.xlu0 %v1842, 97
      %v1909 = vpop.permute.xlu0 %1908
      %1910 = vrot.lane.b32.xlu0 %v1843, 97
      %v1911 = vpop.permute.xlu0 %1910
      %1912 = vrot.lane.b32.xlu0 %v1844, 97
      %v1913 = vpop.permute.xlu0 %1912
      %v1914 = vsel %vm1173, %v1897, %v1899
      %v1915 = vsel %vm1173, %v1899, %v1901
      %v1916 = vsel %vm1173, %v1901, %v1903
      %v1917 = vsel %vm1173, %v1903, %v1905
      %v1918 = vsel %vm1173, %v1905, %v1907
      %v1919 = vsel %vm1173, %v1907, %v1909
      %v1920 = vsel %vm1173, %v1909, %v1911
      %v1921 = vsel %vm1173, %v1911, %v1913
      %v1930 = vsel %vm932, %v1914, 0.0
      %v1931 = vsel %vm933, %v1915, 0.0
      %v1932 = vsel %vm934, %v1916, 0.0
      %v1933 = vsel %vm935, %v1917, 0.0
      %v1934 = vsel %vm936, %v1918, 0.0
      %v1935 = vsel %vm937, %v1919, 0.0
      %v1936 = vsel %vm938, %v1920, 0.0
      %v1937 = vsel %vm939, %v1921, 0.0
      %1938 = vrot.lane.b32.xlu0 %v1836, 95
      %v1939 = vpop.permute.xlu0 %1938
      %1940 = vrot.lane.b32.xlu0 %v1837, 95
      %v1941 = vpop.permute.xlu0 %1940
      %1942 = vrot.lane.b32.xlu0 %v1838, 95
      %v1943 = vpop.permute.xlu0 %1942
      %1944 = vrot.lane.b32.xlu0 %v1839, 95
      %v1945 = vpop.permute.xlu0 %1944
      %1946 = vrot.lane.b32.xlu0 %v1840, 95
      %v1947 = vpop.permute.xlu0 %1946
      %1948 = vrot.lane.b32.xlu0 %v1841, 95
      %v1949 = vpop.permute.xlu0 %1948
      %1950 = vrot.lane.b32.xlu0 %v1842, 95
      %v1951 = vpop.permute.xlu0 %1950
      %1952 = vrot.lane.b32.xlu0 %v1843, 95
      %v1953 = vpop.permute.xlu0 %1952
      %1954 = vrot.lane.b32.xlu0 %v1844, 95
      %v1955 = vpop.permute.xlu0 %1954
      %v1956 = vsel %vm1216, %v1939, %v1941
      %v1957 = vsel %vm1216, %v1941, %v1943
      %v1958 = vsel %vm1216, %v1943, %v1945
      %v1959 = vsel %vm1216, %v1945, %v1947
      %v1960 = vsel %vm1216, %v1947, %v1949
      %v1961 = vsel %vm1216, %v1949, %v1951
      %v1962 = vsel %vm1216, %v1951, %v1953
      %v1963 = vsel %vm1216, %v1953, %v1955
      %v1972 = vsel %vm1000, %v1956, 0.0
      %v1973 = vsel %vm1001, %v1957, 0.0
      %v1974 = vsel %vm1002, %v1958, 0.0
      %v1975 = vsel %vm1003, %v1959, 0.0
      %v1976 = vsel %vm1004, %v1960, 0.0
      %v1977 = vsel %vm1005, %v1961, 0.0
      %v1978 = vsel %vm1006, %v1962, 0.0
      %v1979 = vsel %vm1007, %v1963, 0.0
      %1980 = vrot.lane.b32.xlu0 %v1692, 32
      %v1981 = vpop.permute.xlu0 %1980
      %1982 = vrot.lane.b32.xlu0 %v1693, 32
      %v1983 = vpop.permute.xlu0 %1982
      %1984 = vrot.lane.b32.xlu0 %v1694, 32
      %v1985 = vpop.permute.xlu0 %1984
      %1986 = vrot.lane.b32.xlu0 %v1695, 32
      %v1987 = vpop.permute.xlu0 %1986
      %1988 = vrot.lane.b32.xlu0 %v1696, 32
      %v1989 = vpop.permute.xlu0 %1988
      %1990 = vrot.lane.b32.xlu0 %v1697, 32
      %v1991 = vpop.permute.xlu0 %1990
      %1992 = vrot.lane.b32.xlu0 %v1698, 32
      %v1993 = vpop.permute.xlu0 %1992
      %1994 = vrot.lane.b32.xlu0 %v1699, 32
      %v1995 = vpop.permute.xlu0 %1994
      %1996 = vrot.lane.b32.xlu0 %v1700, 32
      %v1997 = vpop.permute.xlu0 %1996
      %v1998 = vsel %vm1259, %v1981, %v1983
      %v1999 = vsel %vm1259, %v1983, %v1985
      %v2000 = vsel %vm1259, %v1985, %v1987
      %v2001 = vsel %vm1259, %v1987, %v1989
      %v2002 = vsel %vm1259, %v1989, %v1991
      %v2003 = vsel %vm1259, %v1991, %v1993
      %v2004 = vsel %vm1259, %v1993, %v1995
      %v2005 = vsel %vm1259, %v1995, %v1997
      %2014 = vrot.lane.b32.xlu0 %v1836, 96
      %v2015 = vpop.permute.xlu0 %2014
      %2016 = vrot.lane.b32.xlu0 %v1837, 96
      %v2017 = vpop.permute.xlu0 %2016
      %2018 = vrot.lane.b32.xlu0 %v1838, 96
      %v2019 = vpop.permute.xlu0 %2018
      %2020 = vrot.lane.b32.xlu0 %v1839, 96
      %v2021 = vpop.permute.xlu0 %2020
      %2022 = vrot.lane.b32.xlu0 %v1840, 96
      %v2023 = vpop.permute.xlu0 %2022
      %2024 = vrot.lane.b32.xlu0 %v1841, 96
      %v2025 = vpop.permute.xlu0 %2024
      %2026 = vrot.lane.b32.xlu0 %v1842, 96
      %v2027 = vpop.permute.xlu0 %2026
      %2028 = vrot.lane.b32.xlu0 %v1843, 96
      %v2029 = vpop.permute.xlu0 %2028
      %2030 = vrot.lane.b32.xlu0 %v1844, 96
      %v2031 = vpop.permute.xlu0 %2030
      %v2032 = vsel %vm1294, %v2015, %v2017
      %v2033 = vsel %vm1294, %v2017, %v2019
      %v2034 = vsel %vm1294, %v2019, %v2021
      %v2035 = vsel %vm1294, %v2021, %v2023
      %v2036 = vsel %vm1294, %v2023, %v2025
      %v2037 = vsel %vm1294, %v2025, %v2027
      %v2038 = vsel %vm1294, %v2027, %v2029
      %v2039 = vsel %vm1294, %v2029, %v2031
      %2049 = vset.pattern.permute.xlu0 0
      %2050 = vperm.xlu0 %2049, %v1683
      %v2051 = vpop.permute.xlu0 %2050
      %v2054 = vsel %vm1316, %v1682, 0
      %2056 = vmatpush.msra.mxu0 0.0
      %2057 = vmatpush.msra.mxu0 0.0
      %2058 = vmatpush.msra.mxu0 0.0
      %2059 = vmatpush.msra.mxu0 0.0
      %2060 = vmatpush.msra.mxu0 0.0
      %2061 = vmatpush.msra.mxu0 0.0
      %2062 = vmatpush.msra.mxu0 0.0
      %2063 = vmatpush.msra.mxu0 %v1972
      %2064 = vmatpush.msra.mxu0 %v2032
      %2065 = vmatpush.msra.mxu0 %v1930
      %2066 = vmatpush.msra.mxu0 %v1888
      %2067 = vmatpush.msra.mxu0 %v1693
      %2068 = vmatpush.msra.mxu0 %v1828
      %2069 = vmatpush.msra.mxu0 %v1786
      %2070 = vmatpush.msra.mxu0 %v1998
      %2071 = vmatpush.msra.mxu0 %v1744
      %2072 = vmatmul.f32.gmra.mxu0 %v2054
      %v2073 = vpop.f32.mrf.mxu0
      %v2074 = vadd.f32 %v2051, %v2073
      %2075 = vdwg.mxu0
      %2076 = vmatpush.msra.mxu0 0.0
      %2077 = vmatpush.msra.mxu0 0.0
      %2078 = vmatpush.msra.mxu0 0.0
      %2079 = vmatpush.msra.mxu0 0.0
      %2080 = vmatpush.msra.mxu0 0.0
      %2081 = vmatpush.msra.mxu0 0.0
      %2082 = vmatpush.msra.mxu0 0.0
      %2083 = vmatpush.msra.mxu0 %v1973
      %2084 = vmatpush.msra.mxu0 %v2033
      %2085 = vmatpush.msra.mxu0 %v1931
      %2086 = vmatpush.msra.mxu0 %v1889
      %2087 = vmatpush.msra.mxu0 %v1694
      %2088 = vmatpush.msra.mxu0 %v1829
      %2089 = vmatpush.msra.mxu0 %v1787
      %2090 = vmatpush.msra.mxu0 %v1999
      %2091 = vmatpush.msra.mxu0 %v1745
      %2092 = vmatmul.f32.gmra.mxu0 %v2054
      %v2093 = vpop.f32.mrf.mxu0
      %v2094 = vadd.f32 %v2051, %v2093
      %2095 = vdwg.mxu0
      %2096 = vmatpush.msra.mxu0 0.0
      %2097 = vmatpush.msra.mxu0 0.0
      %2098 = vmatpush.msra.mxu0 0.0
      %2099 = vmatpush.msra.mxu0 0.0
      %2100 = vmatpush.msra.mxu0 0.0
      %2101 = vmatpush.msra.mxu0 0.0
      %2102 = vmatpush.msra.mxu0 0.0
      %2103 = vmatpush.msra.mxu0 %v1974
      %2104 = vmatpush.msra.mxu0 %v2034
      %2105 = vmatpush.msra.mxu0 %v1932
      %2106 = vmatpush.msra.mxu0 %v1890
      %2107 = vmatpush.msra.mxu0 %v1695
      %2108 = vmatpush.msra.mxu0 %v1830
      %2109 = vmatpush.msra.mxu0 %v1788
      %2110 = vmatpush.msra.mxu0 %v2000
      %2111 = vmatpush.msra.mxu0 %v1746
      %2112 = vmatmul.f32.gmra.mxu0 %v2054
      %v2113 = vpop.f32.mrf.mxu0
      %v2114 = vadd.f32 %v2051, %v2113
      %2115 = vdwg.mxu0
      %2116 = vmatpush.msra.mxu0 0.0
      %2117 = vmatpush.msra.mxu0 0.0
      %2118 = vmatpush.msra.mxu0 0.0
      %2119 = vmatpush.msra.mxu0 0.0
      %2120 = vmatpush.msra.mxu0 0.0
      %2121 = vmatpush.msra.mxu0 0.0
      %2122 = vmatpush.msra.mxu0 0.0
      %2123 = vmatpush.msra.mxu0 %v1975
      %2124 = vmatpush.msra.mxu0 %v2035
      %2125 = vmatpush.msra.mxu0 %v1933
      %2126 = vmatpush.msra.mxu0 %v1891
      %2127 = vmatpush.msra.mxu0 %v1696
      %2128 = vmatpush.msra.mxu0 %v1831
      %2129 = vmatpush.msra.mxu0 %v1789
      %2130 = vmatpush.msra.mxu0 %v2001
      %2131 = vmatpush.msra.mxu0 %v1747
      %2132 = vmatmul.f32.gmra.mxu0 %v2054
      %v2133 = vpop.f32.mrf.mxu0
      %v2134 = vadd.f32 %v2051, %v2133
      %2135 = vdwg.mxu0
      %2136 = vmatpush.msra.mxu0 0.0
      %2137 = vmatpush.msra.mxu0 0.0
      %2138 = vmatpush.msra.mxu0 0.0
      %2139 = vmatpush.msra.mxu0 0.0
      %2140 = vmatpush.msra.mxu0 0.0
      %2141 = vmatpush.msra.mxu0 0.0
      %2142 = vmatpush.msra.mxu0 0.0
      %2143 = vmatpush.msra.mxu0 %v1976
      %2144 = vmatpush.msra.mxu0 %v2036
      %2145 = vmatpush.msra.mxu0 %v1934
      %2146 = vmatpush.msra.mxu0 %v1892
      %2147 = vmatpush.msra.mxu0 %v1697
      %2148 = vmatpush.msra.mxu0 %v1832
      %2149 = vmatpush.msra.mxu0 %v1790
      %2150 = vmatpush.msra.mxu0 %v2002
      %2151 = vmatpush.msra.mxu0 %v1748
      %2152 = vmatmul.f32.gmra.mxu0 %v2054
      %v2153 = vpop.f32.mrf.mxu0
      %v2154 = vadd.f32 %v2051, %v2153
      %2155 = vdwg.mxu0
      %2156 = vmatpush.msra.mxu0 0.0
      %2157 = vmatpush.msra.mxu0 0.0
      %2158 = vmatpush.msra.mxu0 0.0
      %2159 = vmatpush.msra.mxu0 0.0
      %2160 = vmatpush.msra.mxu0 0.0
      %2161 = vmatpush.msra.mxu0 0.0
      %2162 = vmatpush.msra.mxu0 0.0
      %2163 = vmatpush.msra.mxu0 %v1977
      %2164 = vmatpush.msra.mxu0 %v2037
      %2165 = vmatpush.msra.mxu0 %v1935
      %2166 = vmatpush.msra.mxu0 %v1893
      %2167 = vmatpush.msra.mxu0 %v1698
      %2168 = vmatpush.msra.mxu0 %v1833
      %2169 = vmatpush.msra.mxu0 %v1791
      %2170 = vmatpush.msra.mxu0 %v2003
      %2171 = vmatpush.msra.mxu0 %v1749
      %2172 = vmatmul.f32.gmra.mxu0 %v2054
      %v2173 = vpop.f32.mrf.mxu0
      %v2174 = vadd.f32 %v2051, %v2173
      %2175 = vdwg.mxu0
      %2176 = vmatpush.msra.mxu0 0.0
      %2177 = vmatpush.msra.mxu0 0.0
      %2178 = vmatpush.msra.mxu0 0.0
      %2179 = vmatpush.msra.mxu0 0.0
      %2180 = vmatpush.msra.mxu0 0.0
      %2181 = vmatpush.msra.mxu0 0.0
      %2182 = vmatpush.msra.mxu0 0.0
      %2183 = vmatpush.msra.mxu0 %v1978
      %2184 = vmatpush.msra.mxu0 %v2038
      %2185 = vmatpush.msra.mxu0 %v1936
      %2186 = vmatpush.msra.mxu0 %v1894
      %2187 = vmatpush.msra.mxu0 %v1699
      %2188 = vmatpush.msra.mxu0 %v1834
      %2189 = vmatpush.msra.mxu0 %v1792
      %2190 = vmatpush.msra.mxu0 %v2004
      %2191 = vmatpush.msra.mxu0 %v1750
      %2192 = vmatmul.f32.gmra.mxu0 %v2054
      %v2193 = vpop.f32.mrf.mxu0
      %v2194 = vadd.f32 %v2051, %v2193
      %2195 = vdwg.mxu0
      %2196 = vmatpush.msra.mxu0 0.0
      %2197 = vmatpush.msra.mxu0 0.0
      %2198 = vmatpush.msra.mxu0 0.0
      %2199 = vmatpush.msra.mxu0 0.0
      %2200 = vmatpush.msra.mxu0 0.0
      %2201 = vmatpush.msra.mxu0 0.0
      %2202 = vmatpush.msra.mxu0 0.0
      %2203 = vmatpush.msra.mxu0 %v1979
      %2204 = vmatpush.msra.mxu0 %v2039
      %2205 = vmatpush.msra.mxu0 %v1937
      %2206 = vmatpush.msra.mxu0 %v1895
      %2207 = vmatpush.msra.mxu0 %v1700
      %2208 = vmatpush.msra.mxu0 %v1835
      %2209 = vmatpush.msra.mxu0 %v1793
      %2210 = vmatpush.msra.mxu0 %v2005
      %2211 = vmatpush.msra.mxu0 %v1751
      %2212 = vmatmul.f32.gmra.mxu0 %v2054
      %v2213 = vpop.f32.mrf.mxu0
      %v2214 = vadd.f32 %v2051, %v2213
      %2215 = vdwg.mxu0
      %v2216 = vmax.f32 %v2074, 0.0
      %v2217 = vmax.f32 %v2094, 0.0
      %v2218 = vmax.f32 %v2114, 0.0
      %v2219 = vmax.f32 %v2134, 0.0
      %v2220 = vmax.f32 %v2154, 0.0
      %v2221 = vmax.f32 %v2174, 0.0
      %v2222 = vmax.f32 %v2194, 0.0
      %v2223 = vmax.f32 %v2214, 0.0
      %v2224 = vmin.f32 %v2216, 6.0
      %v2225 = vmin.f32 %v2217, 6.0
      %v2226 = vmin.f32 %v2218, 6.0
      %v2227 = vmin.f32 %v2219, 6.0
      %v2228 = vmin.f32 %v2220, 6.0
      %v2229 = vmin.f32 %v2221, 6.0
      %v2230 = vmin.f32 %v2222, 6.0
      %v2231 = vmin.f32 %v2223, 6.0
      %2232 = vst [vmem:[%s406] sm:$0xff] %v2224
      %2233 = vst [vmem:[%s406 + $0x8] sm:$0xff] %v2225
      %2234 = vst [vmem:[%s406 + $0x10] sm:$0xff] %v2226
      %2235 = vst [vmem:[%s406 + $0x18] sm:$0xff] %v2227
      %2236 = vst [vmem:[%s406 + $0x20] sm:$0xff] %v2228
      %2237 = vst [vmem:[%s406 + $0x28] sm:$0xff] %v2229
      %2238 = vst [vmem:[%s406 + $0x30] sm:$0xff] %v2230
      %2239 = vst [vmem:[%s406 + $0x38] sm:$0xff] %v2231
      %p2240 = scmp.lt.s32.totalorder %s22, 1
      %s2241 = scalar_select %p2240, %s22, 1
      %s2242 = smul.addr %s2241, 8
      %s2243 = smul.addr %s2242, 8
      %s2244 = scalar_lea.vmem %s11, %s2243
      // Predicated region
      $region65: #{up_sample_forward.3} parent=63 // pred_check
        %p2245 = pneg %p281
      $region66: #{up_sample_forward.3} parent=63 // pred_check_branch
        %2247 = sbr.rel (%p2245) target = $region68
      $region67: #{up_sample_forward.3} parent=63 // pred_region
        _
      $region68: #{up_sample_forward.3} parent=63 // pred_fallthru
        _
    $region64: #{up_sample_forward.3} parent=5 // pred_fallthru
      _
    %p2248 = scmp.le.s32.totalorder 2, %s17
    // Predicated region
    $region69: #{up_sample_forward.3} parent=5 // pred_check
      %p2249 = pneg %p2248
    $region70: #{up_sample_forward.3} parent=5 // pred_check_branch
      %2251 = sbr.rel (%p2249) target = $region72
    $region71: #{up_sample_forward.3} parent=5 // pred_region
      %s2252 = ssub.s32 %s17, 2
      // Predicated region
      $region73: #{up_sample_forward.3} parent=71 // pred_check
        %p2253 = pneg %p287
      $region74: #{up_sample_forward.3} parent=71 // pred_check_branch
        %2255 = sbr.rel (%p2253) target = $region76
      $region75: #{up_sample_forward.3} parent=71 // pred_region
        %p2256 = scmp.lt.s32.totalorder %s23, 1
        %s2257 = scalar_select %p2256, %s23, 1
        %s2258 = smul.addr %s2257, 8
        %s2259 = smul.addr %s2258, 8
        %s2260 = scalar_lea.vmem %s11, %s2259
      $region76: #{up_sample_forward.3} parent=71 // pred_fallthru
        _
    $region72: #{up_sample_forward.3} parent=5 // pred_fallthru
      _
  $region6: #{up_sample_forward.3} parent=0 // loop_footer
    %s21 = sadd.s32 1, %s17
  $region7: #{up_sample_forward.3} parent=0 // loop_footer_branch
    %16 = sbr.rel target = $region3
  $region8: #{up_sample_forward.3} parent=0 // loop_exit
    _

</llo_original>
